<compile_context>
chip_gen: v6e
topology: v6e:2x2x1
jax: 0.10.0
libtpu: 0.0.40
codegen_flags: <defaults>
</compile_context>

<pallas_src>
import functools

import jax
import jax.numpy as jnp
from jax.experimental import pallas as pl
from jax.experimental.pallas import tpu as pltpu


# ------------------------------ Pallas kernel -------------------------------

def _bottleneck_kernel(x_ref, w1_ref, b1_ref, w2_ref, b2_ref, w3_ref, b3_ref,
                       wd_ref, bd_ref, o_ref, xbuf_ref, *, H, W, pad):
    HW = H * W
    x = x_ref[...]                                            # (HW, cin) f32

    # ---- conv1 (1x1) + folded BN + ReLU ------------------------------------
    x1 = jnp.dot(x, w1_ref[...], preferred_element_type=jnp.float32) + b1_ref[...]
    x1 = jnp.maximum(x1, 0.0)                                 # (HW, width)

    # ---- conv2 (3x3, stride=1, pad=1) + folded BN + ReLU -------------------
    # Copy x1 into a VMEM scratch with `pad` zero rows above/below so every
    # spatial offset (dy, dx) becomes one static row-offset slice of xbuf.
    width = x1.shape[-1]
    xbuf_ref[0:pad, :] = jnp.zeros((pad, width), jnp.float32)
    xbuf_ref[pad + HW:pad + HW + pad, :] = jnp.zeros((pad, width), jnp.float32)
    xbuf_ref[pad:pad + HW, :] = x1

    row = jax.lax.broadcasted_iota(jnp.int32, (HW, 1), 0)
    if (W & (W - 1)) == 0:                                    # W power of two
        col = jnp.bitwise_and(row, W - 1)
    else:
        col = jax.lax.rem(row, W)
    not_left = col > 0            # invalid when reading x-1 at x == 0
    not_right = col < (W - 1)     # invalid when reading x+1 at x == W-1

    y2 = b2_ref[...]                                          # (1, width)
    for dy in range(3):
        for dx in range(3):
            shift = (dy - 1) * W + (dx - 1)
            sh = xbuf_ref[pad + shift:pad + shift + HW, :]    # (HW, width)
            if dx == 0:
                sh = jnp.where(not_left, sh, 0.0)
            elif dx == 2:
                sh = jnp.where(not_right, sh, 0.0)
            y2 = y2 + jnp.dot(sh, w2_ref[dy * 3 + dx],
                              preferred_element_type=jnp.float32)
    x2 = jnp.maximum(y2, 0.0)                                 # (HW, width)

    # ---- conv3 (1x1)+BN, downsample (1x1)+BN, residual add, final ReLU -----
    y3 = jnp.dot(x2, w3_ref[...], preferred_element_type=jnp.float32) + b3_ref[...]
    idn = jnp.dot(x, wd_ref[...], preferred_element_type=jnp.float32) + bd_ref[...]
    o_ref[...] = jnp.maximum(y3 + idn, 0.0).astype(o_ref.dtype)


# ------------------------------ glue helpers --------------------------------

def _fold_bn(conv_b, gamma, beta, mean, var, eps=1e-5):
    scale = gamma / jnp.sqrt(var + eps)
    bias = (conv_b - mean) * scale + beta
    return scale, bias


def bottleneck_forward(x_nchw, p):
    """Pallas implementation of Bottleneck(first_layer=True, stride=1, groups=1)."""
    x = jnp.transpose(x_nchw, (0, 2, 3, 1)).astype(jnp.float32)   # NCHW -> NHWC
    n, H, W, cin = x.shape
    HW = H * W
    x_rows = x.reshape(n, HW, cin)

    width = p["w1"].shape[0]       # groups=1 -> width_channels = in_channels
    change = p["w3"].shape[0]      # 4 * in_channels

    # Fold eval-mode BN into per-output-channel weight scale + bias.
    s1, b1 = _fold_bn(p["b1"], p["g1"], p["be1"], p["m1"], p["v1"])
    s2, b2 = _fold_bn(p["b2"], p["g2"], p["be2"], p["m2"], p["v2"])
    s3, b3 = _fold_bn(p["b3"], p["g3"], p["be3"], p["m3"], p["v3"])
    sd, bd = _fold_bn(p["bd"], p["gd"], p["bed"], p["md"], p["vd"])

    w1 = (p["w1"].reshape(width, cin).T * s1[None, :]).astype(jnp.float32)
    w2 = (jnp.transpose(p["w2"], (2, 3, 1, 0)).reshape(9, width, width)
          * s2[None, None, :]).astype(jnp.float32)            # (ky*kx, cin, cout)
    w3 = (p["w3"].reshape(change, width).T * s3[None, :]).astype(jnp.float32)
    wd = (p["wd"].reshape(change, cin).T * sd[None, :]).astype(jnp.float32)
    b1, b2, b3, bd = (b.reshape(1, -1).astype(jnp.float32) for b in (b1, b2, b3, bd))

    pad = ((W + 1 + 7) // 8) * 8   # sublane-aligned zero halo, covers |shift|<=W+1
    kernel = functools.partial(_bottleneck_kernel, H=H, W=W, pad=pad)

    out = pl.pallas_call(
        kernel,
        out_shape=jax.ShapeDtypeStruct((n, HW, change), jnp.float32),
        grid_spec=pltpu.PrefetchScalarGridSpec(
            num_scalar_prefetch=0,
            grid=(n,),
            in_specs=[
                pl.BlockSpec((None, HW, cin), lambda i: (i, 0, 0)),     # x
                pl.BlockSpec((cin, width), lambda i: (0, 0)),           # w1
                pl.BlockSpec((1, width), lambda i: (0, 0)),             # b1
                pl.BlockSpec((9, width, width), lambda i: (0, 0, 0)),   # w2
                pl.BlockSpec((1, width), lambda i: (0, 0)),             # b2
                pl.BlockSpec((width, change), lambda i: (0, 0)),        # w3
                pl.BlockSpec((1, change), lambda i: (0, 0)),            # b3
                pl.BlockSpec((cin, change), lambda i: (0, 0)),          # wd
                pl.BlockSpec((1, change), lambda i: (0, 0)),            # bd
            ],
            out_specs=pl.BlockSpec((None, HW, change), lambda i: (i, 0, 0)),
            scratch_shapes=[pltpu.VMEM((HW + 2 * pad, width), jnp.float32)],
        ),
        compiler_params=pltpu.CompilerParams(
            dimension_semantics=("parallel",)),
    )(x_rows, w1, b1, w2, b2, w3, b3, wd, bd)

    return jnp.transpose(out.reshape(n, H, W, change), (0, 3, 1, 2))  # -> NCHW


# --------------------------- plain-JAX reference ----------------------------

def _ref_conv_bn(x, w, b, g, be, m, v, *, relu, pad=0, eps=1e-5):
    y = jax.lax.conv_general_dilated(
        x, w, (1, 1), [(pad, pad), (pad, pad)],
        dimension_numbers=("NCHW", "OIHW", "NCHW"))
    y = y + b[None, :, None, None]
    s = g / jnp.sqrt(v + eps)
    y = (y - m[None, :, None, None]) * s[None, :, None, None] + be[None, :, None, None]
    return jnp.maximum(y, 0.0) if relu else y


def reference_forward(x, p):
    x1 = _ref_conv_bn(x, p["w1"], p["b1"], p["g1"], p["be1"], p["m1"], p["v1"], relu=True)
    x2 = _ref_conv_bn(x1, p["w2"], p["b2"], p["g2"], p["be2"], p["m2"], p["v2"], relu=True, pad=1)
    x3 = _ref_conv_bn(x2, p["w3"], p["b3"], p["g3"], p["be3"], p["m3"], p["v3"], relu=False)
    idn = _ref_conv_bn(x, p["wd"], p["bd"], p["gd"], p["bed"], p["md"], p["vd"], relu=False)
    return jnp.maximum(x3 + idn, 0.0)


# -------------------------------- init / main -------------------------------

def init_params(key, in_channels):
    width = in_channels            # groups=1 -> width_channels = in_channels
    change = 4 * in_channels
    ks = list(jax.random.split(key, 32))
    nxt = lambda: ks.pop()

    def conv_bn(cin, cout, k):
        return dict(
            w=jax.random.normal(nxt(), (cout, cin, k, k), jnp.float32) * 0.1,
            b=jax.random.normal(nxt(), (cout,), jnp.float32) * 0.05,
            g=jax.random.uniform(nxt(), (cout,), jnp.float32, 0.5, 1.5),
            be=jax.random.normal(nxt(), (cout,), jnp.float32) * 0.1,
            m=jax.random.normal(nxt(), (cout,), jnp.float32) * 0.1,
            v=jax.random.uniform(nxt(), (cout,), jnp.float32, 0.5, 1.5),
        )

    c1 = conv_bn(in_channels, width, 1)
    c2 = conv_bn(width, width, 3)
    c3 = conv_bn(width, change, 1)
    cd = conv_bn(in_channels, change, 1)
    p = {}
    for tag, c in (("1", c1), ("2", c2), ("3", c3), ("d", cd)):
        p["w" + tag] = c["w"]; p["b" + tag] = c["b"]
        p["g" + tag] = c["g"]; p["be" + tag] = c["be"]
        p["m" + tag] = c["m"]; p["v" + tag] = c["v"]
    return p


if __name__ == "__main__":
    key = jax.random.PRNGKey(0)
    k_x, k_p = jax.random.split(key)

    in_channels = 4
    x = jax.random.normal(k_x, (2, in_channels, 16, 16), jnp.float32)  # NCHW
    params = init_params(k_p, in_channels)

    out = bottleneck_forward(x, params)
    out = jax.block_until_ready(out)

    ref = jax.block_until_ready(reference_forward(x, params))
    assert out.shape == ref.shape == (2, 4 * in_channels, 16, 16)
    assert jnp.allclose(out, ref, atol=1e-4, rtol=1e-4), "mismatch vs reference"

    print("KERNEL_OK")
</pallas_src>

<mosaic_0001>
module attributes {stable_mosaic.version = 11 : i64} {
  func.func @_bottleneck_kernel(%arg0: i32, %arg1: memref<1x256x4xf32, #tpu.memory_space<vmem>>, %arg2: memref<4x4xf32, #tpu.memory_space<vmem>>, %arg3: memref<1x4xf32, #tpu.memory_space<vmem>>, %arg4: memref<9x4x4xf32, #tpu.memory_space<vmem>>, %arg5: memref<1x4xf32, #tpu.memory_space<vmem>>, %arg6: memref<4x16xf32, #tpu.memory_space<vmem>>, %arg7: memref<1x16xf32, #tpu.memory_space<vmem>>, %arg8: memref<4x16xf32, #tpu.memory_space<vmem>>, %arg9: memref<1x16xf32, #tpu.memory_space<vmem>>, %arg10: memref<1x256x16xf32, #tpu.memory_space<vmem>>, %arg11: memref<304x4xf32, #tpu.memory_space<vmem>>) attributes {dimension_semantics = [#tpu.dimension_semantics<parallel>], iteration_bounds = array<i64: 2>, scalar_prefetch = 0 : i64, scratch_operands = 1 : i64, tpu.core_type = #tpu.core_type<tc>, window_params = [{transform_indices = @transform_0, window_bounds = array<i64: 1, 256, 4>}, {pipeline_mode = #tpu.pipeline_mode<synchronous>, transform_indices = @transform_1, window_bounds = array<i64: 4, 4>}, {pipeline_mode = #tpu.pipeline_mode<synchronous>, transform_indices = @transform_2, window_bounds = array<i64: 1, 4>}, {pipeline_mode = #tpu.pipeline_mode<synchronous>, transform_indices = @transform_3, window_bounds = array<i64: 9, 4, 4>}, {pipeline_mode = #tpu.pipeline_mode<synchronous>, transform_indices = @transform_4, window_bounds = array<i64: 1, 4>}, {pipeline_mode = #tpu.pipeline_mode<synchronous>, transform_indices = @transform_5, window_bounds = array<i64: 4, 16>}, {pipeline_mode = #tpu.pipeline_mode<synchronous>, transform_indices = @transform_6, window_bounds = array<i64: 1, 16>}, {pipeline_mode = #tpu.pipeline_mode<synchronous>, transform_indices = @transform_7, window_bounds = array<i64: 4, 16>}, {pipeline_mode = #tpu.pipeline_mode<synchronous>, transform_indices = @transform_8, window_bounds = array<i64: 1, 16>}, {transform_indices = @transform_9, window_bounds = array<i64: 1, 256, 16>}]} {
    %c0 = arith.constant 0 : index
    %c0_0 = arith.constant 0 : index
    %c0_1 = arith.constant 0 : index
    %0 = vector.load %arg1[%c0, %c0_0, %c0_1] : memref<1x256x4xf32, #tpu.memory_space<vmem>>, vector<1x256x4xf32>
    %1 = vector.shape_cast %0 : vector<1x256x4xf32> to vector<256x4xf32>
    %c0_2 = arith.constant 0 : index
    %c0_3 = arith.constant 0 : index
    %2 = vector.load %arg2[%c0_2, %c0_3] : memref<4x4xf32, #tpu.memory_space<vmem>>, vector<4x4xf32>
    %cst = arith.constant dense<0.000000e+00> : vector<256x4xf32>
    %3 = tpu.matmul %1, %2, %cst {dimension_numbers = #tpu.dot_dimension_numbers<[1], [0], [0], [1], [0, 0, 1, 1], [], []>} : vector<256x4xf32>, vector<4x4xf32>, vector<256x4xf32> -> vector<256x4xf32>
    %c0_4 = arith.constant 0 : index
    %c0_5 = arith.constant 0 : index
    %4 = vector.load %arg3[%c0_4, %c0_5] : memref<1x4xf32, #tpu.memory_space<vmem>>, vector<1x4xf32>
    %5 = vector.broadcast %4 : vector<1x4xf32> to vector<256x4xf32>
    %6 = arith.addf %3, %5 : vector<256x4xf32>
    %cst_6 = arith.constant 0.000000e+00 : f32
    %7 = vector.broadcast %cst_6 : f32 to vector<256x4xf32>
    %8 = arith.maximumf %6, %7 : vector<256x4xf32>
    %cst_7 = arith.constant 0.000000e+00 : f32
    %9 = vector.broadcast %cst_7 : f32 to vector<24x4xf32>
    %c0_8 = arith.constant 0 : index
    %c0_9 = arith.constant 0 : index
    %10 = vector.load %arg11[%c0_8, %c0_9] : memref<304x4xf32, #tpu.memory_space<vmem>>, vector<24x4xf32>
    tpu.vector_store %arg11[%c0_8, %c0_9], %9 {strides = array<i32>} : memref<304x4xf32, #tpu.memory_space<vmem>>, vector<24x4xf32>,
    %cst_10 = arith.constant 0.000000e+00 : f32
    %11 = vector.broadcast %cst_10 : f32 to vector<24x4xf32>
    %c280 = arith.constant 280 : index
    %c0_11 = arith.constant 0 : index
    %12 = vector.load %arg11[%c280, %c0_11] : memref<304x4xf32, #tpu.memory_space<vmem>>, vector<24x4xf32>
    tpu.vector_store %arg11[%c280, %c0_11], %11 {strides = array<i32>} : memref<304x4xf32, #tpu.memory_space<vmem>>, vector<24x4xf32>,
    %c24 = arith.constant 24 : index
    %c0_12 = arith.constant 0 : index
    %13 = vector.load %arg11[%c24, %c0_12] : memref<304x4xf32, #tpu.memory_space<vmem>>, vector<256x4xf32>
    tpu.vector_store %arg11[%c24, %c0_12], %8 {strides = array<i32>} : memref<304x4xf32, #tpu.memory_space<vmem>>, vector<256x4xf32>,
    %14 = tpu.iota {dimensions = array<i32: 0>} : vector<256x1xi32>
    %c15_i32 = arith.constant 15 : i32
    %15 = vector.broadcast %c15_i32 : i32 to vector<256x1xi32>
    %16 = arith.andi %14, %15 : vector<256x1xi32>
    %c0_i32 = arith.constant 0 : i32
    %17 = vector.broadcast %c0_i32 : i32 to vector<256x1xi32>
    %18 = arith.cmpi sgt, %16, %17 : vector<256x1xi32>
    %c15_i32_13 = arith.constant 15 : i32
    %19 = vector.broadcast %c15_i32_13 : i32 to vector<256x1xi32>
    %20 = arith.cmpi slt, %16, %19 : vector<256x1xi32>
    %c0_14 = arith.constant 0 : index
    %c0_15 = arith.constant 0 : index
    %21 = vector.load %arg5[%c0_14, %c0_15] : memref<1x4xf32, #tpu.memory_space<vmem>>, vector<1x4xf32>
    %c7 = arith.constant 7 : index
    %c0_16 = arith.constant 0 : index
    %22 = vector.load %arg11[%c7, %c0_16] : memref<304x4xf32, #tpu.memory_space<vmem>>, vector<256x4xf32>
    %cst_17 = arith.constant 0.000000e+00 : f32
    %23 = vector.shape_cast %18 : vector<256x1xi1> to vector<256x1xi1>
    %24 = vector.broadcast %23 : vector<256x1xi1> to vector<256x4xi1>
    %25 = vector.broadcast %cst_17 : f32 to vector<256x4xf32>
    %26 = arith.select %24, %22, %25 : vector<256x4xi1>, vector<256x4xf32>
    %c0_18 = arith.constant 0 : index
    %c0_19 = arith.constant 0 : index
    %c0_20 = arith.constant 0 : index
    %27 = vector.load %arg4[%c0_18, %c0_19, %c0_20] : memref<9x4x4xf32, #tpu.memory_space<vmem>>, vector<1x4x4xf32>
    %28 = vector.shape_cast %27 : vector<1x4x4xf32> to vector<4x4xf32>
    %cst_21 = arith.constant dense<0.000000e+00> : vector<256x4xf32>
    %29 = tpu.matmul %26, %28, %cst_21 {dimension_numbers = #tpu.dot_dimension_numbers<[1], [0], [0], [1], [0, 0, 1, 1], [], []>} : vector<256x4xf32>, vector<4x4xf32>, vector<256x4xf32> -> vector<256x4xf32>
    %30 = vector.broadcast %21 : vector<1x4xf32> to vector<256x4xf32>
    %31 = arith.addf %30, %29 : vector<256x4xf32>
    %c8 = arith.constant 8 : index
    %c0_22 = arith.constant 0 : index
    %32 = vector.load %arg11[%c8, %c0_22] : memref<304x4xf32, #tpu.memory_space<vmem>>, vector<256x4xf32>
    %c1 = arith.constant 1 : index
    %c0_23 = arith.constant 0 : index
    %c0_24 = arith.constant 0 : index
    %33 = vector.load %arg4[%c1, %c0_23, %c0_24] : memref<9x4x4xf32, #tpu.memory_space<vmem>>, vector<1x4x4xf32>
    %34 = vector.shape_cast %33 : vector<1x4x4xf32> to vector<4x4xf32>
    %cst_25 = arith.constant dense<0.000000e+00> : vector<256x4xf32>
    %35 = tpu.matmul %32, %34, %cst_25 {dimension_numbers = #tpu.dot_dimension_numbers<[1], [0], [0], [1], [0, 0, 1, 1], [], []>} : vector<256x4xf32>, vector<4x4xf32>, vector<256x4xf32> -> vector<256x4xf32>
    %36 = arith.addf %31, %35 : vector<256x4xf32>
    %c9 = arith.constant 9 : index
    %c0_26 = arith.constant 0 : index
    %37 = vector.load %arg11[%c9, %c0_26] : memref<304x4xf32, #tpu.memory_space<vmem>>, vector<256x4xf32>
    %cst_27 = arith.constant 0.000000e+00 : f32
    %38 = vector.shape_cast %20 : vector<256x1xi1> to vector<256x1xi1>
    %39 = vector.broadcast %38 : vector<256x1xi1> to vector<256x4xi1>
    %40 = vector.broadcast %cst_27 : f32 to vector<256x4xf32>
    %41 = arith.select %39, %37, %40 : vector<256x4xi1>, vector<256x4xf32>
    %c2 = arith.constant 2 : index
    %c0_28 = arith.constant 0 : index
    %c0_29 = arith.constant 0 : index
    %42 = vector.load %arg4[%c2, %c0_28, %c0_29] : memref<9x4x4xf32, #tpu.memory_space<vmem>>, vector<1x4x4xf32>
    %43 = vector.shape_cast %42 : vector<1x4x4xf32> to vector<4x4xf32>
    %cst_30 = arith.constant dense<0.000000e+00> : vector<256x4xf32>
    %44 = tpu.matmul %41, %43, %cst_30 {dimension_numbers = #tpu.dot_dimension_numbers<[1], [0], [0], [1], [0, 0, 1, 1], [], []>} : vector<256x4xf32>, vector<4x4xf32>, vector<256x4xf32> -> vector<256x4xf32>
    %45 = arith.addf %36, %44 : vector<256x4xf32>
    %c23 = arith.constant 23 : index
    %c0_31 = arith.constant 0 : index
    %46 = vector.load %arg11[%c23, %c0_31] : memref<304x4xf32, #tpu.memory_space<vmem>>, vector<256x4xf32>
    %cst_32 = arith.constant 0.000000e+00 : f32
    %47 = vector.shape_cast %18 : vector<256x1xi1> to vector<256x1xi1>
    %48 = vector.broadcast %47 : vector<256x1xi1> to vector<256x4xi1>
    %49 = vector.broadcast %cst_32 : f32 to vector<256x4xf32>
    %50 = arith.select %48, %46, %49 : vector<256x4xi1>, vector<256x4xf32>
    %c3 = arith.constant 3 : index
    %c0_33 = arith.constant 0 : index
    %c0_34 = arith.constant 0 : index
    %51 = vector.load %arg4[%c3, %c0_33, %c0_34] : memref<9x4x4xf32, #tpu.memory_space<vmem>>, vector<1x4x4xf32>
    %52 = vector.shape_cast %51 : vector<1x4x4xf32> to vector<4x4xf32>
    %cst_35 = arith.constant dense<0.000000e+00> : vector<256x4xf32>
    %53 = tpu.matmul %50, %52, %cst_35 {dimension_numbers = #tpu.dot_dimension_numbers<[1], [0], [0], [1], [0, 0, 1, 1], [], []>} : vector<256x4xf32>, vector<4x4xf32>, vector<256x4xf32> -> vector<256x4xf32>
    %54 = arith.addf %45, %53 : vector<256x4xf32>
    %c24_36 = arith.constant 24 : index
    %c0_37 = arith.constant 0 : index
    %55 = vector.load %arg11[%c24_36, %c0_37] : memref<304x4xf32, #tpu.memory_space<vmem>>, vector<256x4xf32>
    %c4 = arith.constant 4 : index
    %c0_38 = arith.constant 0 : index
    %c0_39 = arith.constant 0 : index
    %56 = vector.load %arg4[%c4, %c0_38, %c0_39] : memref<9x4x4xf32, #tpu.memory_space<vmem>>, vector<1x4x4xf32>
    %57 = vector.shape_cast %56 : vector<1x4x4xf32> to vector<4x4xf32>
    %cst_40 = arith.constant dense<0.000000e+00> : vector<256x4xf32>
    %58 = tpu.matmul %55, %57, %cst_40 {dimension_numbers = #tpu.dot_dimension_numbers<[1], [0], [0], [1], [0, 0, 1, 1], [], []>} : vector<256x4xf32>, vector<4x4xf32>, vector<256x4xf32> -> vector<256x4xf32>
    %59 = arith.addf %54, %58 : vector<256x4xf32>
    %c25 = arith.constant 25 : index
    %c0_41 = arith.constant 0 : index
    %60 = vector.load %arg11[%c25, %c0_41] : memref<304x4xf32, #tpu.memory_space<vmem>>, vector<256x4xf32>
    %cst_42 = arith.constant 0.000000e+00 : f32
    %61 = vector.shape_cast %20 : vector<256x1xi1> to vector<256x1xi1>
    %62 = vector.broadcast %61 : vector<256x1xi1> to vector<256x4xi1>
    %63 = vector.broadcast %cst_42 : f32 to vector<256x4xf32>
    %64 = arith.select %62, %60, %63 : vector<256x4xi1>, vector<256x4xf32>
    %c5 = arith.constant 5 : index
    %c0_43 = arith.constant 0 : index
    %c0_44 = arith.constant 0 : index
    %65 = vector.load %arg4[%c5, %c0_43, %c0_44] : memref<9x4x4xf32, #tpu.memory_space<vmem>>, vector<1x4x4xf32>
    %66 = vector.shape_cast %65 : vector<1x4x4xf32> to vector<4x4xf32>
    %cst_45 = arith.constant dense<0.000000e+00> : vector<256x4xf32>
    %67 = tpu.matmul %64, %66, %cst_45 {dimension_numbers = #tpu.dot_dimension_numbers<[1], [0], [0], [1], [0, 0, 1, 1], [], []>} : vector<256x4xf32>, vector<4x4xf32>, vector<256x4xf32> -> vector<256x4xf32>
    %68 = arith.addf %59, %67 : vector<256x4xf32>
    %c39 = arith.constant 39 : index
    %c0_46 = arith.constant 0 : index
    %69 = vector.load %arg11[%c39, %c0_46] : memref<304x4xf32, #tpu.memory_space<vmem>>, vector<256x4xf32>
    %cst_47 = arith.constant 0.000000e+00 : f32
    %70 = vector.shape_cast %18 : vector<256x1xi1> to vector<256x1xi1>
    %71 = vector.broadcast %70 : vector<256x1xi1> to vector<256x4xi1>
    %72 = vector.broadcast %cst_47 : f32 to vector<256x4xf32>
    %73 = arith.select %71, %69, %72 : vector<256x4xi1>, vector<256x4xf32>
    %c6 = arith.constant 6 : index
    %c0_48 = arith.constant 0 : index
    %c0_49 = arith.constant 0 : index
    %74 = vector.load %arg4[%c6, %c0_48, %c0_49] : memref<9x4x4xf32, #tpu.memory_space<vmem>>, vector<1x4x4xf32>
    %75 = vector.shape_cast %74 : vector<1x4x4xf32> to vector<4x4xf32>
    %cst_50 = arith.constant dense<0.000000e+00> : vector<256x4xf32>
    %76 = tpu.matmul %73, %75, %cst_50 {dimension_numbers = #tpu.dot_dimension_numbers<[1], [0], [0], [1], [0, 0, 1, 1], [], []>} : vector<256x4xf32>, vector<4x4xf32>, vector<256x4xf32> -> vector<256x4xf32>
    %77 = arith.addf %68, %76 : vector<256x4xf32>
    %c40 = arith.constant 40 : index
    %c0_51 = arith.constant 0 : index
    %78 = vector.load %arg11[%c40, %c0_51] : memref<304x4xf32, #tpu.memory_space<vmem>>, vector<256x4xf32>
    %c7_52 = arith.constant 7 : index
    %c0_53 = arith.constant 0 : index
    %c0_54 = arith.constant 0 : index
    %79 = vector.load %arg4[%c7_52, %c0_53, %c0_54] : memref<9x4x4xf32, #tpu.memory_space<vmem>>, vector<1x4x4xf32>
    %80 = vector.shape_cast %79 : vector<1x4x4xf32> to vector<4x4xf32>
    %cst_55 = arith.constant dense<0.000000e+00> : vector<256x4xf32>
    %81 = tpu.matmul %78, %80, %cst_55 {dimension_numbers = #tpu.dot_dimension_numbers<[1], [0], [0], [1], [0, 0, 1, 1], [], []>} : vector<256x4xf32>, vector<4x4xf32>, vector<256x4xf32> -> vector<256x4xf32>
    %82 = arith.addf %77, %81 : vector<256x4xf32>
    %c41 = arith.constant 41 : index
    %c0_56 = arith.constant 0 : index
    %83 = vector.load %arg11[%c41, %c0_56] : memref<304x4xf32, #tpu.memory_space<vmem>>, vector<256x4xf32>
    %cst_57 = arith.constant 0.000000e+00 : f32
    %84 = vector.shape_cast %20 : vector<256x1xi1> to vector<256x1xi1>
    %85 = vector.broadcast %84 : vector<256x1xi1> to vector<256x4xi1>
    %86 = vector.broadcast %cst_57 : f32 to vector<256x4xf32>
    %87 = arith.select %85, %83, %86 : vector<256x4xi1>, vector<256x4xf32>
    %c8_58 = arith.constant 8 : index
    %c0_59 = arith.constant 0 : index
    %c0_60 = arith.constant 0 : index
    %88 = vector.load %arg4[%c8_58, %c0_59, %c0_60] : memref<9x4x4xf32, #tpu.memory_space<vmem>>, vector<1x4x4xf32>
    %89 = vector.shape_cast %88 : vector<1x4x4xf32> to vector<4x4xf32>
    %cst_61 = arith.constant dense<0.000000e+00> : vector<256x4xf32>
    %90 = tpu.matmul %87, %89, %cst_61 {dimension_numbers = #tpu.dot_dimension_numbers<[1], [0], [0], [1], [0, 0, 1, 1], [], []>} : vector<256x4xf32>, vector<4x4xf32>, vector<256x4xf32> -> vector<256x4xf32>
    %91 = arith.addf %82, %90 : vector<256x4xf32>
    %cst_62 = arith.constant 0.000000e+00 : f32
    %92 = vector.broadcast %cst_62 : f32 to vector<256x4xf32>
    %93 = arith.maximumf %91, %92 : vector<256x4xf32>
    %c0_63 = arith.constant 0 : index
    %c0_64 = arith.constant 0 : index
    %94 = vector.load %arg6[%c0_63, %c0_64] : memref<4x16xf32, #tpu.memory_space<vmem>>, vector<4x16xf32>
    %cst_65 = arith.constant dense<0.000000e+00> : vector<256x16xf32>
    %95 = tpu.matmul %93, %94, %cst_65 {dimension_numbers = #tpu.dot_dimension_numbers<[1], [0], [0], [1], [0, 0, 1, 1], [], []>} : vector<256x4xf32>, vector<4x16xf32>, vector<256x16xf32> -> vector<256x16xf32>
    %c0_66 = arith.constant 0 : index
    %c0_67 = arith.constant 0 : index
    %96 = vector.load %arg7[%c0_66, %c0_67] : memref<1x16xf32, #tpu.memory_space<vmem>>, vector<1x16xf32>
    %97 = vector.broadcast %96 : vector<1x16xf32> to vector<256x16xf32>
    %98 = arith.addf %95, %97 : vector<256x16xf32>
    %c0_68 = arith.constant 0 : index
    %c0_69 = arith.constant 0 : index
    %99 = vector.load %arg8[%c0_68, %c0_69] : memref<4x16xf32, #tpu.memory_space<vmem>>, vector<4x16xf32>
    %cst_70 = arith.constant dense<0.000000e+00> : vector<256x16xf32>
    %100 = tpu.matmul %1, %99, %cst_70 {dimension_numbers = #tpu.dot_dimension_numbers<[1], [0], [0], [1], [0, 0, 1, 1], [], []>} : vector<256x4xf32>, vector<4x16xf32>, vector<256x16xf32> -> vector<256x16xf32>
    %c0_71 = arith.constant 0 : index
    %c0_72 = arith.constant 0 : index
    %101 = vector.load %arg9[%c0_71, %c0_72] : memref<1x16xf32, #tpu.memory_space<vmem>>, vector<1x16xf32>
    %102 = vector.broadcast %101 : vector<1x16xf32> to vector<256x16xf32>
    %103 = arith.addf %100, %102 : vector<256x16xf32>
    %104 = arith.addf %98, %103 : vector<256x16xf32>
    %cst_73 = arith.constant 0.000000e+00 : f32
    %105 = vector.broadcast %cst_73 : f32 to vector<256x16xf32>
    %106 = arith.maximumf %104, %105 : vector<256x16xf32>
    %c0_74 = arith.constant 0 : index
    %c0_75 = arith.constant 0 : index
    %c0_76 = arith.constant 0 : index
    %107 = vector.load %arg10[%c0_74, %c0_75, %c0_76] : memref<1x256x16xf32, #tpu.memory_space<vmem>>, vector<1x256x16xf32>
    %108 = vector.shape_cast %107 : vector<1x256x16xf32> to vector<256x16xf32>
    %109 = vector.shape_cast %106 : vector<256x16xf32> to vector<1x256x16xf32>
    tpu.vector_store %arg10[%c0_74, %c0_75, %c0_76], %109 {strides = array<i32>} : memref<1x256x16xf32, #tpu.memory_space<vmem>>, vector<1x256x16xf32>,
    return
  }
  func.func @transform_0(%arg0: i32) -> (i32, i32, i32) {
    %c0_i32 = arith.constant 0 : i32
    %c0_i32_0 = arith.constant 0 : i32
    %c0_i32_1 = arith.constant 0 : i32
    return %arg0, %c0_i32, %c0_i32_0 : i32, i32, i32
  }
  func.func @transform_1(%arg0: i32) -> (i32, i32) {
    %c0_i32 = arith.constant 0 : i32
    %c0_i32_0 = arith.constant 0 : i32
    %c0_i32_1 = arith.constant 0 : i32
    return %c0_i32, %c0_i32_0 : i32, i32
  }
  func.func @transform_2(%arg0: i32) -> (i32, i32) {
    %c0_i32 = arith.constant 0 : i32
    %c0_i32_0 = arith.constant 0 : i32
    %c0_i32_1 = arith.constant 0 : i32
    return %c0_i32, %c0_i32_0 : i32, i32
  }
  func.func @transform_3(%arg0: i32) -> (i32, i32, i32) {
    %c0_i32 = arith.constant 0 : i32
    %c0_i32_0 = arith.constant 0 : i32
    %c0_i32_1 = arith.constant 0 : i32
    %c0_i32_2 = arith.constant 0 : i32
    return %c0_i32, %c0_i32_0, %c0_i32_1 : i32, i32, i32
  }
  func.func @transform_4(%arg0: i32) -> (i32, i32) {
    %c0_i32 = arith.constant 0 : i32
    %c0_i32_0 = arith.constant 0 : i32
    %c0_i32_1 = arith.constant 0 : i32
    return %c0_i32, %c0_i32_0 : i32, i32
  }
  func.func @transform_5(%arg0: i32) -> (i32, i32) {
    %c0_i32 = arith.constant 0 : i32
    %c0_i32_0 = arith.constant 0 : i32
    %c0_i32_1 = arith.constant 0 : i32
    return %c0_i32, %c0_i32_0 : i32, i32
  }
  func.func @transform_6(%arg0: i32) -> (i32, i32) {
    %c0_i32 = arith.constant 0 : i32
    %c0_i32_0 = arith.constant 0 : i32
    %c0_i32_1 = arith.constant 0 : i32
    return %c0_i32, %c0_i32_0 : i32, i32
  }
  func.func @transform_7(%arg0: i32) -> (i32, i32) {
    %c0_i32 = arith.constant 0 : i32
    %c0_i32_0 = arith.constant 0 : i32
    %c0_i32_1 = arith.constant 0 : i32
    return %c0_i32, %c0_i32_0 : i32, i32
  }
  func.func @transform_8(%arg0: i32) -> (i32, i32) {
    %c0_i32 = arith.constant 0 : i32
    %c0_i32_0 = arith.constant 0 : i32
    %c0_i32_1 = arith.constant 0 : i32
    return %c0_i32, %c0_i32_0 : i32, i32
  }
  func.func @transform_9(%arg0: i32) -> (i32, i32, i32) {
    %c0_i32 = arith.constant 0 : i32
    %c0_i32_0 = arith.constant 0 : i32
    %c0_i32_1 = arith.constant 0 : i32
    return %arg0, %c0_i32, %c0_i32_0 : i32, i32, i32
  }
}

</mosaic_0001>

<llo_original>
// kernel: tpu_custom_call.1
$region0: #{tpu_custom_call.1}
  #allocation0 [shape = 'u32[]', space=smem, size = 0x4, offset = 0x4, fixed_abs, tag = 'smem constant byte address 0x4 - core index']
  #allocation1 [shape = 'u32[144,128]{1,0:T(1,128)}', space=vmem, size = 0x12000, scoped, tag = 'internal scratch']
  #allocation2 [shape = 'f32[304,4]{1,0:T(8,128)}', space=vmem, size = 0x26000, scoped, tag = 'scratch operand']
  %s0 = inlined_call_operand.vmem [shape: f32[2,256,4], index: 0, kind: input, shape index: {}]
  %s1 = inlined_call_operand.vmem [shape: f32[4,4], index: 1, kind: input, shape index: {}]
  %s2 = inlined_call_operand.vmem [shape: f32[1,4], index: 2, kind: input, shape index: {}]
  %s3 = inlined_call_operand.vmem [shape: f32[9,4,4], index: 3, kind: input, shape index: {}]
  %s4 = inlined_call_operand.vmem [shape: f32[1,4], index: 4, kind: input, shape index: {}]
  %s5 = inlined_call_operand.vmem [shape: f32[4,16], index: 5, kind: input, shape index: {}]
  %s6 = inlined_call_operand.vmem [shape: f32[1,16], index: 6, kind: input, shape index: {}]
  %s7 = inlined_call_operand.vmem [shape: f32[4,16], index: 7, kind: input, shape index: {}]
  %s8 = inlined_call_operand.vmem [shape: f32[1,16], index: 8, kind: input, shape index: {}]
  %s9 = inlined_call_operand.vmem [shape: f32[2,256,16], index: 9, kind: output, shape index: {}]
  %s10 = sld [smem:[#allocation0]]
  $region69: #{tpu_custom_call.1} parent=0
    _
  %s12 = ssub.s32 1, %s10
  %s13 = scalar_select 0, %s12, %s10
  loop: start=0, step=1, limit=4
  $region2: #{tpu_custom_call.1} parent=0 // loop_pre_header
    _
  $region3: #{tpu_custom_call.1} parent=0 // loop_header
    %s15 = sphi 0, %s19
    %p16 = scmp.ge.s32.totalorder %s15, 4
    %s25 = sphi 0, %s27
    %s28 = sphi 0, %s25
    %s29 = sphi 0, %s28
    %s45 = sphi 0, %s29
    %s49 = sphi 0, %s49
    %s51 = sphi 0, %s49
    %s52 = sphi 0, %s51
    %s66 = sphi 0, %s52
    %s70 = sphi 0, %s70
    %s72 = sphi 0, %s70
    %s73 = sphi 0, %s72
    %s87 = sphi 0, %s73
    %s91 = sphi 0, %s91
    %s93 = sphi 0, %s91
    %s94 = sphi 0, %s93
    %s108 = sphi 0, %s94
    %s112 = sphi 0, %s112
    %s114 = sphi 0, %s112
    %s115 = sphi 0, %s114
    %s129 = sphi 0, %s115
    %s133 = sphi 0, %s133
    %s135 = sphi 0, %s133
    %s136 = sphi 0, %s135
    %s150 = sphi 0, %s136
    %s154 = sphi 0, %s154
    %s156 = sphi 0, %s154
    %s157 = sphi 0, %s156
    %s171 = sphi 0, %s157
    %s175 = sphi 0, %s175
    %s177 = sphi 0, %s175
    %s178 = sphi 0, %s177
    %s192 = sphi 0, %s178
    %s196 = sphi 0, %s196
    %s198 = sphi 0, %s196
    %s199 = sphi 0, %s198
    %s213 = sphi 0, %s199
    %s219 = sphi 0, %s221
    %s222 = sphi 0, %s219
    %s223 = sphi 0, %s222
    %s239 = sphi 0, %s223
  $region4: #{tpu_custom_call.1} parent=0 // loop_header_branch
    %18 = sbr.rel (%p16) target = $region8
  $region5: #{tpu_custom_call.1} parent=0 // loop_body
    %s20 = ssub.s32 %s15, 1
    %s21 = ssub.s32 %s15, 2
    %s22 = sadd.s32 %s15, 1
    %s23 = ssub.s32 %s15, %s22
    %p24 = scmp.eq.s32.totalorder %s23, 0
    %s26 = sadd.s32 %s25, 1
    %s27 = scalar_select %p24, %s25, %s26
    %p30 = pneg %p24
    %p31 = scmp.eq.s32.totalorder %s15, 1
    %p32 = por %p30, %p31
    %p33 = scmp.ne.s32.totalorder %s25, %s28
    %p34 = scmp.eq.s32.totalorder %s15, 0
    %p35 = por %p33, %p34
    %p36 = scmp.ne.s32.totalorder %s25, %s28
    %p37 = scmp.eq.s32.totalorder %s20, 1
    %p38 = por %p36, %p37
    %p39 = scmp.ne.s32.totalorder %s28, %s29
    %p40 = scmp.eq.s32.totalorder %s20, 0
    %p41 = por %p39, %p40
    %p42 = scmp.ne.s32.totalorder %s28, %s29
    %p43 = scmp.eq.s32.totalorder %s21, 1
    %p44 = por %p42, %p43
    %p46 = scmp.ne.s32.totalorder %s29, %s45
    %p47 = scmp.eq.s32.totalorder %s21, 0
    %p48 = por %p46, %p47
    %s50 = sadd.s32 %s49, 1
    %p53 = scmp.eq.s32.totalorder %s15, 1
    %p54 = scmp.ne.s32.totalorder %s49, %s51
    %p55 = scmp.eq.s32.totalorder %s15, 0
    %p56 = por %p54, %p55
    %p57 = scmp.ne.s32.totalorder %s49, %s51
    %p58 = scmp.eq.s32.totalorder %s20, 1
    %p59 = por %p57, %p58
    %p60 = scmp.ne.s32.totalorder %s51, %s52
    %p61 = scmp.eq.s32.totalorder %s20, 0
    %p62 = por %p60, %p61
    %p63 = scmp.ne.s32.totalorder %s51, %s52
    %p64 = scmp.eq.s32.totalorder %s21, 1
    %p65 = por %p63, %p64
    %p67 = scmp.ne.s32.totalorder %s52, %s66
    %p68 = scmp.eq.s32.totalorder %s21, 0
    %p69 = por %p67, %p68
    %s71 = sadd.s32 %s70, 1
    %p74 = scmp.eq.s32.totalorder %s15, 1
    %p75 = scmp.ne.s32.totalorder %s70, %s72
    %p76 = scmp.eq.s32.totalorder %s15, 0
    %p77 = por %p75, %p76
    %p78 = scmp.ne.s32.totalorder %s70, %s72
    %p79 = scmp.eq.s32.totalorder %s20, 1
    %p80 = por %p78, %p79
    %p81 = scmp.ne.s32.totalorder %s72, %s73
    %p82 = scmp.eq.s32.totalorder %s20, 0
    %p83 = por %p81, %p82
    %p84 = scmp.ne.s32.totalorder %s72, %s73
    %p85 = scmp.eq.s32.totalorder %s21, 1
    %p86 = por %p84, %p85
    %p88 = scmp.ne.s32.totalorder %s73, %s87
    %p89 = scmp.eq.s32.totalorder %s21, 0
    %p90 = por %p88, %p89
    %s92 = sadd.s32 %s91, 1
    %p95 = scmp.eq.s32.totalorder %s15, 1
    %p96 = scmp.ne.s32.totalorder %s91, %s93
    %p97 = scmp.eq.s32.totalorder %s15, 0
    %p98 = por %p96, %p97
    %p99 = scmp.ne.s32.totalorder %s91, %s93
    %p100 = scmp.eq.s32.totalorder %s20, 1
    %p101 = por %p99, %p100
    %p102 = scmp.ne.s32.totalorder %s93, %s94
    %p103 = scmp.eq.s32.totalorder %s20, 0
    %p104 = por %p102, %p103
    %p105 = scmp.ne.s32.totalorder %s93, %s94
    %p106 = scmp.eq.s32.totalorder %s21, 1
    %p107 = por %p105, %p106
    %p109 = scmp.ne.s32.totalorder %s94, %s108
    %p110 = scmp.eq.s32.totalorder %s21, 0
    %p111 = por %p109, %p110
    %s113 = sadd.s32 %s112, 1
    %p116 = scmp.eq.s32.totalorder %s15, 1
    %p117 = scmp.ne.s32.totalorder %s112, %s114
    %p118 = scmp.eq.s32.totalorder %s15, 0
    %p119 = por %p117, %p118
    %p120 = scmp.ne.s32.totalorder %s112, %s114
    %p121 = scmp.eq.s32.totalorder %s20, 1
    %p122 = por %p120, %p121
    %p123 = scmp.ne.s32.totalorder %s114, %s115
    %p124 = scmp.eq.s32.totalorder %s20, 0
    %p125 = por %p123, %p124
    %p126 = scmp.ne.s32.totalorder %s114, %s115
    %p127 = scmp.eq.s32.totalorder %s21, 1
    %p128 = por %p126, %p127
    %p130 = scmp.ne.s32.totalorder %s115, %s129
    %p131 = scmp.eq.s32.totalorder %s21, 0
    %p132 = por %p130, %p131
    %s134 = sadd.s32 %s133, 1
    %p137 = scmp.eq.s32.totalorder %s15, 1
    %p138 = scmp.ne.s32.totalorder %s133, %s135
    %p139 = scmp.eq.s32.totalorder %s15, 0
    %p140 = por %p138, %p139
    %p141 = scmp.ne.s32.totalorder %s133, %s135
    %p142 = scmp.eq.s32.totalorder %s20, 1
    %p143 = por %p141, %p142
    %p144 = scmp.ne.s32.totalorder %s135, %s136
    %p145 = scmp.eq.s32.totalorder %s20, 0
    %p146 = por %p144, %p145
    %p147 = scmp.ne.s32.totalorder %s135, %s136
    %p148 = scmp.eq.s32.totalorder %s21, 1
    %p149 = por %p147, %p148
    %p151 = scmp.ne.s32.totalorder %s136, %s150
    %p152 = scmp.eq.s32.totalorder %s21, 0
    %p153 = por %p151, %p152
    %s155 = sadd.s32 %s154, 1
    %p158 = scmp.eq.s32.totalorder %s15, 1
    %p159 = scmp.ne.s32.totalorder %s154, %s156
    %p160 = scmp.eq.s32.totalorder %s15, 0
    %p161 = por %p159, %p160
    %p162 = scmp.ne.s32.totalorder %s154, %s156
    %p163 = scmp.eq.s32.totalorder %s20, 1
    %p164 = por %p162, %p163
    %p165 = scmp.ne.s32.totalorder %s156, %s157
    %p166 = scmp.eq.s32.totalorder %s20, 0
    %p167 = por %p165, %p166
    %p168 = scmp.ne.s32.totalorder %s156, %s157
    %p169 = scmp.eq.s32.totalorder %s21, 1
    %p170 = por %p168, %p169
    %p172 = scmp.ne.s32.totalorder %s157, %s171
    %p173 = scmp.eq.s32.totalorder %s21, 0
    %p174 = por %p172, %p173
    %s176 = sadd.s32 %s175, 1
    %p179 = scmp.eq.s32.totalorder %s15, 1
    %p180 = scmp.ne.s32.totalorder %s175, %s177
    %p181 = scmp.eq.s32.totalorder %s15, 0
    %p182 = por %p180, %p181
    %p183 = scmp.ne.s32.totalorder %s175, %s177
    %p184 = scmp.eq.s32.totalorder %s20, 1
    %p185 = por %p183, %p184
    %p186 = scmp.ne.s32.totalorder %s177, %s178
    %p187 = scmp.eq.s32.totalorder %s20, 0
    %p188 = por %p186, %p187
    %p189 = scmp.ne.s32.totalorder %s177, %s178
    %p190 = scmp.eq.s32.totalorder %s21, 1
    %p191 = por %p189, %p190
    %p193 = scmp.ne.s32.totalorder %s178, %s192
    %p194 = scmp.eq.s32.totalorder %s21, 0
    %p195 = por %p193, %p194
    %s197 = sadd.s32 %s196, 1
    %p200 = scmp.eq.s32.totalorder %s15, 1
    %p201 = scmp.ne.s32.totalorder %s196, %s198
    %p202 = scmp.eq.s32.totalorder %s15, 0
    %p203 = por %p201, %p202
    %p204 = scmp.ne.s32.totalorder %s196, %s198
    %p205 = scmp.eq.s32.totalorder %s20, 1
    %p206 = por %p204, %p205
    %p207 = scmp.ne.s32.totalorder %s198, %s199
    %p208 = scmp.eq.s32.totalorder %s20, 0
    %p209 = por %p207, %p208
    %p210 = scmp.ne.s32.totalorder %s198, %s199
    %p211 = scmp.eq.s32.totalorder %s21, 1
    %p212 = por %p210, %p211
    %p214 = scmp.ne.s32.totalorder %s199, %s213
    %p215 = scmp.eq.s32.totalorder %s21, 0
    %p216 = por %p214, %p215
    %s217 = ssub.s32 %s15, %s22
    %p218 = scmp.eq.s32.totalorder %s217, 0
    %s220 = sadd.s32 %s219, 1
    %s221 = scalar_select %p218, %s219, %s220
    %p224 = pneg %p218
    %p225 = scmp.eq.s32.totalorder %s15, 1
    %p226 = por %p224, %p225
    %p227 = scmp.ne.s32.totalorder %s219, %s222
    %p228 = scmp.eq.s32.totalorder %s15, 0
    %p229 = por %p227, %p228
    %p230 = scmp.ne.s32.totalorder %s219, %s222
    %p231 = scmp.eq.s32.totalorder %s20, 1
    %p232 = por %p230, %p231
    %p233 = scmp.ne.s32.totalorder %s222, %s223
    %p234 = scmp.eq.s32.totalorder %s20, 0
    %p235 = por %p233, %p234
    %p236 = scmp.ne.s32.totalorder %s222, %s223
    %p237 = scmp.eq.s32.totalorder %s21, 1
    %p238 = por %p236, %p237
    %p240 = scmp.ne.s32.totalorder %s223, %s239
    %p241 = scmp.eq.s32.totalorder %s21, 0
    %p242 = por %p240, %p241
    %p243 = scmp.le.s32.totalorder 1, %s15
    %p244 = scmp.lt.s32.totalorder %s15, 3
    %p245 = pnand %p243, %p244
    %p246 = pneg %p245
    // Predicated region
    $region9: #{tpu_custom_call.1} parent=5 // pred_check
      _
    $region10: #{tpu_custom_call.1} parent=5 // pred_check_branch
      %248 = sbr.rel (%p245) target = $region12
    $region11: #{tpu_custom_call.1} parent=5 // pred_region
      %s249 = ssub.s32 %s15, 1
      // Predicated region
      $region13: #{tpu_custom_call.1} parent=11 // pred_check
        %p250 = pneg %p62
      $region14: #{tpu_custom_call.1} parent=11 // pred_check_branch
        %252 = sbr.rel (%p250) target = $region16
      $region15: #{tpu_custom_call.1} parent=11 // pred_region
        _
      $region16: #{tpu_custom_call.1} parent=11 // pred_fallthru
        _
      // Predicated region
      $region17: #{tpu_custom_call.1} parent=11 // pred_check
        %p253 = pneg %p83
      $region18: #{tpu_custom_call.1} parent=11 // pred_check_branch
        %255 = sbr.rel (%p253) target = $region20
      $region19: #{tpu_custom_call.1} parent=11 // pred_region
        _
      $region20: #{tpu_custom_call.1} parent=11 // pred_fallthru
        _
      // Predicated region
      $region21: #{tpu_custom_call.1} parent=11 // pred_check
        %p256 = pneg %p104
      $region22: #{tpu_custom_call.1} parent=11 // pred_check_branch
        %258 = sbr.rel (%p256) target = $region24
      $region23: #{tpu_custom_call.1} parent=11 // pred_region
        _
      $region24: #{tpu_custom_call.1} parent=11 // pred_fallthru
        _
      // Predicated region
      $region25: #{tpu_custom_call.1} parent=11 // pred_check
        %p259 = pneg %p125
      $region26: #{tpu_custom_call.1} parent=11 // pred_check_branch
        %261 = sbr.rel (%p259) target = $region28
      $region27: #{tpu_custom_call.1} parent=11 // pred_region
        _
      $region28: #{tpu_custom_call.1} parent=11 // pred_fallthru
        _
      // Predicated region
      $region29: #{tpu_custom_call.1} parent=11 // pred_check
        %p262 = pneg %p146
      $region30: #{tpu_custom_call.1} parent=11 // pred_check_branch
        %264 = sbr.rel (%p262) target = $region32
      $region31: #{tpu_custom_call.1} parent=11 // pred_region
        _
      $region32: #{tpu_custom_call.1} parent=11 // pred_fallthru
        _
      // Predicated region
      $region33: #{tpu_custom_call.1} parent=11 // pred_check
        %p265 = pneg %p167
      $region34: #{tpu_custom_call.1} parent=11 // pred_check_branch
        %267 = sbr.rel (%p265) target = $region36
      $region35: #{tpu_custom_call.1} parent=11 // pred_region
        _
      $region36: #{tpu_custom_call.1} parent=11 // pred_fallthru
        _
      // Predicated region
      $region37: #{tpu_custom_call.1} parent=11 // pred_check
        %p268 = pneg %p188
      $region38: #{tpu_custom_call.1} parent=11 // pred_check_branch
        %270 = sbr.rel (%p268) target = $region40
      $region39: #{tpu_custom_call.1} parent=11 // pred_region
        _
      $region40: #{tpu_custom_call.1} parent=11 // pred_fallthru
        _
      // Predicated region
      $region41: #{tpu_custom_call.1} parent=11 // pred_check
        %p271 = pneg %p209
      $region42: #{tpu_custom_call.1} parent=11 // pred_check_branch
        %273 = sbr.rel (%p271) target = $region44
      $region43: #{tpu_custom_call.1} parent=11 // pred_region
        _
      $region44: #{tpu_custom_call.1} parent=11 // pred_fallthru
        _
    $region12: #{tpu_custom_call.1} parent=5 // pred_fallthru
      _
    %p274 = scmp.lt.s32.totalorder %s15, 2
    // Predicated region
    $region45: #{tpu_custom_call.1} parent=5 // pred_check
      %p275 = pneg %p274
    $region46: #{tpu_custom_call.1} parent=5 // pred_check_branch
      %277 = sbr.rel (%p275) target = $region48
    $region47: #{tpu_custom_call.1} parent=5 // pred_region
      // Predicated region
      $region49: #{tpu_custom_call.1} parent=47 // pred_check
        %p278 = pneg %p35
      $region50: #{tpu_custom_call.1} parent=47 // pred_check_branch
        %280 = sbr.rel (%p278) target = $region52
      $region51: #{tpu_custom_call.1} parent=47 // pred_region
        %p281 = scmp.lt.s32.totalorder %s15, 1
        %s282 = scalar_select %p281, %s15, 1
        %s283 = smul.addr %s282, 32
        %s284 = smul.addr %s283, 8
        %s285 = scalar_lea.vmem %s0, %s284
      $region52: #{tpu_custom_call.1} parent=47 // pred_fallthru
        _
    $region48: #{tpu_custom_call.1} parent=5 // pred_fallthru
      _
    %p286 = scmp.le.s32.totalorder 1, %s15
    %p287 = scmp.lt.s32.totalorder %s15, 3
    %p288 = pnand %p286, %p287
    %p289 = pneg %p288
    // Predicated region
    $region53: #{tpu_custom_call.1} parent=5 // pred_check
      _
    $region54: #{tpu_custom_call.1} parent=5 // pred_check_branch
      %291 = sbr.rel (%p288) target = $region56
    $region55: #{tpu_custom_call.1} parent=5 // pred_region
      %s292 = ssub.s32 %s15, 1
      %p293 = scmp.lt.s32.totalorder %s20, 1
      %s294 = scalar_select %p293, %s20, 1
      %s295 = smul.addr %s294, 32
      %s296 = smul.addr %s295, 8
      %s297 = scalar_lea.vmem %s0, %s296
      %p298 = pneg %p41
      %p299 = pneg %p38
      %p300 = pneg %p62
      %p301 = pneg %p59
      %p302 = pneg %p83
      %p303 = pneg %p80
      %p304 = pneg %p104
      %p305 = pneg %p101
      %p306 = pneg %p125
      %p307 = pneg %p122
      %p308 = pneg %p146
      %p309 = pneg %p143
      %p310 = pneg %p167
      %p311 = pneg %p164
      %p312 = pneg %p188
      %p313 = pneg %p185
      %p314 = pneg %p209
      %p315 = pneg %p206
      %p316 = pneg %p235
      %p317 = pneg %p232
      %p318 = scmp.lt.s32.totalorder %s20, 1
      %s319 = scalar_select %p318, %s20, 1
      %s320 = smul.addr %s319, 32
      %s321 = smul.addr %s320, 8
      %s322 = scalar_lea.vmem %s9, %s321
      %p323 = scmp.lt.s32.totalorder %s20, 1
      %s324 = scalar_select %p323, %s20, 1
      %s325 = smul.addr %s324, 32
      %s326 = smul.addr %s325, 8
      %s327 = scalar_lea.vmem %s0, %s326
      %p328 = scmp.lt.s32.totalorder %s20, 1
      %s329 = scalar_select %p328, %s20, 1
      %s330 = smul.addr %s329, 32
      %s331 = smul.addr %s330, 8
      %s332 = scalar_lea.vmem %s9, %s331
      %v333 = vld [vmem:[%s327] sm:$0xff]
      %v334 = vld [vmem:[%s327 + $0x8] sm:$0xff]
      %v335 = vld [vmem:[%s327 + $0x10] sm:$0xff]
      %v336 = vld [vmem:[%s327 + $0x18] sm:$0xff]
      %v337 = vld [vmem:[%s327 + $0x20] sm:$0xff]
      %v338 = vld [vmem:[%s327 + $0x28] sm:$0xff]
      %v339 = vld [vmem:[%s327 + $0x30] sm:$0xff]
      %v340 = vld [vmem:[%s327 + $0x38] sm:$0xff]
      %v341 = vld [vmem:[%s327 + $0x40] sm:$0xff]
      %v342 = vld [vmem:[%s327 + $0x48] sm:$0xff]
      %v343 = vld [vmem:[%s327 + $0x50] sm:$0xff]
      %v344 = vld [vmem:[%s327 + $0x58] sm:$0xff]
      %v345 = vld [vmem:[%s327 + $0x60] sm:$0xff]
      %v346 = vld [vmem:[%s327 + $0x68] sm:$0xff]
      %v347 = vld [vmem:[%s327 + $0x70] sm:$0xff]
      %v348 = vld [vmem:[%s327 + $0x78] sm:$0xff]
      %v349 = vld [vmem:[%s327 + $0x80] sm:$0xff]
      %v350 = vld [vmem:[%s327 + $0x88] sm:$0xff]
      %v351 = vld [vmem:[%s327 + $0x90] sm:$0xff]
      %v352 = vld [vmem:[%s327 + $0x98] sm:$0xff]
      %v353 = vld [vmem:[%s327 + $0xa0] sm:$0xff]
      %v354 = vld [vmem:[%s327 + $0xa8] sm:$0xff]
      %v355 = vld [vmem:[%s327 + $0xb0] sm:$0xff]
      %v356 = vld [vmem:[%s327 + $0xb8] sm:$0xff]
      %v357 = vld [vmem:[%s327 + $0xc0] sm:$0xff]
      %v358 = vld [vmem:[%s327 + $0xc8] sm:$0xff]
      %v359 = vld [vmem:[%s327 + $0xd0] sm:$0xff]
      %v360 = vld [vmem:[%s327 + $0xd8] sm:$0xff]
      %v361 = vld [vmem:[%s327 + $0xe0] sm:$0xff]
      %v362 = vld [vmem:[%s327 + $0xe8] sm:$0xff]
      %v363 = vld [vmem:[%s327 + $0xf0] sm:$0xff]
      %v364 = vld [vmem:[%s327 + $0xf8] sm:$0xff]
      %v365 = vld [vmem:[%s1] sm:$0xf]
      %v366 = vld [vmem:[%s2] sm:$0x1]
      %v368 = vlaneseq
      %v369 = vshrl.u32 %v368, 7
      %v370 = vsub.s32 0, %v369
      %v371 = vrot.slane %v366, %v370
      %vm373 = vcmask 31744
      %v375 = vsel %vm373, %v333, 0
      %v378 = vsel %vm373, %v334, 0
      %v381 = vsel %vm373, %v335, 0
      %v384 = vsel %vm373, %v336, 0
      %v387 = vsel %vm373, %v337, 0
      %v390 = vsel %vm373, %v338, 0
      %v393 = vsel %vm373, %v339, 0
      %v396 = vsel %vm373, %v340, 0
      %v399 = vsel %vm373, %v341, 0
      %v402 = vsel %vm373, %v342, 0
      %v405 = vsel %vm373, %v343, 0
      %v408 = vsel %vm373, %v344, 0
      %v411 = vsel %vm373, %v345, 0
      %v414 = vsel %vm373, %v346, 0
      %v417 = vsel %vm373, %v347, 0
      %v420 = vsel %vm373, %v348, 0
      %v423 = vsel %vm373, %v349, 0
      %v426 = vsel %vm373, %v350, 0
      %v429 = vsel %vm373, %v351, 0
      %v432 = vsel %vm373, %v352, 0
      %v435 = vsel %vm373, %v353, 0
      %v438 = vsel %vm373, %v354, 0
      %v441 = vsel %vm373, %v355, 0
      %v444 = vsel %vm373, %v356, 0
      %v447 = vsel %vm373, %v357, 0
      %v450 = vsel %vm373, %v358, 0
      %v453 = vsel %vm373, %v359, 0
      %v456 = vsel %vm373, %v360, 0
      %v459 = vsel %vm373, %v361, 0
      %v462 = vsel %vm373, %v362, 0
      %v465 = vsel %vm373, %v363, 0
      %v468 = vsel %vm373, %v364, 0
      %vm470 = vcmask 1043456
      %v472 = vsel %vm470, %v365, 0
      %474 = vmatprep.subr.mxu0 0.0
      %475 = vmatpush1.msra.mxu0 0.0
      %476 = vmatprep.subr.mxu0 0.0
      %477 = vmatpush1.msra.mxu0 0.0
      %478 = vmatprep.subr.mxu0 0.0
      %479 = vmatpush1.msra.mxu0 0.0
      %480 = vmatprep.subr.mxu0 0.0
      %481 = vmatpush1.msra.mxu0 0.0
      %482 = vmatprep.subr.mxu0 0.0
      %483 = vmatpush1.msra.mxu0 0.0
      %484 = vmatprep.subr.mxu0 0.0
      %485 = vmatpush1.msra.mxu0 0.0
      %486 = vmatprep.subr.mxu0 0.0
      %487 = vmatpush1.msra.mxu0 0.0
      %488 = vmatprep.subr.mxu0 0.0
      %489 = vmatpush1.msra.mxu0 0.0
      %490 = vmatprep.subr.mxu0 0.0
      %491 = vmatpush1.msra.mxu0 0.0
      %492 = vmatprep.subr.mxu0 0.0
      %493 = vmatpush1.msra.mxu0 0.0
      %494 = vmatprep.subr.mxu0 0.0
      %495 = vmatpush1.msra.mxu0 0.0
      %496 = vmatprep.subr.mxu0 0.0
      %497 = vmatpush1.msra.mxu0 0.0
      %498 = vmatprep.subr.mxu0 0.0
      %499 = vmatpush1.msra.mxu0 0.0
      %500 = vmatprep.subr.mxu0 0.0
      %501 = vmatpush1.msra.mxu0 0.0
      %502 = vmatprep.subr.mxu0 0.0
      %503 = vmatpush1.msra.mxu0 0.0
      %504 = vmatprep.subr.mxu0 0.0
      %505 = vmatpush1.msra.mxu0 %v472
      %506 = vmatprep.subr.mxu0 0.0
      %507 = vmatpush2.msra.mxu0 0.0
      %508 = vmatprep.subr.mxu0 0.0
      %509 = vmatpush2.msra.mxu0 0.0
      %510 = vmatprep.subr.mxu0 0.0
      %511 = vmatpush2.msra.mxu0 0.0
      %512 = vmatprep.subr.mxu0 0.0
      %513 = vmatpush2.msra.mxu0 0.0
      %514 = vmatprep.subr.mxu0 0.0
      %515 = vmatpush2.msra.mxu0 0.0
      %516 = vmatprep.subr.mxu0 0.0
      %517 = vmatpush2.msra.mxu0 0.0
      %518 = vmatprep.subr.mxu0 0.0
      %519 = vmatpush2.msra.mxu0 0.0
      %520 = vmatprep.subr.mxu0 0.0
      %521 = vmatpush2.msra.mxu0 0.0
      %522 = vmatprep.subr.mxu0 0.0
      %523 = vmatpush2.msra.mxu0 0.0
      %524 = vmatprep.subr.mxu0 0.0
      %525 = vmatpush2.msra.mxu0 0.0
      %526 = vmatprep.subr.mxu0 0.0
      %527 = vmatpush2.msra.mxu0 0.0
      %528 = vmatprep.subr.mxu0 0.0
      %529 = vmatpush2.msra.mxu0 0.0
      %530 = vmatprep.subr.mxu0 0.0
      %531 = vmatpush2.msra.mxu0 0.0
      %532 = vmatprep.subr.mxu0 0.0
      %533 = vmatpush2.msra.mxu0 0.0
      %534 = vmatprep.subr.mxu0 0.0
      %535 = vmatpush2.msra.mxu0 0.0
      %536 = vmatprep.subr.mxu0 0.0
      %537 = vmatpush2.msra.mxu0 0.0
      %538 = vmatprep.mubr.f32.mxu0 0.0
      %539 = vmatmul.mubr.f32.gmra.mxu0 %v375
      %v540 = vpop.f32.mrf.mxu0
      %v541 = vadd.f32 %v371, %v540
      %v542 = vpop.f32.mrf.mxu0
      %543 = vmatprep.mubr.f32.mxu0 0.0
      %544 = vmatmul.mubr.f32.gmra.mxu0 %v378
      %v545 = vpop.f32.mrf.mxu0
      %v546 = vadd.f32 %v371, %v545
      %v547 = vpop.f32.mrf.mxu0
      %548 = vmatprep.mubr.f32.mxu0 0.0
      %549 = vmatmul.mubr.f32.gmra.mxu0 %v381
      %v550 = vpop.f32.mrf.mxu0
      %v551 = vadd.f32 %v371, %v550
      %v552 = vpop.f32.mrf.mxu0
      %553 = vmatprep.mubr.f32.mxu0 0.0
      %554 = vmatmul.mubr.f32.gmra.mxu0 %v384
      %v555 = vpop.f32.mrf.mxu0
      %v556 = vadd.f32 %v371, %v555
      %v557 = vpop.f32.mrf.mxu0
      %558 = vmatprep.mubr.f32.mxu0 0.0
      %559 = vmatmul.mubr.f32.gmra.mxu0 %v387
      %v560 = vpop.f32.mrf.mxu0
      %v561 = vadd.f32 %v371, %v560
      %v562 = vpop.f32.mrf.mxu0
      %563 = vmatprep.mubr.f32.mxu0 0.0
      %564 = vmatmul.mubr.f32.gmra.mxu0 %v390
      %v565 = vpop.f32.mrf.mxu0
      %v566 = vadd.f32 %v371, %v565
      %v567 = vpop.f32.mrf.mxu0
      %568 = vmatprep.mubr.f32.mxu0 0.0
      %569 = vmatmul.mubr.f32.gmra.mxu0 %v393
      %v570 = vpop.f32.mrf.mxu0
      %v571 = vadd.f32 %v371, %v570
      %v572 = vpop.f32.mrf.mxu0
      %573 = vmatprep.mubr.f32.mxu0 0.0
      %574 = vmatmul.mubr.f32.gmra.mxu0 %v396
      %v575 = vpop.f32.mrf.mxu0
      %v576 = vadd.f32 %v371, %v575
      %v577 = vpop.f32.mrf.mxu0
      %578 = vmatprep.mubr.f32.mxu0 0.0
      %579 = vmatmul.mubr.f32.gmra.mxu0 %v399
      %v580 = vpop.f32.mrf.mxu0
      %v581 = vadd.f32 %v371, %v580
      %v582 = vpop.f32.mrf.mxu0
      %583 = vmatprep.mubr.f32.mxu0 0.0
      %584 = vmatmul.mubr.f32.gmra.mxu0 %v402
      %v585 = vpop.f32.mrf.mxu0
      %v586 = vadd.f32 %v371, %v585
      %v587 = vpop.f32.mrf.mxu0
      %588 = vmatprep.mubr.f32.mxu0 0.0
      %589 = vmatmul.mubr.f32.gmra.mxu0 %v405
      %v590 = vpop.f32.mrf.mxu0
      %v591 = vadd.f32 %v371, %v590
      %v592 = vpop.f32.mrf.mxu0
      %593 = vmatprep.mubr.f32.mxu0 0.0
      %594 = vmatmul.mubr.f32.gmra.mxu0 %v408
      %v595 = vpop.f32.mrf.mxu0
      %v596 = vadd.f32 %v371, %v595
      %v597 = vpop.f32.mrf.mxu0
      %598 = vmatprep.mubr.f32.mxu0 0.0
      %599 = vmatmul.mubr.f32.gmra.mxu0 %v411
      %v600 = vpop.f32.mrf.mxu0
      %v601 = vadd.f32 %v371, %v600
      %v602 = vpop.f32.mrf.mxu0
      %603 = vmatprep.mubr.f32.mxu0 0.0
      %604 = vmatmul.mubr.f32.gmra.mxu0 %v414
      %v605 = vpop.f32.mrf.mxu0
      %v606 = vadd.f32 %v371, %v605
      %v607 = vpop.f32.mrf.mxu0
      %608 = vmatprep.mubr.f32.mxu0 0.0
      %609 = vmatmul.mubr.f32.gmra.mxu0 %v417
      %v610 = vpop.f32.mrf.mxu0
      %v611 = vadd.f32 %v371, %v610
      %v612 = vpop.f32.mrf.mxu0
      %613 = vmatprep.mubr.f32.mxu0 0.0
      %614 = vmatmul.mubr.f32.gmra.mxu0 %v420
      %v615 = vpop.f32.mrf.mxu0
      %v616 = vadd.f32 %v371, %v615
      %v617 = vpop.f32.mrf.mxu0
      %618 = vmatprep.mubr.f32.mxu0 0.0
      %619 = vmatmul.mubr.f32.gmra.mxu0 %v423
      %v620 = vpop.f32.mrf.mxu0
      %v621 = vadd.f32 %v371, %v620
      %v622 = vpop.f32.mrf.mxu0
      %623 = vmatprep.mubr.f32.mxu0 0.0
      %624 = vmatmul.mubr.f32.gmra.mxu0 %v426
      %v625 = vpop.f32.mrf.mxu0
      %v626 = vadd.f32 %v371, %v625
      %v627 = vpop.f32.mrf.mxu0
      %628 = vmatprep.mubr.f32.mxu0 0.0
      %629 = vmatmul.mubr.f32.gmra.mxu0 %v429
      %v630 = vpop.f32.mrf.mxu0
      %v631 = vadd.f32 %v371, %v630
      %v632 = vpop.f32.mrf.mxu0
      %633 = vmatprep.mubr.f32.mxu0 0.0
      %634 = vmatmul.mubr.f32.gmra.mxu0 %v432
      %v635 = vpop.f32.mrf.mxu0
      %v636 = vadd.f32 %v371, %v635
      %v637 = vpop.f32.mrf.mxu0
      %638 = vmatprep.mubr.f32.mxu0 0.0
      %639 = vmatmul.mubr.f32.gmra.mxu0 %v435
      %v640 = vpop.f32.mrf.mxu0
      %v641 = vadd.f32 %v371, %v640
      %v642 = vpop.f32.mrf.mxu0
      %643 = vmatprep.mubr.f32.mxu0 0.0
      %644 = vmatmul.mubr.f32.gmra.mxu0 %v438
      %v645 = vpop.f32.mrf.mxu0
      %v646 = vadd.f32 %v371, %v645
      %v647 = vpop.f32.mrf.mxu0
      %648 = vmatprep.mubr.f32.mxu0 0.0
      %649 = vmatmul.mubr.f32.gmra.mxu0 %v441
      %v650 = vpop.f32.mrf.mxu0
      %v651 = vadd.f32 %v371, %v650
      %v652 = vpop.f32.mrf.mxu0
      %653 = vmatprep.mubr.f32.mxu0 0.0
      %654 = vmatmul.mubr.f32.gmra.mxu0 %v444
      %v655 = vpop.f32.mrf.mxu0
      %v656 = vadd.f32 %v371, %v655
      %v657 = vpop.f32.mrf.mxu0
      %658 = vmatprep.mubr.f32.mxu0 0.0
      %659 = vmatmul.mubr.f32.gmra.mxu0 %v447
      %v660 = vpop.f32.mrf.mxu0
      %v661 = vadd.f32 %v371, %v660
      %v662 = vpop.f32.mrf.mxu0
      %663 = vmatprep.mubr.f32.mxu0 0.0
      %664 = vmatmul.mubr.f32.gmra.mxu0 %v450
      %v665 = vpop.f32.mrf.mxu0
      %v666 = vadd.f32 %v371, %v665
      %v667 = vpop.f32.mrf.mxu0
      %668 = vmatprep.mubr.f32.mxu0 0.0
      %669 = vmatmul.mubr.f32.gmra.mxu0 %v453
      %v670 = vpop.f32.mrf.mxu0
      %v671 = vadd.f32 %v371, %v670
      %v672 = vpop.f32.mrf.mxu0
      %673 = vmatprep.mubr.f32.mxu0 0.0
      %674 = vmatmul.mubr.f32.gmra.mxu0 %v456
      %v675 = vpop.f32.mrf.mxu0
      %v676 = vadd.f32 %v371, %v675
      %v677 = vpop.f32.mrf.mxu0
      %678 = vmatprep.mubr.f32.mxu0 0.0
      %679 = vmatmul.mubr.f32.gmra.mxu0 %v459
      %v680 = vpop.f32.mrf.mxu0
      %v681 = vadd.f32 %v371, %v680
      %v682 = vpop.f32.mrf.mxu0
      %683 = vmatprep.mubr.f32.mxu0 0.0
      %684 = vmatmul.mubr.f32.gmra.mxu0 %v462
      %v685 = vpop.f32.mrf.mxu0
      %v686 = vadd.f32 %v371, %v685
      %v687 = vpop.f32.mrf.mxu0
      %688 = vmatprep.mubr.f32.mxu0 0.0
      %689 = vmatmul.mubr.f32.gmra.mxu0 %v465
      %v690 = vpop.f32.mrf.mxu0
      %v691 = vadd.f32 %v371, %v690
      %v692 = vpop.f32.mrf.mxu0
      %693 = vmatprep.mubr.f32.mxu0 0.0
      %694 = vmatmul.mubr.f32.gmra.mxu0 %v468
      %v695 = vpop.f32.mrf.mxu0
      %v696 = vadd.f32 %v371, %v695
      %v697 = vpop.f32.mrf.mxu0
      %698 = vdwg.mxu0
      %v699 = vmax.f32 %v541, 0.0
      %v700 = vmax.f32 %v546, 0.0
      %v701 = vmax.f32 %v551, 0.0
      %v702 = vmax.f32 %v556, 0.0
      %v703 = vmax.f32 %v561, 0.0
      %v704 = vmax.f32 %v566, 0.0
      %v705 = vmax.f32 %v571, 0.0
      %v706 = vmax.f32 %v576, 0.0
      %v707 = vmax.f32 %v581, 0.0
      %v708 = vmax.f32 %v586, 0.0
      %v709 = vmax.f32 %v591, 0.0
      %v710 = vmax.f32 %v596, 0.0
      %v711 = vmax.f32 %v601, 0.0
      %v712 = vmax.f32 %v606, 0.0
      %v713 = vmax.f32 %v611, 0.0
      %v714 = vmax.f32 %v616, 0.0
      %v715 = vmax.f32 %v621, 0.0
      %v716 = vmax.f32 %v626, 0.0
      %v717 = vmax.f32 %v631, 0.0
      %v718 = vmax.f32 %v636, 0.0
      %v719 = vmax.f32 %v641, 0.0
      %v720 = vmax.f32 %v646, 0.0
      %v721 = vmax.f32 %v651, 0.0
      %v722 = vmax.f32 %v656, 0.0
      %v723 = vmax.f32 %v661, 0.0
      %v724 = vmax.f32 %v666, 0.0
      %v725 = vmax.f32 %v671, 0.0
      %v726 = vmax.f32 %v676, 0.0
      %v727 = vmax.f32 %v681, 0.0
      %v728 = vmax.f32 %v686, 0.0
      %v729 = vmax.f32 %v691, 0.0
      %v730 = vmax.f32 %v696, 0.0
      %731 = vst.msk [vmem:[#allocation2] sm:$0xff] %vm373, 0.0
      %732 = vst.msk [vmem:[#allocation2 + $0x8] sm:$0xff] %vm373, 0.0
      %733 = vst.msk [vmem:[#allocation2 + $0x10] sm:$0xff] %vm373, 0.0
      %734 = vst.msk [vmem:[#allocation2 + $0x118] sm:$0xff] %vm373, 0.0
      %735 = vst.msk [vmem:[#allocation2 + $0x120] sm:$0xff] %vm373, 0.0
      %736 = vst.msk [vmem:[#allocation2 + $0x128] sm:$0xff] %vm373, 0.0
      %737 = vst.msk [vmem:[#allocation2 + $0x18] sm:$0xff] %vm373, %v699
      %738 = vst.msk [vmem:[#allocation2 + $0x20] sm:$0xff] %vm373, %v700
      %739 = vst.msk [vmem:[#allocation2 + $0x28] sm:$0xff] %vm373, %v701
      %740 = vst.msk [vmem:[#allocation2 + $0x30] sm:$0xff] %vm373, %v702
      %741 = vst.msk [vmem:[#allocation2 + $0x38] sm:$0xff] %vm373, %v703
      %742 = vst.msk [vmem:[#allocation2 + $0x40] sm:$0xff] %vm373, %v704
      %743 = vst.msk [vmem:[#allocation2 + $0x48] sm:$0xff] %vm373, %v705
      %744 = vst.msk [vmem:[#allocation2 + $0x50] sm:$0xff] %vm373, %v706
      %745 = vst.msk [vmem:[#allocation2 + $0x58] sm:$0xff] %vm373, %v707
      %746 = vst.msk [vmem:[#allocation2 + $0x60] sm:$0xff] %vm373, %v708
      %747 = vst.msk [vmem:[#allocation2 + $0x68] sm:$0xff] %vm373, %v709
      %748 = vst.msk [vmem:[#allocation2 + $0x70] sm:$0xff] %vm373, %v710
      %749 = vst.msk [vmem:[#allocation2 + $0x78] sm:$0xff] %vm373, %v711
      %750 = vst.msk [vmem:[#allocation2 + $0x80] sm:$0xff] %vm373, %v712
      %751 = vst.msk [vmem:[#allocation2 + $0x88] sm:$0xff] %vm373, %v713
      %752 = vst.msk [vmem:[#allocation2 + $0x90] sm:$0xff] %vm373, %v714
      %753 = vst.msk [vmem:[#allocation2 + $0x98] sm:$0xff] %vm373, %v715
      %754 = vst.msk [vmem:[#allocation2 + $0xa0] sm:$0xff] %vm373, %v716
      %755 = vst.msk [vmem:[#allocation2 + $0xa8] sm:$0xff] %vm373, %v717
      %756 = vst.msk [vmem:[#allocation2 + $0xb0] sm:$0xff] %vm373, %v718
      %757 = vst.msk [vmem:[#allocation2 + $0xb8] sm:$0xff] %vm373, %v719
      %758 = vst.msk [vmem:[#allocation2 + $0xc0] sm:$0xff] %vm373, %v720
      %759 = vst.msk [vmem:[#allocation2 + $0xc8] sm:$0xff] %vm373, %v721
      %760 = vst.msk [vmem:[#allocation2 + $0xd0] sm:$0xff] %vm373, %v722
      %761 = vst.msk [vmem:[#allocation2 + $0xd8] sm:$0xff] %vm373, %v723
      %762 = vst.msk [vmem:[#allocation2 + $0xe0] sm:$0xff] %vm373, %v724
      %763 = vst.msk [vmem:[#allocation2 + $0xe8] sm:$0xff] %vm373, %v725
      %764 = vst.msk [vmem:[#allocation2 + $0xf0] sm:$0xff] %vm373, %v726
      %765 = vst.msk [vmem:[#allocation2 + $0xf8] sm:$0xff] %vm373, %v727
      %766 = vst.msk [vmem:[#allocation2 + $0x100] sm:$0xff] %vm373, %v728
      %767 = vst.msk [vmem:[#allocation2 + $0x108] sm:$0xff] %vm373, %v729
      %768 = vst.msk [vmem:[#allocation2 + $0x110] sm:$0xff] %vm373, %v730
      %v769 = vlaneseq
      %v770 = vshrl.u32 %v769, 7
      %v771 = vadd.s32 %v770, 8
      %v772 = vadd.s32 %v770, 16
      %v773 = vadd.s32 %v770, 24
      %v774 = vadd.s32 %v770, 32
      %v775 = vadd.s32 %v770, 40
      %v776 = vadd.s32 %v770, 48
      %v777 = vadd.s32 %v770, 56
      %v778 = vadd.s32 %v770, 64
      %v779 = vadd.s32 %v770, 72
      %v780 = vadd.s32 %v770, 80
      %v781 = vadd.s32 %v770, 88
      %v782 = vadd.s32 %v770, 96
      %v783 = vadd.s32 %v770, 104
      %v784 = vadd.s32 %v770, 112
      %v785 = vadd.s32 %v770, 120
      %v786 = vadd.s32 %v770, 128
      %v787 = vadd.s32 %v770, 136
      %v788 = vadd.s32 %v770, 144
      %v789 = vadd.s32 %v770, 152
      %v790 = vadd.s32 %v770, 160
      %v791 = vadd.s32 %v770, 168
      %v792 = vadd.s32 %v770, 176
      %v793 = vadd.s32 %v770, 184
      %v794 = vadd.s32 %v770, 192
      %v795 = vadd.s32 %v770, 200
      %v796 = vadd.s32 %v770, 208
      %v797 = vadd.s32 %v770, 216
      %v798 = vadd.s32 %v770, 224
      %v799 = vadd.s32 %v770, 232
      %v800 = vadd.s32 %v770, 240
      %v801 = vadd.s32 %v770, 248
      %v802 = vand.u32 %v770, 15
      %v803 = vand.u32 %v771, 15
      %v804 = vand.u32 %v772, 15
      %v805 = vand.u32 %v773, 15
      %v806 = vand.u32 %v774, 15
      %v807 = vand.u32 %v775, 15
      %v808 = vand.u32 %v776, 15
      %v809 = vand.u32 %v777, 15
      %v810 = vand.u32 %v778, 15
      %v811 = vand.u32 %v779, 15
      %v812 = vand.u32 %v780, 15
      %v813 = vand.u32 %v781, 15
      %v814 = vand.u32 %v782, 15
      %v815 = vand.u32 %v783, 15
      %v816 = vand.u32 %v784, 15
      %v817 = vand.u32 %v785, 15
      %v818 = vand.u32 %v786, 15
      %v819 = vand.u32 %v787, 15
      %v820 = vand.u32 %v788, 15
      %v821 = vand.u32 %v789, 15
      %v822 = vand.u32 %v790, 15
      %v823 = vand.u32 %v791, 15
      %v824 = vand.u32 %v792, 15
      %v825 = vand.u32 %v793, 15
      %v826 = vand.u32 %v794, 15
      %v827 = vand.u32 %v795, 15
      %v828 = vand.u32 %v796, 15
      %v829 = vand.u32 %v797, 15
      %v830 = vand.u32 %v798, 15
      %v831 = vand.u32 %v799, 15
      %v832 = vand.u32 %v800, 15
      %v833 = vand.u32 %v801, 15
      %vm834 = vcmp.gt.s32.totalorder %v802, 0
      %vm835 = vcmp.gt.s32.totalorder %v803, 0
      %vm836 = vcmp.gt.s32.totalorder %v804, 0
      %vm837 = vcmp.gt.s32.totalorder %v805, 0
      %vm838 = vcmp.gt.s32.totalorder %v806, 0
      %vm839 = vcmp.gt.s32.totalorder %v807, 0
      %vm840 = vcmp.gt.s32.totalorder %v808, 0
      %vm841 = vcmp.gt.s32.totalorder %v809, 0
      %vm842 = vcmp.gt.s32.totalorder %v810, 0
      %vm843 = vcmp.gt.s32.totalorder %v811, 0
      %vm844 = vcmp.gt.s32.totalorder %v812, 0
      %vm845 = vcmp.gt.s32.totalorder %v813, 0
      %vm846 = vcmp.gt.s32.totalorder %v814, 0
      %vm847 = vcmp.gt.s32.totalorder %v815, 0
      %vm848 = vcmp.gt.s32.totalorder %v816, 0
      %vm849 = vcmp.gt.s32.totalorder %v817, 0
      %vm850 = vcmp.gt.s32.totalorder %v818, 0
      %vm851 = vcmp.gt.s32.totalorder %v819, 0
      %vm852 = vcmp.gt.s32.totalorder %v820, 0
      %vm853 = vcmp.gt.s32.totalorder %v821, 0
      %vm854 = vcmp.gt.s32.totalorder %v822, 0
      %vm855 = vcmp.gt.s32.totalorder %v823, 0
      %vm856 = vcmp.gt.s32.totalorder %v824, 0
      %vm857 = vcmp.gt.s32.totalorder %v825, 0
      %vm858 = vcmp.gt.s32.totalorder %v826, 0
      %vm859 = vcmp.gt.s32.totalorder %v827, 0
      %vm860 = vcmp.gt.s32.totalorder %v828, 0
      %vm861 = vcmp.gt.s32.totalorder %v829, 0
      %vm862 = vcmp.gt.s32.totalorder %v830, 0
      %vm863 = vcmp.gt.s32.totalorder %v831, 0
      %vm864 = vcmp.gt.s32.totalorder %v832, 0
      %vm865 = vcmp.gt.s32.totalorder %v833, 0
      %vm866 = vcmp.lt.s32.totalorder %v802, 15
      %vm867 = vcmp.lt.s32.totalorder %v803, 15
      %vm868 = vcmp.lt.s32.totalorder %v804, 15
      %vm869 = vcmp.lt.s32.totalorder %v805, 15
      %vm870 = vcmp.lt.s32.totalorder %v806, 15
      %vm871 = vcmp.lt.s32.totalorder %v807, 15
      %vm872 = vcmp.lt.s32.totalorder %v808, 15
      %vm873 = vcmp.lt.s32.totalorder %v809, 15
      %vm874 = vcmp.lt.s32.totalorder %v810, 15
      %vm875 = vcmp.lt.s32.totalorder %v811, 15
      %vm876 = vcmp.lt.s32.totalorder %v812, 15
      %vm877 = vcmp.lt.s32.totalorder %v813, 15
      %vm878 = vcmp.lt.s32.totalorder %v814, 15
      %vm879 = vcmp.lt.s32.totalorder %v815, 15
      %vm880 = vcmp.lt.s32.totalorder %v816, 15
      %vm881 = vcmp.lt.s32.totalorder %v817, 15
      %vm882 = vcmp.lt.s32.totalorder %v818, 15
      %vm883 = vcmp.lt.s32.totalorder %v819, 15
      %vm884 = vcmp.lt.s32.totalorder %v820, 15
      %vm885 = vcmp.lt.s32.totalorder %v821, 15
      %vm886 = vcmp.lt.s32.totalorder %v822, 15
      %vm887 = vcmp.lt.s32.totalorder %v823, 15
      %vm888 = vcmp.lt.s32.totalorder %v824, 15
      %vm889 = vcmp.lt.s32.totalorder %v825, 15
      %vm890 = vcmp.lt.s32.totalorder %v826, 15
      %vm891 = vcmp.lt.s32.totalorder %v827, 15
      %vm892 = vcmp.lt.s32.totalorder %v828, 15
      %vm893 = vcmp.lt.s32.totalorder %v829, 15
      %vm894 = vcmp.lt.s32.totalorder %v830, 15
      %vm895 = vcmp.lt.s32.totalorder %v831, 15
      %vm896 = vcmp.lt.s32.totalorder %v832, 15
      %vm897 = vcmp.lt.s32.totalorder %v833, 15
      %v898 = vld [vmem:[%s4] sm:$0x1]
      %v899 = vld [vmem:[#allocation2 + $0x7] sm:$0xff]
      %v900 = vld [vmem:[#allocation2 + $0xf] sm:$0xff]
      %v901 = vld [vmem:[#allocation2 + $0x17] sm:$0xff]
      %v902 = vld [vmem:[#allocation2 + $0x1f] sm:$0xff]
      %v903 = vld [vmem:[#allocation2 + $0x27] sm:$0xff]
      %v904 = vld [vmem:[#allocation2 + $0x2f] sm:$0xff]
      %v905 = vld [vmem:[#allocation2 + $0x37] sm:$0xff]
      %v906 = vld [vmem:[#allocation2 + $0x3f] sm:$0xff]
      %v907 = vld [vmem:[#allocation2 + $0x47] sm:$0xff]
      %v908 = vld [vmem:[#allocation2 + $0x4f] sm:$0xff]
      %v909 = vld [vmem:[#allocation2 + $0x57] sm:$0xff]
      %v910 = vld [vmem:[#allocation2 + $0x5f] sm:$0xff]
      %v911 = vld [vmem:[#allocation2 + $0x67] sm:$0xff]
      %v912 = vld [vmem:[#allocation2 + $0x6f] sm:$0xff]
      %v913 = vld [vmem:[#allocation2 + $0x77] sm:$0xff]
      %v914 = vld [vmem:[#allocation2 + $0x7f] sm:$0xff]
      %v915 = vld [vmem:[#allocation2 + $0x87] sm:$0xff]
      %v916 = vld [vmem:[#allocation2 + $0x8f] sm:$0xff]
      %v917 = vld [vmem:[#allocation2 + $0x97] sm:$0xff]
      %v918 = vld [vmem:[#allocation2 + $0x9f] sm:$0xff]
      %v919 = vld [vmem:[#allocation2 + $0xa7] sm:$0xff]
      %v920 = vld [vmem:[#allocation2 + $0xaf] sm:$0xff]
      %v921 = vld [vmem:[#allocation2 + $0xb7] sm:$0xff]
      %v922 = vld [vmem:[#allocation2 + $0xbf] sm:$0xff]
      %v923 = vld [vmem:[#allocation2 + $0xc7] sm:$0xff]
      %v924 = vld [vmem:[#allocation2 + $0xcf] sm:$0xff]
      %v925 = vld [vmem:[#allocation2 + $0xd7] sm:$0xff]
      %v926 = vld [vmem:[#allocation2 + $0xdf] sm:$0xff]
      %v927 = vld [vmem:[#allocation2 + $0xe7] sm:$0xff]
      %v928 = vld [vmem:[#allocation2 + $0xef] sm:$0xff]
      %v929 = vld [vmem:[#allocation2 + $0xf7] sm:$0xff]
      %v930 = vld [vmem:[#allocation2 + $0xff] sm:$0xff]
      %v931 = vsel %vm834, 1, 0
      %v932 = vsel %vm835, 1, 0
      %v933 = vsel %vm836, 1, 0
      %v934 = vsel %vm837, 1, 0
      %v935 = vsel %vm838, 1, 0
      %v936 = vsel %vm839, 1, 0
      %v937 = vsel %vm840, 1, 0
      %v938 = vsel %vm841, 1, 0
      %v939 = vsel %vm842, 1, 0
      %v940 = vsel %vm843, 1, 0
      %v941 = vsel %vm844, 1, 0
      %v942 = vsel %vm845, 1, 0
      %v943 = vsel %vm846, 1, 0
      %v944 = vsel %vm847, 1, 0
      %v945 = vsel %vm848, 1, 0
      %v946 = vsel %vm849, 1, 0
      %v947 = vsel %vm850, 1, 0
      %v948 = vsel %vm851, 1, 0
      %v949 = vsel %vm852, 1, 0
      %v950 = vsel %vm853, 1, 0
      %v951 = vsel %vm854, 1, 0
      %v952 = vsel %vm855, 1, 0
      %v953 = vsel %vm856, 1, 0
      %v954 = vsel %vm857, 1, 0
      %v955 = vsel %vm858, 1, 0
      %v956 = vsel %vm859, 1, 0
      %v957 = vsel %vm860, 1, 0
      %v958 = vsel %vm861, 1, 0
      %v959 = vsel %vm862, 1, 0
      %v960 = vsel %vm863, 1, 0
      %v961 = vsel %vm864, 1, 0
      %v962 = vsel %vm865, 1, 0
      %vm963 = vcmp.eq.s32.totalorder %v931, 1
      %vm964 = vcmp.eq.s32.totalorder %v932, 1
      %vm965 = vcmp.eq.s32.totalorder %v933, 1
      %vm966 = vcmp.eq.s32.totalorder %v934, 1
      %vm967 = vcmp.eq.s32.totalorder %v935, 1
      %vm968 = vcmp.eq.s32.totalorder %v936, 1
      %vm969 = vcmp.eq.s32.totalorder %v937, 1
      %vm970 = vcmp.eq.s32.totalorder %v938, 1
      %vm971 = vcmp.eq.s32.totalorder %v939, 1
      %vm972 = vcmp.eq.s32.totalorder %v940, 1
      %vm973 = vcmp.eq.s32.totalorder %v941, 1
      %vm974 = vcmp.eq.s32.totalorder %v942, 1
      %vm975 = vcmp.eq.s32.totalorder %v943, 1
      %vm976 = vcmp.eq.s32.totalorder %v944, 1
      %vm977 = vcmp.eq.s32.totalorder %v945, 1
      %vm978 = vcmp.eq.s32.totalorder %v946, 1
      %vm979 = vcmp.eq.s32.totalorder %v947, 1
      %vm980 = vcmp.eq.s32.totalorder %v948, 1
      %vm981 = vcmp.eq.s32.totalorder %v949, 1
      %vm982 = vcmp.eq.s32.totalorder %v950, 1
      %vm983 = vcmp.eq.s32.totalorder %v951, 1
      %vm984 = vcmp.eq.s32.totalorder %v952, 1
      %vm985 = vcmp.eq.s32.totalorder %v953, 1
      %vm986 = vcmp.eq.s32.totalorder %v954, 1
      %vm987 = vcmp.eq.s32.totalorder %v955, 1
      %vm988 = vcmp.eq.s32.totalorder %v956, 1
      %vm989 = vcmp.eq.s32.totalorder %v957, 1
      %vm990 = vcmp.eq.s32.totalorder %v958, 1
      %vm991 = vcmp.eq.s32.totalorder %v959, 1
      %vm992 = vcmp.eq.s32.totalorder %v960, 1
      %vm993 = vcmp.eq.s32.totalorder %v961, 1
      %vm994 = vcmp.eq.s32.totalorder %v962, 1
      %v995 = vsel %vm963, %v899, 0.0
      %v996 = vsel %vm964, %v900, 0.0
      %v997 = vsel %vm965, %v901, 0.0
      %v998 = vsel %vm966, %v902, 0.0
      %v999 = vsel %vm967, %v903, 0.0
      %v1000 = vsel %vm968, %v904, 0.0
      %v1001 = vsel %vm969, %v905, 0.0
      %v1002 = vsel %vm970, %v906, 0.0
      %v1003 = vsel %vm971, %v907, 0.0
      %v1004 = vsel %vm972, %v908, 0.0
      %v1005 = vsel %vm973, %v909, 0.0
      %v1006 = vsel %vm974, %v910, 0.0
      %v1007 = vsel %vm975, %v911, 0.0
      %v1008 = vsel %vm976, %v912, 0.0
      %v1009 = vsel %vm977, %v913, 0.0
      %v1010 = vsel %vm978, %v914, 0.0
      %v1011 = vsel %vm979, %v915, 0.0
      %v1012 = vsel %vm980, %v916, 0.0
      %v1013 = vsel %vm981, %v917, 0.0
      %v1014 = vsel %vm982, %v918, 0.0
      %v1015 = vsel %vm983, %v919, 0.0
      %v1016 = vsel %vm984, %v920, 0.0
      %v1017 = vsel %vm985, %v921, 0.0
      %v1018 = vsel %vm986, %v922, 0.0
      %v1019 = vsel %vm987, %v923, 0.0
      %v1020 = vsel %vm988, %v924, 0.0
      %v1021 = vsel %vm989, %v925, 0.0
      %v1022 = vsel %vm990, %v926, 0.0
      %v1023 = vsel %vm991, %v927, 0.0
      %v1024 = vsel %vm992, %v928, 0.0
      %v1025 = vsel %vm993, %v929, 0.0
      %v1026 = vsel %vm994, %v930, 0.0
      %v1027 = vld [vmem:[%s3] sm:$0xf]
      %v1029 = vsel %vm373, %v995, 0
      %v1032 = vsel %vm373, %v996, 0
      %v1035 = vsel %vm373, %v997, 0
      %v1038 = vsel %vm373, %v998, 0
      %v1041 = vsel %vm373, %v999, 0
      %v1044 = vsel %vm373, %v1000, 0
      %v1047 = vsel %vm373, %v1001, 0
      %v1050 = vsel %vm373, %v1002, 0
      %v1053 = vsel %vm373, %v1003, 0
      %v1056 = vsel %vm373, %v1004, 0
      %v1059 = vsel %vm373, %v1005, 0
      %v1062 = vsel %vm373, %v1006, 0
      %v1065 = vsel %vm373, %v1007, 0
      %v1068 = vsel %vm373, %v1008, 0
      %v1071 = vsel %vm373, %v1009, 0
      %v1074 = vsel %vm373, %v1010, 0
      %v1077 = vsel %vm373, %v1011, 0
      %v1080 = vsel %vm373, %v1012, 0
      %v1083 = vsel %vm373, %v1013, 0
      %v1086 = vsel %vm373, %v1014, 0
      %v1089 = vsel %vm373, %v1015, 0
      %v1092 = vsel %vm373, %v1016, 0
      %v1095 = vsel %vm373, %v1017, 0
      %v1098 = vsel %vm373, %v1018, 0
      %v1101 = vsel %vm373, %v1019, 0
      %v1104 = vsel %vm373, %v1020, 0
      %v1107 = vsel %vm373, %v1021, 0
      %v1110 = vsel %vm373, %v1022, 0
      %v1113 = vsel %vm373, %v1023, 0
      %v1116 = vsel %vm373, %v1024, 0
      %v1119 = vsel %vm373, %v1025, 0
      %v1122 = vsel %vm373, %v1026, 0
      %v1125 = vsel %vm470, %v1027, 0
      %1127 = vmatprep.subr.mxu0 0.0
      %1128 = vmatpush1.msra.mxu0 0.0
      %1129 = vmatprep.subr.mxu0 0.0
      %1130 = vmatpush1.msra.mxu0 0.0
      %1131 = vmatprep.subr.mxu0 0.0
      %1132 = vmatpush1.msra.mxu0 0.0
      %1133 = vmatprep.subr.mxu0 0.0
      %1134 = vmatpush1.msra.mxu0 0.0
      %1135 = vmatprep.subr.mxu0 0.0
      %1136 = vmatpush1.msra.mxu0 0.0
      %1137 = vmatprep.subr.mxu0 0.0
      %1138 = vmatpush1.msra.mxu0 0.0
      %1139 = vmatprep.subr.mxu0 0.0
      %1140 = vmatpush1.msra.mxu0 0.0
      %1141 = vmatprep.subr.mxu0 0.0
      %1142 = vmatpush1.msra.mxu0 0.0
      %1143 = vmatprep.subr.mxu0 0.0
      %1144 = vmatpush1.msra.mxu0 0.0
      %1145 = vmatprep.subr.mxu0 0.0
      %1146 = vmatpush1.msra.mxu0 0.0
      %1147 = vmatprep.subr.mxu0 0.0
      %1148 = vmatpush1.msra.mxu0 0.0
      %1149 = vmatprep.subr.mxu0 0.0
      %1150 = vmatpush1.msra.mxu0 0.0
      %1151 = vmatprep.subr.mxu0 0.0
      %1152 = vmatpush1.msra.mxu0 0.0
      %1153 = vmatprep.subr.mxu0 0.0
      %1154 = vmatpush1.msra.mxu0 0.0
      %1155 = vmatprep.subr.mxu0 0.0
      %1156 = vmatpush1.msra.mxu0 0.0
      %1157 = vmatprep.subr.mxu0 0.0
      %1158 = vmatpush1.msra.mxu0 %v1125
      %1159 = vmatprep.subr.mxu0 0.0
      %1160 = vmatpush2.msra.mxu0 0.0
      %1161 = vmatprep.subr.mxu0 0.0
      %1162 = vmatpush2.msra.mxu0 0.0
      %1163 = vmatprep.subr.mxu0 0.0
      %1164 = vmatpush2.msra.mxu0 0.0
      %1165 = vmatprep.subr.mxu0 0.0
      %1166 = vmatpush2.msra.mxu0 0.0
      %1167 = vmatprep.subr.mxu0 0.0
      %1168 = vmatpush2.msra.mxu0 0.0
      %1169 = vmatprep.subr.mxu0 0.0
      %1170 = vmatpush2.msra.mxu0 0.0
      %1171 = vmatprep.subr.mxu0 0.0
      %1172 = vmatpush2.msra.mxu0 0.0
      %1173 = vmatprep.subr.mxu0 0.0
      %1174 = vmatpush2.msra.mxu0 0.0
      %1175 = vmatprep.subr.mxu0 0.0
      %1176 = vmatpush2.msra.mxu0 0.0
      %1177 = vmatprep.subr.mxu0 0.0
      %1178 = vmatpush2.msra.mxu0 0.0
      %1179 = vmatprep.subr.mxu0 0.0
      %1180 = vmatpush2.msra.mxu0 0.0
      %1181 = vmatprep.subr.mxu0 0.0
      %1182 = vmatpush2.msra.mxu0 0.0
      %1183 = vmatprep.subr.mxu0 0.0
      %1184 = vmatpush2.msra.mxu0 0.0
      %1185 = vmatprep.subr.mxu0 0.0
      %1186 = vmatpush2.msra.mxu0 0.0
      %1187 = vmatprep.subr.mxu0 0.0
      %1188 = vmatpush2.msra.mxu0 0.0
      %1189 = vmatprep.subr.mxu0 0.0
      %1190 = vmatpush2.msra.mxu0 0.0
      %1191 = vmatprep.mubr.f32.mxu0 0.0
      %1192 = vmatmul.mubr.f32.gmra.mxu0 %v1029
      %v1193 = vpop.f32.mrf.mxu0
      %v1194 = vadd.f32 0.0, %v1193
      %v1195 = vpop.f32.mrf.mxu0
      %1196 = vmatprep.mubr.f32.mxu0 0.0
      %1197 = vmatmul.mubr.f32.gmra.mxu0 %v1032
      %v1198 = vpop.f32.mrf.mxu0
      %v1199 = vadd.f32 0.0, %v1198
      %v1200 = vpop.f32.mrf.mxu0
      %1201 = vmatprep.mubr.f32.mxu0 0.0
      %1202 = vmatmul.mubr.f32.gmra.mxu0 %v1035
      %v1203 = vpop.f32.mrf.mxu0
      %v1204 = vadd.f32 0.0, %v1203
      %v1205 = vpop.f32.mrf.mxu0
      %1206 = vmatprep.mubr.f32.mxu0 0.0
      %1207 = vmatmul.mubr.f32.gmra.mxu0 %v1038
      %v1208 = vpop.f32.mrf.mxu0
      %v1209 = vadd.f32 0.0, %v1208
      %v1210 = vpop.f32.mrf.mxu0
      %1211 = vmatprep.mubr.f32.mxu0 0.0
      %1212 = vmatmul.mubr.f32.gmra.mxu0 %v1041
      %v1213 = vpop.f32.mrf.mxu0
      %v1214 = vadd.f32 0.0, %v1213
      %v1215 = vpop.f32.mrf.mxu0
      %1216 = vmatprep.mubr.f32.mxu0 0.0
      %1217 = vmatmul.mubr.f32.gmra.mxu0 %v1044
      %v1218 = vpop.f32.mrf.mxu0
      %v1219 = vadd.f32 0.0, %v1218
      %v1220 = vpop.f32.mrf.mxu0
      %1221 = vmatprep.mubr.f32.mxu0 0.0
      %1222 = vmatmul.mubr.f32.gmra.mxu0 %v1047
      %v1223 = vpop.f32.mrf.mxu0
      %v1224 = vadd.f32 0.0, %v1223
      %v1225 = vpop.f32.mrf.mxu0
      %1226 = vmatprep.mubr.f32.mxu0 0.0
      %1227 = vmatmul.mubr.f32.gmra.mxu0 %v1050
      %v1228 = vpop.f32.mrf.mxu0
      %v1229 = vadd.f32 0.0, %v1228
      %v1230 = vpop.f32.mrf.mxu0
      %1231 = vmatprep.mubr.f32.mxu0 0.0
      %1232 = vmatmul.mubr.f32.gmra.mxu0 %v1053
      %v1233 = vpop.f32.mrf.mxu0
      %v1234 = vadd.f32 0.0, %v1233
      %v1235 = vpop.f32.mrf.mxu0
      %1236 = vmatprep.mubr.f32.mxu0 0.0
      %1237 = vmatmul.mubr.f32.gmra.mxu0 %v1056
      %v1238 = vpop.f32.mrf.mxu0
      %v1239 = vadd.f32 0.0, %v1238
      %v1240 = vpop.f32.mrf.mxu0
      %1241 = vmatprep.mubr.f32.mxu0 0.0
      %1242 = vmatmul.mubr.f32.gmra.mxu0 %v1059
      %v1243 = vpop.f32.mrf.mxu0
      %v1244 = vadd.f32 0.0, %v1243
      %v1245 = vpop.f32.mrf.mxu0
      %1246 = vmatprep.mubr.f32.mxu0 0.0
      %1247 = vmatmul.mubr.f32.gmra.mxu0 %v1062
      %v1248 = vpop.f32.mrf.mxu0
      %v1249 = vadd.f32 0.0, %v1248
      %v1250 = vpop.f32.mrf.mxu0
      %1251 = vmatprep.mubr.f32.mxu0 0.0
      %1252 = vmatmul.mubr.f32.gmra.mxu0 %v1065
      %v1253 = vpop.f32.mrf.mxu0
      %v1254 = vadd.f32 0.0, %v1253
      %v1255 = vpop.f32.mrf.mxu0
      %1256 = vmatprep.mubr.f32.mxu0 0.0
      %1257 = vmatmul.mubr.f32.gmra.mxu0 %v1068
      %v1258 = vpop.f32.mrf.mxu0
      %v1259 = vadd.f32 0.0, %v1258
      %v1260 = vpop.f32.mrf.mxu0
      %1261 = vmatprep.mubr.f32.mxu0 0.0
      %1262 = vmatmul.mubr.f32.gmra.mxu0 %v1071
      %v1263 = vpop.f32.mrf.mxu0
      %v1264 = vadd.f32 0.0, %v1263
      %v1265 = vpop.f32.mrf.mxu0
      %1266 = vmatprep.mubr.f32.mxu0 0.0
      %1267 = vmatmul.mubr.f32.gmra.mxu0 %v1074
      %v1268 = vpop.f32.mrf.mxu0
      %v1269 = vadd.f32 0.0, %v1268
      %v1270 = vpop.f32.mrf.mxu0
      %1271 = vmatprep.mubr.f32.mxu0 0.0
      %1272 = vmatmul.mubr.f32.gmra.mxu0 %v1077
      %v1273 = vpop.f32.mrf.mxu0
      %v1274 = vadd.f32 0.0, %v1273
      %v1275 = vpop.f32.mrf.mxu0
      %1276 = vmatprep.mubr.f32.mxu0 0.0
      %1277 = vmatmul.mubr.f32.gmra.mxu0 %v1080
      %v1278 = vpop.f32.mrf.mxu0
      %v1279 = vadd.f32 0.0, %v1278
      %v1280 = vpop.f32.mrf.mxu0
      %1281 = vmatprep.mubr.f32.mxu0 0.0
      %1282 = vmatmul.mubr.f32.gmra.mxu0 %v1083
      %v1283 = vpop.f32.mrf.mxu0
      %v1284 = vadd.f32 0.0, %v1283
      %v1285 = vpop.f32.mrf.mxu0
      %1286 = vmatprep.mubr.f32.mxu0 0.0
      %1287 = vmatmul.mubr.f32.gmra.mxu0 %v1086
      %v1288 = vpop.f32.mrf.mxu0
      %v1289 = vadd.f32 0.0, %v1288
      %v1290 = vpop.f32.mrf.mxu0
      %1291 = vmatprep.mubr.f32.mxu0 0.0
      %1292 = vmatmul.mubr.f32.gmra.mxu0 %v1089
      %v1293 = vpop.f32.mrf.mxu0
      %v1294 = vadd.f32 0.0, %v1293
      %v1295 = vpop.f32.mrf.mxu0
      %1296 = vmatprep.mubr.f32.mxu0 0.0
      %1297 = vmatmul.mubr.f32.gmra.mxu0 %v1092
      %v1298 = vpop.f32.mrf.mxu0
      %v1299 = vadd.f32 0.0, %v1298
      %v1300 = vpop.f32.mrf.mxu0
      %1301 = vmatprep.mubr.f32.mxu0 0.0
      %1302 = vmatmul.mubr.f32.gmra.mxu0 %v1095
      %v1303 = vpop.f32.mrf.mxu0
      %v1304 = vadd.f32 0.0, %v1303
      %v1305 = vpop.f32.mrf.mxu0
      %1306 = vmatprep.mubr.f32.mxu0 0.0
      %1307 = vmatmul.mubr.f32.gmra.mxu0 %v1098
      %v1308 = vpop.f32.mrf.mxu0
      %v1309 = vadd.f32 0.0, %v1308
      %v1310 = vpop.f32.mrf.mxu0
      %1311 = vmatprep.mubr.f32.mxu0 0.0
      %1312 = vmatmul.mubr.f32.gmra.mxu0 %v1101
      %v1313 = vpop.f32.mrf.mxu0
      %v1314 = vadd.f32 0.0, %v1313
      %v1315 = vpop.f32.mrf.mxu0
      %1316 = vmatprep.mubr.f32.mxu0 0.0
      %1317 = vmatmul.mubr.f32.gmra.mxu0 %v1104
      %v1318 = vpop.f32.mrf.mxu0
      %v1319 = vadd.f32 0.0, %v1318
      %v1320 = vpop.f32.mrf.mxu0
      %1321 = vmatprep.mubr.f32.mxu0 0.0
      %1322 = vmatmul.mubr.f32.gmra.mxu0 %v1107
      %v1323 = vpop.f32.mrf.mxu0
      %v1324 = vadd.f32 0.0, %v1323
      %v1325 = vpop.f32.mrf.mxu0
      %1326 = vmatprep.mubr.f32.mxu0 0.0
      %1327 = vmatmul.mubr.f32.gmra.mxu0 %v1110
      %v1328 = vpop.f32.mrf.mxu0
      %v1329 = vadd.f32 0.0, %v1328
      %v1330 = vpop.f32.mrf.mxu0
      %1331 = vmatprep.mubr.f32.mxu0 0.0
      %1332 = vmatmul.mubr.f32.gmra.mxu0 %v1113
      %v1333 = vpop.f32.mrf.mxu0
      %v1334 = vadd.f32 0.0, %v1333
      %v1335 = vpop.f32.mrf.mxu0
      %1336 = vmatprep.mubr.f32.mxu0 0.0
      %1337 = vmatmul.mubr.f32.gmra.mxu0 %v1116
      %v1338 = vpop.f32.mrf.mxu0
      %v1339 = vadd.f32 0.0, %v1338
      %v1340 = vpop.f32.mrf.mxu0
      %1341 = vmatprep.mubr.f32.mxu0 0.0
      %1342 = vmatmul.mubr.f32.gmra.mxu0 %v1119
      %v1343 = vpop.f32.mrf.mxu0
      %v1344 = vadd.f32 0.0, %v1343
      %v1345 = vpop.f32.mrf.mxu0
      %1346 = vmatprep.mubr.f32.mxu0 0.0
      %1347 = vmatmul.mubr.f32.gmra.mxu0 %v1122
      %v1348 = vpop.f32.mrf.mxu0
      %v1349 = vadd.f32 0.0, %v1348
      %v1350 = vpop.f32.mrf.mxu0
      %1351 = vdwg.mxu0
      %v1353 = vlaneseq
      %v1354 = vshrl.u32 %v1353, 7
      %v1355 = vsub.s32 0, %v1354
      %v1356 = vrot.slane %v898, %v1355
      %v1358 = vadd.f32 %v1356, %v1194
      %v1359 = vadd.f32 %v1356, %v1199
      %v1360 = vadd.f32 %v1356, %v1204
      %v1361 = vadd.f32 %v1356, %v1209
      %v1362 = vadd.f32 %v1356, %v1214
      %v1363 = vadd.f32 %v1356, %v1219
      %v1364 = vadd.f32 %v1356, %v1224
      %v1365 = vadd.f32 %v1356, %v1229
      %v1366 = vadd.f32 %v1356, %v1234
      %v1367 = vadd.f32 %v1356, %v1239
      %v1368 = vadd.f32 %v1356, %v1244
      %v1369 = vadd.f32 %v1356, %v1249
      %v1370 = vadd.f32 %v1356, %v1254
      %v1371 = vadd.f32 %v1356, %v1259
      %v1372 = vadd.f32 %v1356, %v1264
      %v1373 = vadd.f32 %v1356, %v1269
      %v1374 = vadd.f32 %v1356, %v1274
      %v1375 = vadd.f32 %v1356, %v1279
      %v1376 = vadd.f32 %v1356, %v1284
      %v1377 = vadd.f32 %v1356, %v1289
      %v1378 = vadd.f32 %v1356, %v1294
      %v1379 = vadd.f32 %v1356, %v1299
      %v1380 = vadd.f32 %v1356, %v1304
      %v1381 = vadd.f32 %v1356, %v1309
      %v1382 = vadd.f32 %v1356, %v1314
      %v1383 = vadd.f32 %v1356, %v1319
      %v1384 = vadd.f32 %v1356, %v1324
      %v1385 = vadd.f32 %v1356, %v1329
      %v1386 = vadd.f32 %v1356, %v1334
      %v1387 = vadd.f32 %v1356, %v1339
      %v1388 = vadd.f32 %v1356, %v1344
      %v1389 = vadd.f32 %v1356, %v1349
      %v1390 = vld [vmem:[#allocation2 + $0x8] sm:$0xff]
      %v1391 = vld [vmem:[#allocation2 + $0x10] sm:$0xff]
      %v1392 = vld [vmem:[#allocation2 + $0x18] sm:$0xff]
      %v1393 = vld [vmem:[#allocation2 + $0x20] sm:$0xff]
      %v1394 = vld [vmem:[#allocation2 + $0x28] sm:$0xff]
      %v1395 = vld [vmem:[#allocation2 + $0x30] sm:$0xff]
      %v1396 = vld [vmem:[#allocation2 + $0x38] sm:$0xff]
      %v1397 = vld [vmem:[#allocation2 + $0x40] sm:$0xff]
      %v1398 = vld [vmem:[#allocation2 + $0x48] sm:$0xff]
      %v1399 = vld [vmem:[#allocation2 + $0x50] sm:$0xff]
      %v1400 = vld [vmem:[#allocation2 + $0x58] sm:$0xff]
      %v1401 = vld [vmem:[#allocation2 + $0x60] sm:$0xff]
      %v1402 = vld [vmem:[#allocation2 + $0x68] sm:$0xff]
      %v1403 = vld [vmem:[#allocation2 + $0x70] sm:$0xff]
      %v1404 = vld [vmem:[#allocation2 + $0x78] sm:$0xff]
      %v1405 = vld [vmem:[#allocation2 + $0x80] sm:$0xff]
      %v1406 = vld [vmem:[#allocation2 + $0x88] sm:$0xff]
      %v1407 = vld [vmem:[#allocation2 + $0x90] sm:$0xff]
      %v1408 = vld [vmem:[#allocation2 + $0x98] sm:$0xff]
      %v1409 = vld [vmem:[#allocation2 + $0xa0] sm:$0xff]
      %v1410 = vld [vmem:[#allocation2 + $0xa8] sm:$0xff]
      %v1411 = vld [vmem:[#allocation2 + $0xb0] sm:$0xff]
      %v1412 = vld [vmem:[#allocation2 + $0xb8] sm:$0xff]
      %v1413 = vld [vmem:[#allocation2 + $0xc0] sm:$0xff]
      %v1414 = vld [vmem:[#allocation2 + $0xc8] sm:$0xff]
      %v1415 = vld [vmem:[#allocation2 + $0xd0] sm:$0xff]
      %v1416 = vld [vmem:[#allocation2 + $0xd8] sm:$0xff]
      %v1417 = vld [vmem:[#allocation2 + $0xe0] sm:$0xff]
      %v1418 = vld [vmem:[#allocation2 + $0xe8] sm:$0xff]
      %v1419 = vld [vmem:[#allocation2 + $0xf0] sm:$0xff]
      %v1420 = vld [vmem:[#allocation2 + $0xf8] sm:$0xff]
      %v1421 = vld [vmem:[#allocation2 + $0x100] sm:$0xff]
      %s1422 = scalar_lea.vmem %s3, 4
      %v1423 = vld [vmem:[%s1422] sm:$0xf]
      %v1425 = vsel %vm373, %v1390, 0
      %v1428 = vsel %vm373, %v1391, 0
      %v1431 = vsel %vm373, %v1392, 0
      %v1434 = vsel %vm373, %v1393, 0
      %v1437 = vsel %vm373, %v1394, 0
      %v1440 = vsel %vm373, %v1395, 0
      %v1443 = vsel %vm373, %v1396, 0
      %v1446 = vsel %vm373, %v1397, 0
      %v1449 = vsel %vm373, %v1398, 0
      %v1452 = vsel %vm373, %v1399, 0
      %v1455 = vsel %vm373, %v1400, 0
      %v1458 = vsel %vm373, %v1401, 0
      %v1461 = vsel %vm373, %v1402, 0
      %v1464 = vsel %vm373, %v1403, 0
      %v1467 = vsel %vm373, %v1404, 0
      %v1470 = vsel %vm373, %v1405, 0
      %v1473 = vsel %vm373, %v1406, 0
      %v1476 = vsel %vm373, %v1407, 0
      %v1479 = vsel %vm373, %v1408, 0
      %v1482 = vsel %vm373, %v1409, 0
      %v1485 = vsel %vm373, %v1410, 0
      %v1488 = vsel %vm373, %v1411, 0
      %v1491 = vsel %vm373, %v1412, 0
      %v1494 = vsel %vm373, %v1413, 0
      %v1497 = vsel %vm373, %v1414, 0
      %v1500 = vsel %vm373, %v1415, 0
      %v1503 = vsel %vm373, %v1416, 0
      %v1506 = vsel %vm373, %v1417, 0
      %v1509 = vsel %vm373, %v1418, 0
      %v1512 = vsel %vm373, %v1419, 0
      %v1515 = vsel %vm373, %v1420, 0
      %v1518 = vsel %vm373, %v1421, 0
      %v1521 = vsel %vm470, %v1423, 0
      %1523 = vmatprep.subr.mxu0 0.0
      %1524 = vmatpush1.msra.mxu0 0.0
      %1525 = vmatprep.subr.mxu0 0.0
      %1526 = vmatpush1.msra.mxu0 0.0
      %1527 = vmatprep.subr.mxu0 0.0
      %1528 = vmatpush1.msra.mxu0 0.0
      %1529 = vmatprep.subr.mxu0 0.0
      %1530 = vmatpush1.msra.mxu0 0.0
      %1531 = vmatprep.subr.mxu0 0.0
      %1532 = vmatpush1.msra.mxu0 0.0
      %1533 = vmatprep.subr.mxu0 0.0
      %1534 = vmatpush1.msra.mxu0 0.0
      %1535 = vmatprep.subr.mxu0 0.0
      %1536 = vmatpush1.msra.mxu0 0.0
      %1537 = vmatprep.subr.mxu0 0.0
      %1538 = vmatpush1.msra.mxu0 0.0
      %1539 = vmatprep.subr.mxu0 0.0
      %1540 = vmatpush1.msra.mxu0 0.0
      %1541 = vmatprep.subr.mxu0 0.0
      %1542 = vmatpush1.msra.mxu0 0.0
      %1543 = vmatprep.subr.mxu0 0.0
      %1544 = vmatpush1.msra.mxu0 0.0
      %1545 = vmatprep.subr.mxu0 0.0
      %1546 = vmatpush1.msra.mxu0 0.0
      %1547 = vmatprep.subr.mxu0 0.0
      %1548 = vmatpush1.msra.mxu0 0.0
      %1549 = vmatprep.subr.mxu0 0.0
      %1550 = vmatpush1.msra.mxu0 0.0
      %1551 = vmatprep.subr.mxu0 0.0
      %1552 = vmatpush1.msra.mxu0 0.0
      %1553 = vmatprep.subr.mxu0 0.0
      %1554 = vmatpush1.msra.mxu0 %v1521
      %1555 = vmatprep.subr.mxu0 0.0
      %1556 = vmatpush2.msra.mxu0 0.0
      %1557 = vmatprep.subr.mxu0 0.0
      %1558 = vmatpush2.msra.mxu0 0.0
      %1559 = vmatprep.subr.mxu0 0.0
      %1560 = vmatpush2.msra.mxu0 0.0
      %1561 = vmatprep.subr.mxu0 0.0
      %1562 = vmatpush2.msra.mxu0 0.0
      %1563 = vmatprep.subr.mxu0 0.0
      %1564 = vmatpush2.msra.mxu0 0.0
      %1565 = vmatprep.subr.mxu0 0.0
      %1566 = vmatpush2.msra.mxu0 0.0
      %1567 = vmatprep.subr.mxu0 0.0
      %1568 = vmatpush2.msra.mxu0 0.0
      %1569 = vmatprep.subr.mxu0 0.0
      %1570 = vmatpush2.msra.mxu0 0.0
      %1571 = vmatprep.subr.mxu0 0.0
      %1572 = vmatpush2.msra.mxu0 0.0
      %1573 = vmatprep.subr.mxu0 0.0
      %1574 = vmatpush2.msra.mxu0 0.0
      %1575 = vmatprep.subr.mxu0 0.0
      %1576 = vmatpush2.msra.mxu0 0.0
      %1577 = vmatprep.subr.mxu0 0.0
      %1578 = vmatpush2.msra.mxu0 0.0
      %1579 = vmatprep.subr.mxu0 0.0
      %1580 = vmatpush2.msra.mxu0 0.0
      %1581 = vmatprep.subr.mxu0 0.0
      %1582 = vmatpush2.msra.mxu0 0.0
      %1583 = vmatprep.subr.mxu0 0.0
      %1584 = vmatpush2.msra.mxu0 0.0
      %1585 = vmatprep.subr.mxu0 0.0
      %1586 = vmatpush2.msra.mxu0 0.0
      %1587 = vmatprep.mubr.f32.mxu0 0.0
      %1588 = vmatmul.mubr.f32.gmra.mxu0 %v1425
      %v1589 = vpop.f32.mrf.mxu0
      %v1590 = vadd.f32 0.0, %v1589
      %v1591 = vpop.f32.mrf.mxu0
      %1592 = vmatprep.mubr.f32.mxu0 0.0
      %1593 = vmatmul.mubr.f32.gmra.mxu0 %v1428
      %v1594 = vpop.f32.mrf.mxu0
      %v1595 = vadd.f32 0.0, %v1594
      %v1596 = vpop.f32.mrf.mxu0
      %1597 = vmatprep.mubr.f32.mxu0 0.0
      %1598 = vmatmul.mubr.f32.gmra.mxu0 %v1431
      %v1599 = vpop.f32.mrf.mxu0
      %v1600 = vadd.f32 0.0, %v1599
      %v1601 = vpop.f32.mrf.mxu0
      %1602 = vmatprep.mubr.f32.mxu0 0.0
      %1603 = vmatmul.mubr.f32.gmra.mxu0 %v1434
      %v1604 = vpop.f32.mrf.mxu0
      %v1605 = vadd.f32 0.0, %v1604
      %v1606 = vpop.f32.mrf.mxu0
      %1607 = vmatprep.mubr.f32.mxu0 0.0
      %1608 = vmatmul.mubr.f32.gmra.mxu0 %v1437
      %v1609 = vpop.f32.mrf.mxu0
      %v1610 = vadd.f32 0.0, %v1609
      %v1611 = vpop.f32.mrf.mxu0
      %1612 = vmatprep.mubr.f32.mxu0 0.0
      %1613 = vmatmul.mubr.f32.gmra.mxu0 %v1440
      %v1614 = vpop.f32.mrf.mxu0
      %v1615 = vadd.f32 0.0, %v1614
      %v1616 = vpop.f32.mrf.mxu0
      %1617 = vmatprep.mubr.f32.mxu0 0.0
      %1618 = vmatmul.mubr.f32.gmra.mxu0 %v1443
      %v1619 = vpop.f32.mrf.mxu0
      %v1620 = vadd.f32 0.0, %v1619
      %v1621 = vpop.f32.mrf.mxu0
      %1622 = vmatprep.mubr.f32.mxu0 0.0
      %1623 = vmatmul.mubr.f32.gmra.mxu0 %v1446
      %v1624 = vpop.f32.mrf.mxu0
      %v1625 = vadd.f32 0.0, %v1624
      %v1626 = vpop.f32.mrf.mxu0
      %1627 = vmatprep.mubr.f32.mxu0 0.0
      %1628 = vmatmul.mubr.f32.gmra.mxu0 %v1449
      %v1629 = vpop.f32.mrf.mxu0
      %v1630 = vadd.f32 0.0, %v1629
      %v1631 = vpop.f32.mrf.mxu0
      %1632 = vmatprep.mubr.f32.mxu0 0.0
      %1633 = vmatmul.mubr.f32.gmra.mxu0 %v1452
      %v1634 = vpop.f32.mrf.mxu0
      %v1635 = vadd.f32 0.0, %v1634
      %v1636 = vpop.f32.mrf.mxu0
      %1637 = vmatprep.mubr.f32.mxu0 0.0
      %1638 = vmatmul.mubr.f32.gmra.mxu0 %v1455
      %v1639 = vpop.f32.mrf.mxu0
      %v1640 = vadd.f32 0.0, %v1639
      %v1641 = vpop.f32.mrf.mxu0
      %1642 = vmatprep.mubr.f32.mxu0 0.0
      %1643 = vmatmul.mubr.f32.gmra.mxu0 %v1458
      %v1644 = vpop.f32.mrf.mxu0
      %v1645 = vadd.f32 0.0, %v1644
      %v1646 = vpop.f32.mrf.mxu0
      %1647 = vmatprep.mubr.f32.mxu0 0.0
      %1648 = vmatmul.mubr.f32.gmra.mxu0 %v1461
      %v1649 = vpop.f32.mrf.mxu0
      %v1650 = vadd.f32 0.0, %v1649
      %v1651 = vpop.f32.mrf.mxu0
      %1652 = vmatprep.mubr.f32.mxu0 0.0
      %1653 = vmatmul.mubr.f32.gmra.mxu0 %v1464
      %v1654 = vpop.f32.mrf.mxu0
      %v1655 = vadd.f32 0.0, %v1654
      %v1656 = vpop.f32.mrf.mxu0
      %1657 = vmatprep.mubr.f32.mxu0 0.0
      %1658 = vmatmul.mubr.f32.gmra.mxu0 %v1467
      %v1659 = vpop.f32.mrf.mxu0
      %v1660 = vadd.f32 0.0, %v1659
      %v1661 = vpop.f32.mrf.mxu0
      %1662 = vmatprep.mubr.f32.mxu0 0.0
      %1663 = vmatmul.mubr.f32.gmra.mxu0 %v1470
      %v1664 = vpop.f32.mrf.mxu0
      %v1665 = vadd.f32 0.0, %v1664
      %v1666 = vpop.f32.mrf.mxu0
      %1667 = vmatprep.mubr.f32.mxu0 0.0
      %1668 = vmatmul.mubr.f32.gmra.mxu0 %v1473
      %v1669 = vpop.f32.mrf.mxu0
      %v1670 = vadd.f32 0.0, %v1669
      %v1671 = vpop.f32.mrf.mxu0
      %1672 = vmatprep.mubr.f32.mxu0 0.0
      %1673 = vmatmul.mubr.f32.gmra.mxu0 %v1476
      %v1674 = vpop.f32.mrf.mxu0
      %v1675 = vadd.f32 0.0, %v1674
      %v1676 = vpop.f32.mrf.mxu0
      %1677 = vmatprep.mubr.f32.mxu0 0.0
      %1678 = vmatmul.mubr.f32.gmra.mxu0 %v1479
      %v1679 = vpop.f32.mrf.mxu0
      %v1680 = vadd.f32 0.0, %v1679
      %v1681 = vpop.f32.mrf.mxu0
      %1682 = vmatprep.mubr.f32.mxu0 0.0
      %1683 = vmatmul.mubr.f32.gmra.mxu0 %v1482
      %v1684 = vpop.f32.mrf.mxu0
      %v1685 = vadd.f32 0.0, %v1684
      %v1686 = vpop.f32.mrf.mxu0
      %1687 = vmatprep.mubr.f32.mxu0 0.0
      %1688 = vmatmul.mubr.f32.gmra.mxu0 %v1485
      %v1689 = vpop.f32.mrf.mxu0
      %v1690 = vadd.f32 0.0, %v1689
      %v1691 = vpop.f32.mrf.mxu0
      %1692 = vmatprep.mubr.f32.mxu0 0.0
      %1693 = vmatmul.mubr.f32.gmra.mxu0 %v1488
      %v1694 = vpop.f32.mrf.mxu0
      %v1695 = vadd.f32 0.0, %v1694
      %v1696 = vpop.f32.mrf.mxu0
      %1697 = vmatprep.mubr.f32.mxu0 0.0
      %1698 = vmatmul.mubr.f32.gmra.mxu0 %v1491
      %v1699 = vpop.f32.mrf.mxu0
      %v1700 = vadd.f32 0.0, %v1699
      %v1701 = vpop.f32.mrf.mxu0
      %1702 = vmatprep.mubr.f32.mxu0 0.0
      %1703 = vmatmul.mubr.f32.gmra.mxu0 %v1494
      %v1704 = vpop.f32.mrf.mxu0
      %v1705 = vadd.f32 0.0, %v1704
      %v1706 = vpop.f32.mrf.mxu0
      %1707 = vmatprep.mubr.f32.mxu0 0.0
      %1708 = vmatmul.mubr.f32.gmra.mxu0 %v1497
      %v1709 = vpop.f32.mrf.mxu0
      %v1710 = vadd.f32 0.0, %v1709
      %v1711 = vpop.f32.mrf.mxu0
      %1712 = vmatprep.mubr.f32.mxu0 0.0
      %1713 = vmatmul.mubr.f32.gmra.mxu0 %v1500
      %v1714 = vpop.f32.mrf.mxu0
      %v1715 = vadd.f32 0.0, %v1714
      %v1716 = vpop.f32.mrf.mxu0
      %1717 = vmatprep.mubr.f32.mxu0 0.0
      %1718 = vmatmul.mubr.f32.gmra.mxu0 %v1503
      %v1719 = vpop.f32.mrf.mxu0
      %v1720 = vadd.f32 0.0, %v1719
      %v1721 = vpop.f32.mrf.mxu0
      %1722 = vmatprep.mubr.f32.mxu0 0.0
      %1723 = vmatmul.mubr.f32.gmra.mxu0 %v1506
      %v1724 = vpop.f32.mrf.mxu0
      %v1725 = vadd.f32 0.0, %v1724
      %v1726 = vpop.f32.mrf.mxu0
      %1727 = vmatprep.mubr.f32.mxu0 0.0
      %1728 = vmatmul.mubr.f32.gmra.mxu0 %v1509
      %v1729 = vpop.f32.mrf.mxu0
      %v1730 = vadd.f32 0.0, %v1729
      %v1731 = vpop.f32.mrf.mxu0
      %1732 = vmatprep.mubr.f32.mxu0 0.0
      %1733 = vmatmul.mubr.f32.gmra.mxu0 %v1512
      %v1734 = vpop.f32.mrf.mxu0
      %v1735 = vadd.f32 0.0, %v1734
      %v1736 = vpop.f32.mrf.mxu0
      %1737 = vmatprep.mubr.f32.mxu0 0.0
      %1738 = vmatmul.mubr.f32.gmra.mxu0 %v1515
      %v1739 = vpop.f32.mrf.mxu0
      %v1740 = vadd.f32 0.0, %v1739
      %v1741 = vpop.f32.mrf.mxu0
      %1742 = vmatprep.mubr.f32.mxu0 0.0
      %1743 = vmatmul.mubr.f32.gmra.mxu0 %v1518
      %v1744 = vpop.f32.mrf.mxu0
      %v1745 = vadd.f32 0.0, %v1744
      %v1746 = vpop.f32.mrf.mxu0
      %1747 = vdwg.mxu0
      %v1748 = vadd.f32 %v1358, %v1590
      %v1749 = vadd.f32 %v1359, %v1595
      %v1750 = vadd.f32 %v1360, %v1600
      %v1751 = vadd.f32 %v1361, %v1605
      %v1752 = vadd.f32 %v1362, %v1610
      %v1753 = vadd.f32 %v1363, %v1615
      %v1754 = vadd.f32 %v1364, %v1620
      %v1755 = vadd.f32 %v1365, %v1625
      %v1756 = vadd.f32 %v1366, %v1630
      %v1757 = vadd.f32 %v1367, %v1635
      %v1758 = vadd.f32 %v1368, %v1640
      %v1759 = vadd.f32 %v1369, %v1645
      %v1760 = vadd.f32 %v1370, %v1650
      %v1761 = vadd.f32 %v1371, %v1655
      %v1762 = vadd.f32 %v1372, %v1660
      %v1763 = vadd.f32 %v1373, %v1665
      %v1764 = vadd.f32 %v1374, %v1670
      %v1765 = vadd.f32 %v1375, %v1675
      %v1766 = vadd.f32 %v1376, %v1680
      %v1767 = vadd.f32 %v1377, %v1685
      %v1768 = vadd.f32 %v1378, %v1690
      %v1769 = vadd.f32 %v1379, %v1695
      %v1770 = vadd.f32 %v1380, %v1700
      %v1771 = vadd.f32 %v1381, %v1705
      %v1772 = vadd.f32 %v1382, %v1710
      %v1773 = vadd.f32 %v1383, %v1715
      %v1774 = vadd.f32 %v1384, %v1720
      %v1775 = vadd.f32 %v1385, %v1725
      %v1776 = vadd.f32 %v1386, %v1730
      %v1777 = vadd.f32 %v1387, %v1735
      %v1778 = vadd.f32 %v1388, %v1740
      %v1779 = vadd.f32 %v1389, %v1745
      %v1780 = vld [vmem:[#allocation2 + $0x9] sm:$0xff]
      %v1781 = vld [vmem:[#allocation2 + $0x11] sm:$0xff]
      %v1782 = vld [vmem:[#allocation2 + $0x19] sm:$0xff]
      %v1783 = vld [vmem:[#allocation2 + $0x21] sm:$0xff]
      %v1784 = vld [vmem:[#allocation2 + $0x29] sm:$0xff]
      %v1785 = vld [vmem:[#allocation2 + $0x31] sm:$0xff]
      %v1786 = vld [vmem:[#allocation2 + $0x39] sm:$0xff]
      %v1787 = vld [vmem:[#allocation2 + $0x41] sm:$0xff]
      %v1788 = vld [vmem:[#allocation2 + $0x49] sm:$0xff]
      %v1789 = vld [vmem:[#allocation2 + $0x51] sm:$0xff]
      %v1790 = vld [vmem:[#allocation2 + $0x59] sm:$0xff]
      %v1791 = vld [vmem:[#allocation2 + $0x61] sm:$0xff]
      %v1792 = vld [vmem:[#allocation2 + $0x69] sm:$0xff]
      %v1793 = vld [vmem:[#allocation2 + $0x71] sm:$0xff]
      %v1794 = vld [vmem:[#allocation2 + $0x79] sm:$0xff]
      %v1795 = vld [vmem:[#allocation2 + $0x81] sm:$0xff]
      %v1796 = vld [vmem:[#allocation2 + $0x89] sm:$0xff]
      %v1797 = vld [vmem:[#allocation2 + $0x91] sm:$0xff]
      %v1798 = vld [vmem:[#allocation2 + $0x99] sm:$0xff]
      %v1799 = vld [vmem:[#allocation2 + $0xa1] sm:$0xff]
      %v1800 = vld [vmem:[#allocation2 + $0xa9] sm:$0xff]
      %v1801 = vld [vmem:[#allocation2 + $0xb1] sm:$0xff]
      %v1802 = vld [vmem:[#allocation2 + $0xb9] sm:$0xff]
      %v1803 = vld [vmem:[#allocation2 + $0xc1] sm:$0xff]
      %v1804 = vld [vmem:[#allocation2 + $0xc9] sm:$0xff]
      %v1805 = vld [vmem:[#allocation2 + $0xd1] sm:$0xff]
      %v1806 = vld [vmem:[#allocation2 + $0xd9] sm:$0xff]
      %v1807 = vld [vmem:[#allocation2 + $0xe1] sm:$0xff]
      %v1808 = vld [vmem:[#allocation2 + $0xe9] sm:$0xff]
      %v1809 = vld [vmem:[#allocation2 + $0xf1] sm:$0xff]
      %v1810 = vld [vmem:[#allocation2 + $0xf9] sm:$0xff]
      %v1811 = vld [vmem:[#allocation2 + $0x101] sm:$0xff]
      %v1812 = vsel %vm866, 1, 0
      %v1813 = vsel %vm867, 1, 0
      %v1814 = vsel %vm868, 1, 0
      %v1815 = vsel %vm869, 1, 0
      %v1816 = vsel %vm870, 1, 0
      %v1817 = vsel %vm871, 1, 0
      %v1818 = vsel %vm872, 1, 0
      %v1819 = vsel %vm873, 1, 0
      %v1820 = vsel %vm874, 1, 0
      %v1821 = vsel %vm875, 1, 0
      %v1822 = vsel %vm876, 1, 0
      %v1823 = vsel %vm877, 1, 0
      %v1824 = vsel %vm878, 1, 0
      %v1825 = vsel %vm879, 1, 0
      %v1826 = vsel %vm880, 1, 0
      %v1827 = vsel %vm881, 1, 0
      %v1828 = vsel %vm882, 1, 0
      %v1829 = vsel %vm883, 1, 0
      %v1830 = vsel %vm884, 1, 0
      %v1831 = vsel %vm885, 1, 0
      %v1832 = vsel %vm886, 1, 0
      %v1833 = vsel %vm887, 1, 0
      %v1834 = vsel %vm888, 1, 0
      %v1835 = vsel %vm889, 1, 0
      %v1836 = vsel %vm890, 1, 0
      %v1837 = vsel %vm891, 1, 0
      %v1838 = vsel %vm892, 1, 0
      %v1839 = vsel %vm893, 1, 0
      %v1840 = vsel %vm894, 1, 0
      %v1841 = vsel %vm895, 1, 0
      %v1842 = vsel %vm896, 1, 0
      %v1843 = vsel %vm897, 1, 0
      %vm1844 = vcmp.eq.s32.totalorder %v1812, 1
      %vm1845 = vcmp.eq.s32.totalorder %v1813, 1
      %vm1846 = vcmp.eq.s32.totalorder %v1814, 1
      %vm1847 = vcmp.eq.s32.totalorder %v1815, 1
      %vm1848 = vcmp.eq.s32.totalorder %v1816, 1
      %vm1849 = vcmp.eq.s32.totalorder %v1817, 1
      %vm1850 = vcmp.eq.s32.totalorder %v1818, 1
      %vm1851 = vcmp.eq.s32.totalorder %v1819, 1
      %vm1852 = vcmp.eq.s32.totalorder %v1820, 1
      %vm1853 = vcmp.eq.s32.totalorder %v1821, 1
      %vm1854 = vcmp.eq.s32.totalorder %v1822, 1
      %vm1855 = vcmp.eq.s32.totalorder %v1823, 1
      %vm1856 = vcmp.eq.s32.totalorder %v1824, 1
      %vm1857 = vcmp.eq.s32.totalorder %v1825, 1
      %vm1858 = vcmp.eq.s32.totalorder %v1826, 1
      %vm1859 = vcmp.eq.s32.totalorder %v1827, 1
      %vm1860 = vcmp.eq.s32.totalorder %v1828, 1
      %vm1861 = vcmp.eq.s32.totalorder %v1829, 1
      %vm1862 = vcmp.eq.s32.totalorder %v1830, 1
      %vm1863 = vcmp.eq.s32.totalorder %v1831, 1
      %vm1864 = vcmp.eq.s32.totalorder %v1832, 1
      %vm1865 = vcmp.eq.s32.totalorder %v1833, 1
      %vm1866 = vcmp.eq.s32.totalorder %v1834, 1
      %vm1867 = vcmp.eq.s32.totalorder %v1835, 1
      %vm1868 = vcmp.eq.s32.totalorder %v1836, 1
      %vm1869 = vcmp.eq.s32.totalorder %v1837, 1
      %vm1870 = vcmp.eq.s32.totalorder %v1838, 1
      %vm1871 = vcmp.eq.s32.totalorder %v1839, 1
      %vm1872 = vcmp.eq.s32.totalorder %v1840, 1
      %vm1873 = vcmp.eq.s32.totalorder %v1841, 1
      %vm1874 = vcmp.eq.s32.totalorder %v1842, 1
      %vm1875 = vcmp.eq.s32.totalorder %v1843, 1
      %v1876 = vsel %vm1844, %v1780, 0.0
      %v1877 = vsel %vm1845, %v1781, 0.0
      %v1878 = vsel %vm1846, %v1782, 0.0
      %v1879 = vsel %vm1847, %v1783, 0.0
      %v1880 = vsel %vm1848, %v1784, 0.0
      %v1881 = vsel %vm1849, %v1785, 0.0
      %v1882 = vsel %vm1850, %v1786, 0.0
      %v1883 = vsel %vm1851, %v1787, 0.0
      %v1884 = vsel %vm1852, %v1788, 0.0
      %v1885 = vsel %vm1853, %v1789, 0.0
      %v1886 = vsel %vm1854, %v1790, 0.0
      %v1887 = vsel %vm1855, %v1791, 0.0
      %v1888 = vsel %vm1856, %v1792, 0.0
      %v1889 = vsel %vm1857, %v1793, 0.0
      %v1890 = vsel %vm1858, %v1794, 0.0
      %v1891 = vsel %vm1859, %v1795, 0.0
      %v1892 = vsel %vm1860, %v1796, 0.0
      %v1893 = vsel %vm1861, %v1797, 0.0
      %v1894 = vsel %vm1862, %v1798, 0.0
      %v1895 = vsel %vm1863, %v1799, 0.0
      %v1896 = vsel %vm1864, %v1800, 0.0
      %v1897 = vsel %vm1865, %v1801, 0.0
      %v1898 = vsel %vm1866, %v1802, 0.0
      %v1899 = vsel %vm1867, %v1803, 0.0
      %v1900 = vsel %vm1868, %v1804, 0.0
      %v1901 = vsel %vm1869, %v1805, 0.0
      %v1902 = vsel %vm1870, %v1806, 0.0
      %v1903 = vsel %vm1871, %v1807, 0.0
      %v1904 = vsel %vm1872, %v1808, 0.0
      %v1905 = vsel %vm1873, %v1809, 0.0
      %v1906 = vsel %vm1874, %v1810, 0.0
      %v1907 = vsel %vm1875, %v1811, 0.0
      %s1908 = scalar_lea.vmem %s3, 8
      %v1909 = vld [vmem:[%s1908] sm:$0xf]
      %v1911 = vsel %vm373, %v1876, 0
      %v1914 = vsel %vm373, %v1877, 0
      %v1917 = vsel %vm373, %v1878, 0
      %v1920 = vsel %vm373, %v1879, 0
      %v1923 = vsel %vm373, %v1880, 0
      %v1926 = vsel %vm373, %v1881, 0
      %v1929 = vsel %vm373, %v1882, 0
      %v1932 = vsel %vm373, %v1883, 0
      %v1935 = vsel %vm373, %v1884, 0
      %v1938 = vsel %vm373, %v1885, 0
      %v1941 = vsel %vm373, %v1886, 0
      %v1944 = vsel %vm373, %v1887, 0
      %v1947 = vsel %vm373, %v1888, 0
      %v1950 = vsel %vm373, %v1889, 0
      %v1953 = vsel %vm373, %v1890, 0
      %v1956 = vsel %vm373, %v1891, 0
      %v1959 = vsel %vm373, %v1892, 0
      %v1962 = vsel %vm373, %v1893, 0
      %v1965 = vsel %vm373, %v1894, 0
      %v1968 = vsel %vm373, %v1895, 0
      %v1971 = vsel %vm373, %v1896, 0
      %v1974 = vsel %vm373, %v1897, 0
      %v1977 = vsel %vm373, %v1898, 0
      %v1980 = vsel %vm373, %v1899, 0
      %v1983 = vsel %vm373, %v1900, 0
      %v1986 = vsel %vm373, %v1901, 0
      %v1989 = vsel %vm373, %v1902, 0
      %v1992 = vsel %vm373, %v1903, 0
      %v1995 = vsel %vm373, %v1904, 0
      %v1998 = vsel %vm373, %v1905, 0
      %v2001 = vsel %vm373, %v1906, 0
      %v2004 = vsel %vm373, %v1907, 0
      %v2007 = vsel %vm470, %v1909, 0
      %2009 = vmatprep.subr.mxu0 0.0
      %2010 = vmatpush1.msra.mxu0 0.0
      %2011 = vmatprep.subr.mxu0 0.0
      %2012 = vmatpush1.msra.mxu0 0.0
      %2013 = vmatprep.subr.mxu0 0.0
      %2014 = vmatpush1.msra.mxu0 0.0
      %2015 = vmatprep.subr.mxu0 0.0
      %2016 = vmatpush1.msra.mxu0 0.0
      %2017 = vmatprep.subr.mxu0 0.0
      %2018 = vmatpush1.msra.mxu0 0.0
      %2019 = vmatprep.subr.mxu0 0.0
      %2020 = vmatpush1.msra.mxu0 0.0
      %2021 = vmatprep.subr.mxu0 0.0
      %2022 = vmatpush1.msra.mxu0 0.0
      %2023 = vmatprep.subr.mxu0 0.0
      %2024 = vmatpush1.msra.mxu0 0.0
      %2025 = vmatprep.subr.mxu0 0.0
      %2026 = vmatpush1.msra.mxu0 0.0
      %2027 = vmatprep.subr.mxu0 0.0
      %2028 = vmatpush1.msra.mxu0 0.0
      %2029 = vmatprep.subr.mxu0 0.0
      %2030 = vmatpush1.msra.mxu0 0.0
      %2031 = vmatprep.subr.mxu0 0.0
      %2032 = vmatpush1.msra.mxu0 0.0
      %2033 = vmatprep.subr.mxu0 0.0
      %2034 = vmatpush1.msra.mxu0 0.0
      %2035 = vmatprep.subr.mxu0 0.0
      %2036 = vmatpush1.msra.mxu0 0.0
      %2037 = vmatprep.subr.mxu0 0.0
      %2038 = vmatpush1.msra.mxu0 0.0
      %2039 = vmatprep.subr.mxu0 0.0
      %2040 = vmatpush1.msra.mxu0 %v2007
      %2041 = vmatprep.subr.mxu0 0.0
      %2042 = vmatpush2.msra.mxu0 0.0
      %2043 = vmatprep.subr.mxu0 0.0
      %2044 = vmatpush2.msra.mxu0 0.0
      %2045 = vmatprep.subr.mxu0 0.0
      %2046 = vmatpush2.msra.mxu0 0.0
      %2047 = vmatprep.subr.mxu0 0.0
      %2048 = vmatpush2.msra.mxu0 0.0
      %2049 = vmatprep.subr.mxu0 0.0
      %2050 = vmatpush2.msra.mxu0 0.0
      %2051 = vmatprep.subr.mxu0 0.0
      %2052 = vmatpush2.msra.mxu0 0.0
      %2053 = vmatprep.subr.mxu0 0.0
      %2054 = vmatpush2.msra.mxu0 0.0
      %2055 = vmatprep.subr.mxu0 0.0
      %2056 = vmatpush2.msra.mxu0 0.0
      %2057 = vmatprep.subr.mxu0 0.0
      %2058 = vmatpush2.msra.mxu0 0.0
      %2059 = vmatprep.subr.mxu0 0.0
      %2060 = vmatpush2.msra.mxu0 0.0
      %2061 = vmatprep.subr.mxu0 0.0
      %2062 = vmatpush2.msra.mxu0 0.0
      %2063 = vmatprep.subr.mxu0 0.0
      %2064 = vmatpush2.msra.mxu0 0.0
      %2065 = vmatprep.subr.mxu0 0.0
      %2066 = vmatpush2.msra.mxu0 0.0
      %2067 = vmatprep.subr.mxu0 0.0
      %2068 = vmatpush2.msra.mxu0 0.0
      %2069 = vmatprep.subr.mxu0 0.0
      %2070 = vmatpush2.msra.mxu0 0.0
      %2071 = vmatprep.subr.mxu0 0.0
      %2072 = vmatpush2.msra.mxu0 0.0
      %2073 = vmatprep.mubr.f32.mxu0 0.0
      %2074 = vmatmul.mubr.f32.gmra.mxu0 %v1911
      %v2075 = vpop.f32.mrf.mxu0
      %v2076 = vadd.f32 0.0, %v2075
      %v2077 = vpop.f32.mrf.mxu0
      %2078 = vmatprep.mubr.f32.mxu0 0.0
      %2079 = vmatmul.mubr.f32.gmra.mxu0 %v1914
      %v2080 = vpop.f32.mrf.mxu0
      %v2081 = vadd.f32 0.0, %v2080
      %v2082 = vpop.f32.mrf.mxu0
      %2083 = vmatprep.mubr.f32.mxu0 0.0
      %2084 = vmatmul.mubr.f32.gmra.mxu0 %v1917
      %v2085 = vpop.f32.mrf.mxu0
      %v2086 = vadd.f32 0.0, %v2085
      %v2087 = vpop.f32.mrf.mxu0
      %2088 = vmatprep.mubr.f32.mxu0 0.0
      %2089 = vmatmul.mubr.f32.gmra.mxu0 %v1920
      %v2090 = vpop.f32.mrf.mxu0
      %v2091 = vadd.f32 0.0, %v2090
      %v2092 = vpop.f32.mrf.mxu0
      %2093 = vmatprep.mubr.f32.mxu0 0.0
      %2094 = vmatmul.mubr.f32.gmra.mxu0 %v1923
      %v2095 = vpop.f32.mrf.mxu0
      %v2096 = vadd.f32 0.0, %v2095
      %v2097 = vpop.f32.mrf.mxu0
      %2098 = vmatprep.mubr.f32.mxu0 0.0
      %2099 = vmatmul.mubr.f32.gmra.mxu0 %v1926
      %v2100 = vpop.f32.mrf.mxu0
      %v2101 = vadd.f32 0.0, %v2100
      %v2102 = vpop.f32.mrf.mxu0
      %2103 = vmatprep.mubr.f32.mxu0 0.0
      %2104 = vmatmul.mubr.f32.gmra.mxu0 %v1929
      %v2105 = vpop.f32.mrf.mxu0
      %v2106 = vadd.f32 0.0, %v2105
      %v2107 = vpop.f32.mrf.mxu0
      %2108 = vmatprep.mubr.f32.mxu0 0.0
      %2109 = vmatmul.mubr.f32.gmra.mxu0 %v1932
      %v2110 = vpop.f32.mrf.mxu0
      %v2111 = vadd.f32 0.0, %v2110
      %v2112 = vpop.f32.mrf.mxu0
      %2113 = vmatprep.mubr.f32.mxu0 0.0
      %2114 = vmatmul.mubr.f32.gmra.mxu0 %v1935
      %v2115 = vpop.f32.mrf.mxu0
      %v2116 = vadd.f32 0.0, %v2115
      %v2117 = vpop.f32.mrf.mxu0
      %2118 = vmatprep.mubr.f32.mxu0 0.0
      %2119 = vmatmul.mubr.f32.gmra.mxu0 %v1938
      %v2120 = vpop.f32.mrf.mxu0
      %v2121 = vadd.f32 0.0, %v2120
      %v2122 = vpop.f32.mrf.mxu0
      %2123 = vmatprep.mubr.f32.mxu0 0.0
      %2124 = vmatmul.mubr.f32.gmra.mxu0 %v1941
      %v2125 = vpop.f32.mrf.mxu0
      %v2126 = vadd.f32 0.0, %v2125
      %v2127 = vpop.f32.mrf.mxu0
      %2128 = vmatprep.mubr.f32.mxu0 0.0
      %2129 = vmatmul.mubr.f32.gmra.mxu0 %v1944
      %v2130 = vpop.f32.mrf.mxu0
      %v2131 = vadd.f32 0.0, %v2130
      %v2132 = vpop.f32.mrf.mxu0
      %2133 = vmatprep.mubr.f32.mxu0 0.0
      %2134 = vmatmul.mubr.f32.gmra.mxu0 %v1947
      %v2135 = vpop.f32.mrf.mxu0
      %v2136 = vadd.f32 0.0, %v2135
      %v2137 = vpop.f32.mrf.mxu0
      %2138 = vmatprep.mubr.f32.mxu0 0.0
      %2139 = vmatmul.mubr.f32.gmra.mxu0 %v1950
      %v2140 = vpop.f32.mrf.mxu0
      %v2141 = vadd.f32 0.0, %v2140
      %v2142 = vpop.f32.mrf.mxu0
      %2143 = vmatprep.mubr.f32.mxu0 0.0
      %2144 = vmatmul.mubr.f32.gmra.mxu0 %v1953
      %v2145 = vpop.f32.mrf.mxu0
      %v2146 = vadd.f32 0.0, %v2145
      %v2147 = vpop.f32.mrf.mxu0
      %2148 = vmatprep.mubr.f32.mxu0 0.0
      %2149 = vmatmul.mubr.f32.gmra.mxu0 %v1956
      %v2150 = vpop.f32.mrf.mxu0
      %v2151 = vadd.f32 0.0, %v2150
      %v2152 = vpop.f32.mrf.mxu0
      %2153 = vmatprep.mubr.f32.mxu0 0.0
      %2154 = vmatmul.mubr.f32.gmra.mxu0 %v1959
      %v2155 = vpop.f32.mrf.mxu0
      %v2156 = vadd.f32 0.0, %v2155
      %v2157 = vpop.f32.mrf.mxu0
      %2158 = vmatprep.mubr.f32.mxu0 0.0
      %2159 = vmatmul.mubr.f32.gmra.mxu0 %v1962
      %v2160 = vpop.f32.mrf.mxu0
      %v2161 = vadd.f32 0.0, %v2160
      %v2162 = vpop.f32.mrf.mxu0
      %2163 = vmatprep.mubr.f32.mxu0 0.0
      %2164 = vmatmul.mubr.f32.gmra.mxu0 %v1965
      %v2165 = vpop.f32.mrf.mxu0
      %v2166 = vadd.f32 0.0, %v2165
      %v2167 = vpop.f32.mrf.mxu0
      %2168 = vmatprep.mubr.f32.mxu0 0.0
      %2169 = vmatmul.mubr.f32.gmra.mxu0 %v1968
      %v2170 = vpop.f32.mrf.mxu0
      %v2171 = vadd.f32 0.0, %v2170
      %v2172 = vpop.f32.mrf.mxu0
      %2173 = vmatprep.mubr.f32.mxu0 0.0
      %2174 = vmatmul.mubr.f32.gmra.mxu0 %v1971
      %v2175 = vpop.f32.mrf.mxu0
      %v2176 = vadd.f32 0.0, %v2175
      %v2177 = vpop.f32.mrf.mxu0
      %2178 = vmatprep.mubr.f32.mxu0 0.0
      %2179 = vmatmul.mubr.f32.gmra.mxu0 %v1974
      %v2180 = vpop.f32.mrf.mxu0
      %v2181 = vadd.f32 0.0, %v2180
      %v2182 = vpop.f32.mrf.mxu0
      %2183 = vmatprep.mubr.f32.mxu0 0.0
      %2184 = vmatmul.mubr.f32.gmra.mxu0 %v1977
      %v2185 = vpop.f32.mrf.mxu0
      %v2186 = vadd.f32 0.0, %v2185
      %v2187 = vpop.f32.mrf.mxu0
      %2188 = vmatprep.mubr.f32.mxu0 0.0
      %2189 = vmatmul.mubr.f32.gmra.mxu0 %v1980
      %v2190 = vpop.f32.mrf.mxu0
      %v2191 = vadd.f32 0.0, %v2190
      %v2192 = vpop.f32.mrf.mxu0
      %2193 = vmatprep.mubr.f32.mxu0 0.0
      %2194 = vmatmul.mubr.f32.gmra.mxu0 %v1983
      %v2195 = vpop.f32.mrf.mxu0
      %v2196 = vadd.f32 0.0, %v2195
      %v2197 = vpop.f32.mrf.mxu0
      %2198 = vmatprep.mubr.f32.mxu0 0.0
      %2199 = vmatmul.mubr.f32.gmra.mxu0 %v1986
      %v2200 = vpop.f32.mrf.mxu0
      %v2201 = vadd.f32 0.0, %v2200
      %v2202 = vpop.f32.mrf.mxu0
      %2203 = vmatprep.mubr.f32.mxu0 0.0
      %2204 = vmatmul.mubr.f32.gmra.mxu0 %v1989
      %v2205 = vpop.f32.mrf.mxu0
      %v2206 = vadd.f32 0.0, %v2205
      %v2207 = vpop.f32.mrf.mxu0
      %2208 = vmatprep.mubr.f32.mxu0 0.0
      %2209 = vmatmul.mubr.f32.gmra.mxu0 %v1992
      %v2210 = vpop.f32.mrf.mxu0
      %v2211 = vadd.f32 0.0, %v2210
      %v2212 = vpop.f32.mrf.mxu0
      %2213 = vmatprep.mubr.f32.mxu0 0.0
      %2214 = vmatmul.mubr.f32.gmra.mxu0 %v1995
      %v2215 = vpop.f32.mrf.mxu0
      %v2216 = vadd.f32 0.0, %v2215
      %v2217 = vpop.f32.mrf.mxu0
      %2218 = vmatprep.mubr.f32.mxu0 0.0
      %2219 = vmatmul.mubr.f32.gmra.mxu0 %v1998
      %v2220 = vpop.f32.mrf.mxu0
      %v2221 = vadd.f32 0.0, %v2220
      %v2222 = vpop.f32.mrf.mxu0
      %2223 = vmatprep.mubr.f32.mxu0 0.0
      %2224 = vmatmul.mubr.f32.gmra.mxu0 %v2001
      %v2225 = vpop.f32.mrf.mxu0
      %v2226 = vadd.f32 0.0, %v2225
      %v2227 = vpop.f32.mrf.mxu0
      %2228 = vmatprep.mubr.f32.mxu0 0.0
      %2229 = vmatmul.mubr.f32.gmra.mxu0 %v2004
      %v2230 = vpop.f32.mrf.mxu0
      %v2231 = vadd.f32 0.0, %v2230
      %v2232 = vpop.f32.mrf.mxu0
      %2233 = vdwg.mxu0
      %v2234 = vadd.f32 %v1748, %v2076
      %v2235 = vadd.f32 %v1749, %v2081
      %v2236 = vadd.f32 %v1750, %v2086
      %v2237 = vadd.f32 %v1751, %v2091
      %v2238 = vadd.f32 %v1752, %v2096
      %v2239 = vadd.f32 %v1753, %v2101
      %v2240 = vadd.f32 %v1754, %v2106
      %v2241 = vadd.f32 %v1755, %v2111
      %v2242 = vadd.f32 %v1756, %v2116
      %v2243 = vadd.f32 %v1757, %v2121
      %v2244 = vadd.f32 %v1758, %v2126
      %v2245 = vadd.f32 %v1759, %v2131
      %v2246 = vadd.f32 %v1760, %v2136
      %v2247 = vadd.f32 %v1761, %v2141
      %v2248 = vadd.f32 %v1762, %v2146
      %v2249 = vadd.f32 %v1763, %v2151
      %v2250 = vadd.f32 %v1764, %v2156
      %v2251 = vadd.f32 %v1765, %v2161
      %v2252 = vadd.f32 %v1766, %v2166
      %v2253 = vadd.f32 %v1767, %v2171
      %v2254 = vadd.f32 %v1768, %v2176
      %v2255 = vadd.f32 %v1769, %v2181
      %v2256 = vadd.f32 %v1770, %v2186
      %v2257 = vadd.f32 %v1771, %v2191
      %v2258 = vadd.f32 %v1772, %v2196
      %v2259 = vadd.f32 %v1773, %v2201
      %v2260 = vadd.f32 %v1774, %v2206
      %v2261 = vadd.f32 %v1775, %v2211
      %v2262 = vadd.f32 %v1776, %v2216
      %v2263 = vadd.f32 %v1777, %v2221
      %v2264 = vadd.f32 %v1778, %v2226
      %v2265 = vadd.f32 %v1779, %v2231
      %v2266 = vld [vmem:[#allocation2 + $0x17] sm:$0xff]
      %v2267 = vld [vmem:[#allocation2 + $0x1f] sm:$0xff]
      %v2268 = vld [vmem:[#allocation2 + $0x27] sm:$0xff]
      %v2269 = vld [vmem:[#allocation2 + $0x2f] sm:$0xff]
      %v2270 = vld [vmem:[#allocation2 + $0x37] sm:$0xff]
      %v2271 = vld [vmem:[#allocation2 + $0x3f] sm:$0xff]
      %v2272 = vld [vmem:[#allocation2 + $0x47] sm:$0xff]
      %v2273 = vld [vmem:[#allocation2 + $0x4f] sm:$0xff]
      %v2274 = vld [vmem:[#allocation2 + $0x57] sm:$0xff]
      %v2275 = vld [vmem:[#allocation2 + $0x5f] sm:$0xff]
      %v2276 = vld [vmem:[#allocation2 + $0x67] sm:$0xff]
      %v2277 = vld [vmem:[#allocation2 + $0x6f] sm:$0xff]
      %v2278 = vld [vmem:[#allocation2 + $0x77] sm:$0xff]
      %v2279 = vld [vmem:[#allocation2 + $0x7f] sm:$0xff]
      %v2280 = vld [vmem:[#allocation2 + $0x87] sm:$0xff]
      %v2281 = vld [vmem:[#allocation2 + $0x8f] sm:$0xff]
      %v2282 = vld [vmem:[#allocation2 + $0x97] sm:$0xff]
      %v2283 = vld [vmem:[#allocation2 + $0x9f] sm:$0xff]
      %v2284 = vld [vmem:[#allocation2 + $0xa7] sm:$0xff]
      %v2285 = vld [vmem:[#allocation2 + $0xaf] sm:$0xff]
      %v2286 = vld [vmem:[#allocation2 + $0xb7] sm:$0xff]
      %v2287 = vld [vmem:[#allocation2 + $0xbf] sm:$0xff]
      %v2288 = vld [vmem:[#allocation2 + $0xc7] sm:$0xff]
      %v2289 = vld [vmem:[#allocation2 + $0xcf] sm:$0xff]
      %v2290 = vld [vmem:[#allocation2 + $0xd7] sm:$0xff]
      %v2291 = vld [vmem:[#allocation2 + $0xdf] sm:$0xff]
      %v2292 = vld [vmem:[#allocation2 + $0xe7] sm:$0xff]
      %v2293 = vld [vmem:[#allocation2 + $0xef] sm:$0xff]
      %v2294 = vld [vmem:[#allocation2 + $0xf7] sm:$0xff]
      %v2295 = vld [vmem:[#allocation2 + $0xff] sm:$0xff]
      %v2296 = vld [vmem:[#allocation2 + $0x107] sm:$0xff]
      %v2297 = vld [vmem:[#allocation2 + $0x10f] sm:$0xff]
      %v2298 = vsel %vm963, %v2266, 0.0
      %v2299 = vsel %vm964, %v2267, 0.0
      %v2300 = vsel %vm965, %v2268, 0.0
      %v2301 = vsel %vm966, %v2269, 0.0
      %v2302 = vsel %vm967, %v2270, 0.0
      %v2303 = vsel %vm968, %v2271, 0.0
      %v2304 = vsel %vm969, %v2272, 0.0
      %v2305 = vsel %vm970, %v2273, 0.0
      %v2306 = vsel %vm971, %v2274, 0.0
      %v2307 = vsel %vm972, %v2275, 0.0
      %v2308 = vsel %vm973, %v2276, 0.0
      %v2309 = vsel %vm974, %v2277, 0.0
      %v2310 = vsel %vm975, %v2278, 0.0
      %v2311 = vsel %vm976, %v2279, 0.0
      %v2312 = vsel %vm977, %v2280, 0.0
      %v2313 = vsel %vm978, %v2281, 0.0
      %v2314 = vsel %vm979, %v2282, 0.0
      %v2315 = vsel %vm980, %v2283, 0.0
      %v2316 = vsel %vm981, %v2284, 0.0
      %v2317 = vsel %vm982, %v2285, 0.0
      %v2318 = vsel %vm983, %v2286, 0.0
      %v2319 = vsel %vm984, %v2287, 0.0
      %v2320 = vsel %vm985, %v2288, 0.0
      %v2321 = vsel %vm986, %v2289, 0.0
      %v2322 = vsel %vm987, %v2290, 0.0
      %v2323 = vsel %vm988, %v2291, 0.0
      %v2324 = vsel %vm989, %v2292, 0.0
      %v2325 = vsel %vm990, %v2293, 0.0
      %v2326 = vsel %vm991, %v2294, 0.0
      %v2327 = vsel %vm992, %v2295, 0.0
      %v2328 = vsel %vm993, %v2296, 0.0
      %v2329 = vsel %vm994, %v2297, 0.0
      %s2330 = scalar_lea.vmem %s3, 12
      %v2331 = vld [vmem:[%s2330] sm:$0xf]
      %v2333 = vsel %vm373, %v2298, 0
      %v2336 = vsel %vm373, %v2299, 0
      %v2339 = vsel %vm373, %v2300, 0
      %v2342 = vsel %vm373, %v2301, 0
      %v2345 = vsel %vm373, %v2302, 0
      %v2348 = vsel %vm373, %v2303, 0
      %v2351 = vsel %vm373, %v2304, 0
      %v2354 = vsel %vm373, %v2305, 0
      %v2357 = vsel %vm373, %v2306, 0
      %v2360 = vsel %vm373, %v2307, 0
      %v2363 = vsel %vm373, %v2308, 0
      %v2366 = vsel %vm373, %v2309, 0
      %v2369 = vsel %vm373, %v2310, 0
      %v2372 = vsel %vm373, %v2311, 0
      %v2375 = vsel %vm373, %v2312, 0
      %v2378 = vsel %vm373, %v2313, 0
      %v2381 = vsel %vm373, %v2314, 0
      %v2384 = vsel %vm373, %v2315, 0
      %v2387 = vsel %vm373, %v2316, 0
      %v2390 = vsel %vm373, %v2317, 0
      %v2393 = vsel %vm373, %v2318, 0
      %v2396 = vsel %vm373, %v2319, 0
      %v2399 = vsel %vm373, %v2320, 0
      %v2402 = vsel %vm373, %v2321, 0
      %v2405 = vsel %vm373, %v2322, 0
      %v2408 = vsel %vm373, %v2323, 0
      %v2411 = vsel %vm373, %v2324, 0
      %v2414 = vsel %vm373, %v2325, 0
      %v2417 = vsel %vm373, %v2326, 0
      %v2420 = vsel %vm373, %v2327, 0
      %v2423 = vsel %vm373, %v2328, 0
      %v2426 = vsel %vm373, %v2329, 0
      %v2429 = vsel %vm470, %v2331, 0
      %2431 = vmatprep.subr.mxu0 0.0
      %2432 = vmatpush1.msra.mxu0 0.0
      %2433 = vmatprep.subr.mxu0 0.0
      %2434 = vmatpush1.msra.mxu0 0.0
      %2435 = vmatprep.subr.mxu0 0.0
      %2436 = vmatpush1.msra.mxu0 0.0
      %2437 = vmatprep.subr.mxu0 0.0
      %2438 = vmatpush1.msra.mxu0 0.0
      %2439 = vmatprep.subr.mxu0 0.0
      %2440 = vmatpush1.msra.mxu0 0.0
      %2441 = vmatprep.subr.mxu0 0.0
      %2442 = vmatpush1.msra.mxu0 0.0
      %2443 = vmatprep.subr.mxu0 0.0
      %2444 = vmatpush1.msra.mxu0 0.0
      %2445 = vmatprep.subr.mxu0 0.0
      %2446 = vmatpush1.msra.mxu0 0.0
      %2447 = vmatprep.subr.mxu0 0.0
      %2448 = vmatpush1.msra.mxu0 0.0
      %2449 = vmatprep.subr.mxu0 0.0
      %2450 = vmatpush1.msra.mxu0 0.0
      %2451 = vmatprep.subr.mxu0 0.0
      %2452 = vmatpush1.msra.mxu0 0.0
      %2453 = vmatprep.subr.mxu0 0.0
      %2454 = vmatpush1.msra.mxu0 0.0
      %2455 = vmatprep.subr.mxu0 0.0
      %2456 = vmatpush1.msra.mxu0 0.0
      %2457 = vmatprep.subr.mxu0 0.0
      %2458 = vmatpush1.msra.mxu0 0.0
      %2459 = vmatprep.subr.mxu0 0.0
      %2460 = vmatpush1.msra.mxu0 0.0
      %2461 = vmatprep.subr.mxu0 0.0
      %2462 = vmatpush1.msra.mxu0 %v2429
      %2463 = vmatprep.subr.mxu0 0.0
      %2464 = vmatpush2.msra.mxu0 0.0
      %2465 = vmatprep.subr.mxu0 0.0
      %2466 = vmatpush2.msra.mxu0 0.0
      %2467 = vmatprep.subr.mxu0 0.0
      %2468 = vmatpush2.msra.mxu0 0.0
      %2469 = vmatprep.subr.mxu0 0.0
      %2470 = vmatpush2.msra.mxu0 0.0
      %2471 = vmatprep.subr.mxu0 0.0
      %2472 = vmatpush2.msra.mxu0 0.0
      %2473 = vmatprep.subr.mxu0 0.0
      %2474 = vmatpush2.msra.mxu0 0.0
      %2475 = vmatprep.subr.mxu0 0.0
      %2476 = vmatpush2.msra.mxu0 0.0
      %2477 = vmatprep.subr.mxu0 0.0
      %2478 = vmatpush2.msra.mxu0 0.0
      %2479 = vmatprep.subr.mxu0 0.0
      %2480 = vmatpush2.msra.mxu0 0.0
      %2481 = vmatprep.subr.mxu0 0.0
      %2482 = vmatpush2.msra.mxu0 0.0
      %2483 = vmatprep.subr.mxu0 0.0
      %2484 = vmatpush2.msra.mxu0 0.0
      %2485 = vmatprep.subr.mxu0 0.0
      %2486 = vmatpush2.msra.mxu0 0.0
      %2487 = vmatprep.subr.mxu0 0.0
      %2488 = vmatpush2.msra.mxu0 0.0
      %2489 = vmatprep.subr.mxu0 0.0
      %2490 = vmatpush2.msra.mxu0 0.0
      %2491 = vmatprep.subr.mxu0 0.0
      %2492 = vmatpush2.msra.mxu0 0.0
      %2493 = vmatprep.subr.mxu0 0.0
      %2494 = vmatpush2.msra.mxu0 0.0
      %2495 = vmatprep.mubr.f32.mxu0 0.0
      %2496 = vmatmul.mubr.f32.gmra.mxu0 %v2333
      %v2497 = vpop.f32.mrf.mxu0
      %v2498 = vadd.f32 0.0, %v2497
      %v2499 = vpop.f32.mrf.mxu0
      %2500 = vmatprep.mubr.f32.mxu0 0.0
      %2501 = vmatmul.mubr.f32.gmra.mxu0 %v2336
      %v2502 = vpop.f32.mrf.mxu0
      %v2503 = vadd.f32 0.0, %v2502
      %v2504 = vpop.f32.mrf.mxu0
      %2505 = vmatprep.mubr.f32.mxu0 0.0
      %2506 = vmatmul.mubr.f32.gmra.mxu0 %v2339
      %v2507 = vpop.f32.mrf.mxu0
      %v2508 = vadd.f32 0.0, %v2507
      %v2509 = vpop.f32.mrf.mxu0
      %2510 = vmatprep.mubr.f32.mxu0 0.0
      %2511 = vmatmul.mubr.f32.gmra.mxu0 %v2342
      %v2512 = vpop.f32.mrf.mxu0
      %v2513 = vadd.f32 0.0, %v2512
      %v2514 = vpop.f32.mrf.mxu0
      %2515 = vmatprep.mubr.f32.mxu0 0.0
      %2516 = vmatmul.mubr.f32.gmra.mxu0 %v2345
      %v2517 = vpop.f32.mrf.mxu0
      %v2518 = vadd.f32 0.0, %v2517
      %v2519 = vpop.f32.mrf.mxu0
      %2520 = vmatprep.mubr.f32.mxu0 0.0
      %2521 = vmatmul.mubr.f32.gmra.mxu0 %v2348
      %v2522 = vpop.f32.mrf.mxu0
      %v2523 = vadd.f32 0.0, %v2522
      %v2524 = vpop.f32.mrf.mxu0
      %2525 = vmatprep.mubr.f32.mxu0 0.0
      %2526 = vmatmul.mubr.f32.gmra.mxu0 %v2351
      %v2527 = vpop.f32.mrf.mxu0
      %v2528 = vadd.f32 0.0, %v2527
      %v2529 = vpop.f32.mrf.mxu0
      %2530 = vmatprep.mubr.f32.mxu0 0.0
      %2531 = vmatmul.mubr.f32.gmra.mxu0 %v2354
      %v2532 = vpop.f32.mrf.mxu0
      %v2533 = vadd.f32 0.0, %v2532
      %v2534 = vpop.f32.mrf.mxu0
      %2535 = vmatprep.mubr.f32.mxu0 0.0
      %2536 = vmatmul.mubr.f32.gmra.mxu0 %v2357
      %v2537 = vpop.f32.mrf.mxu0
      %v2538 = vadd.f32 0.0, %v2537
      %v2539 = vpop.f32.mrf.mxu0
      %2540 = vmatprep.mubr.f32.mxu0 0.0
      %2541 = vmatmul.mubr.f32.gmra.mxu0 %v2360
      %v2542 = vpop.f32.mrf.mxu0
      %v2543 = vadd.f32 0.0, %v2542
      %v2544 = vpop.f32.mrf.mxu0
      %2545 = vmatprep.mubr.f32.mxu0 0.0
      %2546 = vmatmul.mubr.f32.gmra.mxu0 %v2363
      %v2547 = vpop.f32.mrf.mxu0
      %v2548 = vadd.f32 0.0, %v2547
      %v2549 = vpop.f32.mrf.mxu0
      %2550 = vmatprep.mubr.f32.mxu0 0.0
      %2551 = vmatmul.mubr.f32.gmra.mxu0 %v2366
      %v2552 = vpop.f32.mrf.mxu0
      %v2553 = vadd.f32 0.0, %v2552
      %v2554 = vpop.f32.mrf.mxu0
      %2555 = vmatprep.mubr.f32.mxu0 0.0
      %2556 = vmatmul.mubr.f32.gmra.mxu0 %v2369
      %v2557 = vpop.f32.mrf.mxu0
      %v2558 = vadd.f32 0.0, %v2557
      %v2559 = vpop.f32.mrf.mxu0
      %2560 = vmatprep.mubr.f32.mxu0 0.0
      %2561 = vmatmul.mubr.f32.gmra.mxu0 %v2372
      %v2562 = vpop.f32.mrf.mxu0
      %v2563 = vadd.f32 0.0, %v2562
      %v2564 = vpop.f32.mrf.mxu0
      %2565 = vmatprep.mubr.f32.mxu0 0.0
      %2566 = vmatmul.mubr.f32.gmra.mxu0 %v2375
      %v2567 = vpop.f32.mrf.mxu0
      %v2568 = vadd.f32 0.0, %v2567
      %v2569 = vpop.f32.mrf.mxu0
      %2570 = vmatprep.mubr.f32.mxu0 0.0
      %2571 = vmatmul.mubr.f32.gmra.mxu0 %v2378
      %v2572 = vpop.f32.mrf.mxu0
      %v2573 = vadd.f32 0.0, %v2572
      %v2574 = vpop.f32.mrf.mxu0
      %2575 = vmatprep.mubr.f32.mxu0 0.0
      %2576 = vmatmul.mubr.f32.gmra.mxu0 %v2381
      %v2577 = vpop.f32.mrf.mxu0
      %v2578 = vadd.f32 0.0, %v2577
      %v2579 = vpop.f32.mrf.mxu0
      %2580 = vmatprep.mubr.f32.mxu0 0.0
      %2581 = vmatmul.mubr.f32.gmra.mxu0 %v2384
      %v2582 = vpop.f32.mrf.mxu0
      %v2583 = vadd.f32 0.0, %v2582
      %v2584 = vpop.f32.mrf.mxu0
      %2585 = vmatprep.mubr.f32.mxu0 0.0
      %2586 = vmatmul.mubr.f32.gmra.mxu0 %v2387
      %v2587 = vpop.f32.mrf.mxu0
      %v2588 = vadd.f32 0.0, %v2587
      %v2589 = vpop.f32.mrf.mxu0
      %2590 = vmatprep.mubr.f32.mxu0 0.0
      %2591 = vmatmul.mubr.f32.gmra.mxu0 %v2390
      %v2592 = vpop.f32.mrf.mxu0
      %v2593 = vadd.f32 0.0, %v2592
      %v2594 = vpop.f32.mrf.mxu0
      %2595 = vmatprep.mubr.f32.mxu0 0.0
      %2596 = vmatmul.mubr.f32.gmra.mxu0 %v2393
      %v2597 = vpop.f32.mrf.mxu0
      %v2598 = vadd.f32 0.0, %v2597
      %v2599 = vpop.f32.mrf.mxu0
      %2600 = vmatprep.mubr.f32.mxu0 0.0
      %2601 = vmatmul.mubr.f32.gmra.mxu0 %v2396
      %v2602 = vpop.f32.mrf.mxu0
      %v2603 = vadd.f32 0.0, %v2602
      %v2604 = vpop.f32.mrf.mxu0
      %2605 = vmatprep.mubr.f32.mxu0 0.0
      %2606 = vmatmul.mubr.f32.gmra.mxu0 %v2399
      %v2607 = vpop.f32.mrf.mxu0
      %v2608 = vadd.f32 0.0, %v2607
      %v2609 = vpop.f32.mrf.mxu0
      %2610 = vmatprep.mubr.f32.mxu0 0.0
      %2611 = vmatmul.mubr.f32.gmra.mxu0 %v2402
      %v2612 = vpop.f32.mrf.mxu0
      %v2613 = vadd.f32 0.0, %v2612
      %v2614 = vpop.f32.mrf.mxu0
      %2615 = vmatprep.mubr.f32.mxu0 0.0
      %2616 = vmatmul.mubr.f32.gmra.mxu0 %v2405
      %v2617 = vpop.f32.mrf.mxu0
      %v2618 = vadd.f32 0.0, %v2617
      %v2619 = vpop.f32.mrf.mxu0
      %2620 = vmatprep.mubr.f32.mxu0 0.0
      %2621 = vmatmul.mubr.f32.gmra.mxu0 %v2408
      %v2622 = vpop.f32.mrf.mxu0
      %v2623 = vadd.f32 0.0, %v2622
      %v2624 = vpop.f32.mrf.mxu0
      %2625 = vmatprep.mubr.f32.mxu0 0.0
      %2626 = vmatmul.mubr.f32.gmra.mxu0 %v2411
      %v2627 = vpop.f32.mrf.mxu0
      %v2628 = vadd.f32 0.0, %v2627
      %v2629 = vpop.f32.mrf.mxu0
      %2630 = vmatprep.mubr.f32.mxu0 0.0
      %2631 = vmatmul.mubr.f32.gmra.mxu0 %v2414
      %v2632 = vpop.f32.mrf.mxu0
      %v2633 = vadd.f32 0.0, %v2632
      %v2634 = vpop.f32.mrf.mxu0
      %2635 = vmatprep.mubr.f32.mxu0 0.0
      %2636 = vmatmul.mubr.f32.gmra.mxu0 %v2417
      %v2637 = vpop.f32.mrf.mxu0
      %v2638 = vadd.f32 0.0, %v2637
      %v2639 = vpop.f32.mrf.mxu0
      %2640 = vmatprep.mubr.f32.mxu0 0.0
      %2641 = vmatmul.mubr.f32.gmra.mxu0 %v2420
      %v2642 = vpop.f32.mrf.mxu0
      %v2643 = vadd.f32 0.0, %v2642
      %v2644 = vpop.f32.mrf.mxu0
      %2645 = vmatprep.mubr.f32.mxu0 0.0
      %2646 = vmatmul.mubr.f32.gmra.mxu0 %v2423
      %v2647 = vpop.f32.mrf.mxu0
      %v2648 = vadd.f32 0.0, %v2647
      %v2649 = vpop.f32.mrf.mxu0
      %2650 = vmatprep.mubr.f32.mxu0 0.0
      %2651 = vmatmul.mubr.f32.gmra.mxu0 %v2426
      %v2652 = vpop.f32.mrf.mxu0
      %v2653 = vadd.f32 0.0, %v2652
      %v2654 = vpop.f32.mrf.mxu0
      %2655 = vdwg.mxu0
      %v2656 = vadd.f32 %v2234, %v2498
      %v2657 = vadd.f32 %v2235, %v2503
      %v2658 = vadd.f32 %v2236, %v2508
      %v2659 = vadd.f32 %v2237, %v2513
      %v2660 = vadd.f32 %v2238, %v2518
      %v2661 = vadd.f32 %v2239, %v2523
      %v2662 = vadd.f32 %v2240, %v2528
      %v2663 = vadd.f32 %v2241, %v2533
      %v2664 = vadd.f32 %v2242, %v2538
      %v2665 = vadd.f32 %v2243, %v2543
      %v2666 = vadd.f32 %v2244, %v2548
      %v2667 = vadd.f32 %v2245, %v2553
      %v2668 = vadd.f32 %v2246, %v2558
      %v2669 = vadd.f32 %v2247, %v2563
      %v2670 = vadd.f32 %v2248, %v2568
      %v2671 = vadd.f32 %v2249, %v2573
      %v2672 = vadd.f32 %v2250, %v2578
      %v2673 = vadd.f32 %v2251, %v2583
      %v2674 = vadd.f32 %v2252, %v2588
      %v2675 = vadd.f32 %v2253, %v2593
      %v2676 = vadd.f32 %v2254, %v2598
      %v2677 = vadd.f32 %v2255, %v2603
      %v2678 = vadd.f32 %v2256, %v2608
      %v2679 = vadd.f32 %v2257, %v2613
      %v2680 = vadd.f32 %v2258, %v2618
      %v2681 = vadd.f32 %v2259, %v2623
      %v2682 = vadd.f32 %v2260, %v2628
      %v2683 = vadd.f32 %v2261, %v2633
      %v2684 = vadd.f32 %v2262, %v2638
      %v2685 = vadd.f32 %v2263, %v2643
      %v2686 = vadd.f32 %v2264, %v2648
      %v2687 = vadd.f32 %v2265, %v2653
      %v2688 = vld [vmem:[#allocation2 + $0x18] sm:$0xff]
      %v2689 = vld [vmem:[#allocation2 + $0x20] sm:$0xff]
      %v2690 = vld [vmem:[#allocation2 + $0x28] sm:$0xff]
      %v2691 = vld [vmem:[#allocation2 + $0x30] sm:$0xff]
      %v2692 = vld [vmem:[#allocation2 + $0x38] sm:$0xff]
      %v2693 = vld [vmem:[#allocation2 + $0x40] sm:$0xff]
      %v2694 = vld [vmem:[#allocation2 + $0x48] sm:$0xff]
      %v2695 = vld [vmem:[#allocation2 + $0x50] sm:$0xff]
      %v2696 = vld [vmem:[#allocation2 + $0x58] sm:$0xff]
      %v2697 = vld [vmem:[#allocation2 + $0x60] sm:$0xff]
      %v2698 = vld [vmem:[#allocation2 + $0x68] sm:$0xff]
      %v2699 = vld [vmem:[#allocation2 + $0x70] sm:$0xff]
      %v2700 = vld [vmem:[#allocation2 + $0x78] sm:$0xff]
      %v2701 = vld [vmem:[#allocation2 + $0x80] sm:$0xff]
      %v2702 = vld [vmem:[#allocation2 + $0x88] sm:$0xff]
      %v2703 = vld [vmem:[#allocation2 + $0x90] sm:$0xff]
      %v2704 = vld [vmem:[#allocation2 + $0x98] sm:$0xff]
      %v2705 = vld [vmem:[#allocation2 + $0xa0] sm:$0xff]
      %v2706 = vld [vmem:[#allocation2 + $0xa8] sm:$0xff]
      %v2707 = vld [vmem:[#allocation2 + $0xb0] sm:$0xff]
      %v2708 = vld [vmem:[#allocation2 + $0xb8] sm:$0xff]
      %v2709 = vld [vmem:[#allocation2 + $0xc0] sm:$0xff]
      %v2710 = vld [vmem:[#allocation2 + $0xc8] sm:$0xff]
      %v2711 = vld [vmem:[#allocation2 + $0xd0] sm:$0xff]
      %v2712 = vld [vmem:[#allocation2 + $0xd8] sm:$0xff]
      %v2713 = vld [vmem:[#allocation2 + $0xe0] sm:$0xff]
      %v2714 = vld [vmem:[#allocation2 + $0xe8] sm:$0xff]
      %v2715 = vld [vmem:[#allocation2 + $0xf0] sm:$0xff]
      %v2716 = vld [vmem:[#allocation2 + $0xf8] sm:$0xff]
      %v2717 = vld [vmem:[#allocation2 + $0x100] sm:$0xff]
      %v2718 = vld [vmem:[#allocation2 + $0x108] sm:$0xff]
      %v2719 = vld [vmem:[#allocation2 + $0x110] sm:$0xff]
      %s2720 = scalar_lea.vmem %s3, 16
      %v2721 = vld [vmem:[%s2720] sm:$0xf]
      %v2723 = vsel %vm373, %v2688, 0
      %v2726 = vsel %vm373, %v2689, 0
      %v2729 = vsel %vm373, %v2690, 0
      %v2732 = vsel %vm373, %v2691, 0
      %v2735 = vsel %vm373, %v2692, 0
      %v2738 = vsel %vm373, %v2693, 0
      %v2741 = vsel %vm373, %v2694, 0
      %v2744 = vsel %vm373, %v2695, 0
      %v2747 = vsel %vm373, %v2696, 0
      %v2750 = vsel %vm373, %v2697, 0
      %v2753 = vsel %vm373, %v2698, 0
      %v2756 = vsel %vm373, %v2699, 0
      %v2759 = vsel %vm373, %v2700, 0
      %v2762 = vsel %vm373, %v2701, 0
      %v2765 = vsel %vm373, %v2702, 0
      %v2768 = vsel %vm373, %v2703, 0
      %v2771 = vsel %vm373, %v2704, 0
      %v2774 = vsel %vm373, %v2705, 0
      %v2777 = vsel %vm373, %v2706, 0
      %v2780 = vsel %vm373, %v2707, 0
      %v2783 = vsel %vm373, %v2708, 0
      %v2786 = vsel %vm373, %v2709, 0
      %v2789 = vsel %vm373, %v2710, 0
      %v2792 = vsel %vm373, %v2711, 0
      %v2795 = vsel %vm373, %v2712, 0
      %v2798 = vsel %vm373, %v2713, 0
      %v2801 = vsel %vm373, %v2714, 0
      %v2804 = vsel %vm373, %v2715, 0
      %v2807 = vsel %vm373, %v2716, 0
      %v2810 = vsel %vm373, %v2717, 0
      %v2813 = vsel %vm373, %v2718, 0
      %v2816 = vsel %vm373, %v2719, 0
      %v2819 = vsel %vm470, %v2721, 0
      %2821 = vmatprep.subr.mxu0 0.0
      %2822 = vmatpush1.msra.mxu0 0.0
      %2823 = vmatprep.subr.mxu0 0.0
      %2824 = vmatpush1.msra.mxu0 0.0
      %2825 = vmatprep.subr.mxu0 0.0
      %2826 = vmatpush1.msra.mxu0 0.0
      %2827 = vmatprep.subr.mxu0 0.0
      %2828 = vmatpush1.msra.mxu0 0.0
      %2829 = vmatprep.subr.mxu0 0.0
      %2830 = vmatpush1.msra.mxu0 0.0
      %2831 = vmatprep.subr.mxu0 0.0
      %2832 = vmatpush1.msra.mxu0 0.0
      %2833 = vmatprep.subr.mxu0 0.0
      %2834 = vmatpush1.msra.mxu0 0.0
      %2835 = vmatprep.subr.mxu0 0.0
      %2836 = vmatpush1.msra.mxu0 0.0
      %2837 = vmatprep.subr.mxu0 0.0
      %2838 = vmatpush1.msra.mxu0 0.0
      %2839 = vmatprep.subr.mxu0 0.0
      %2840 = vmatpush1.msra.mxu0 0.0
      %2841 = vmatprep.subr.mxu0 0.0
      %2842 = vmatpush1.msra.mxu0 0.0
      %2843 = vmatprep.subr.mxu0 0.0
      %2844 = vmatpush1.msra.mxu0 0.0
      %2845 = vmatprep.subr.mxu0 0.0
      %2846 = vmatpush1.msra.mxu0 0.0
      %2847 = vmatprep.subr.mxu0 0.0
      %2848 = vmatpush1.msra.mxu0 0.0
      %2849 = vmatprep.subr.mxu0 0.0
      %2850 = vmatpush1.msra.mxu0 0.0
      %2851 = vmatprep.subr.mxu0 0.0
      %2852 = vmatpush1.msra.mxu0 %v2819
      %2853 = vmatprep.subr.mxu0 0.0
      %2854 = vmatpush2.msra.mxu0 0.0
      %2855 = vmatprep.subr.mxu0 0.0
      %2856 = vmatpush2.msra.mxu0 0.0
      %2857 = vmatprep.subr.mxu0 0.0
      %2858 = vmatpush2.msra.mxu0 0.0
      %2859 = vmatprep.subr.mxu0 0.0
      %2860 = vmatpush2.msra.mxu0 0.0
      %2861 = vmatprep.subr.mxu0 0.0
      %2862 = vmatpush2.msra.mxu0 0.0
      %2863 = vmatprep.subr.mxu0 0.0
      %2864 = vmatpush2.msra.mxu0 0.0
      %2865 = vmatprep.subr.mxu0 0.0
      %2866 = vmatpush2.msra.mxu0 0.0
      %2867 = vmatprep.subr.mxu0 0.0
      %2868 = vmatpush2.msra.mxu0 0.0
      %2869 = vmatprep.subr.mxu0 0.0
      %2870 = vmatpush2.msra.mxu0 0.0
      %2871 = vmatprep.subr.mxu0 0.0
      %2872 = vmatpush2.msra.mxu0 0.0
      %2873 = vmatprep.subr.mxu0 0.0
      %2874 = vmatpush2.msra.mxu0 0.0
      %2875 = vmatprep.subr.mxu0 0.0
      %2876 = vmatpush2.msra.mxu0 0.0
      %2877 = vmatprep.subr.mxu0 0.0
      %2878 = vmatpush2.msra.mxu0 0.0
      %2879 = vmatprep.subr.mxu0 0.0
      %2880 = vmatpush2.msra.mxu0 0.0
      %2881 = vmatprep.subr.mxu0 0.0
      %2882 = vmatpush2.msra.mxu0 0.0
      %2883 = vmatprep.subr.mxu0 0.0
      %2884 = vmatpush2.msra.mxu0 0.0
      %2885 = vmatprep.mubr.f32.mxu0 0.0
      %2886 = vmatmul.mubr.f32.gmra.mxu0 %v2723
      %v2887 = vpop.f32.mrf.mxu0
      %v2888 = vadd.f32 0.0, %v2887
      %v2889 = vpop.f32.mrf.mxu0
      %2890 = vmatprep.mubr.f32.mxu0 0.0
      %2891 = vmatmul.mubr.f32.gmra.mxu0 %v2726
      %v2892 = vpop.f32.mrf.mxu0
      %v2893 = vadd.f32 0.0, %v2892
      %v2894 = vpop.f32.mrf.mxu0
      %2895 = vmatprep.mubr.f32.mxu0 0.0
      %2896 = vmatmul.mubr.f32.gmra.mxu0 %v2729
      %v2897 = vpop.f32.mrf.mxu0
      %v2898 = vadd.f32 0.0, %v2897
      %v2899 = vpop.f32.mrf.mxu0
      %2900 = vmatprep.mubr.f32.mxu0 0.0
      %2901 = vmatmul.mubr.f32.gmra.mxu0 %v2732
      %v2902 = vpop.f32.mrf.mxu0
      %v2903 = vadd.f32 0.0, %v2902
      %v2904 = vpop.f32.mrf.mxu0
      %2905 = vmatprep.mubr.f32.mxu0 0.0
      %2906 = vmatmul.mubr.f32.gmra.mxu0 %v2735
      %v2907 = vpop.f32.mrf.mxu0
      %v2908 = vadd.f32 0.0, %v2907
      %v2909 = vpop.f32.mrf.mxu0
      %2910 = vmatprep.mubr.f32.mxu0 0.0
      %2911 = vmatmul.mubr.f32.gmra.mxu0 %v2738
      %v2912 = vpop.f32.mrf.mxu0
      %v2913 = vadd.f32 0.0, %v2912
      %v2914 = vpop.f32.mrf.mxu0
      %2915 = vmatprep.mubr.f32.mxu0 0.0
      %2916 = vmatmul.mubr.f32.gmra.mxu0 %v2741
      %v2917 = vpop.f32.mrf.mxu0
      %v2918 = vadd.f32 0.0, %v2917
      %v2919 = vpop.f32.mrf.mxu0
      %2920 = vmatprep.mubr.f32.mxu0 0.0
      %2921 = vmatmul.mubr.f32.gmra.mxu0 %v2744
      %v2922 = vpop.f32.mrf.mxu0
      %v2923 = vadd.f32 0.0, %v2922
      %v2924 = vpop.f32.mrf.mxu0
      %2925 = vmatprep.mubr.f32.mxu0 0.0
      %2926 = vmatmul.mubr.f32.gmra.mxu0 %v2747
      %v2927 = vpop.f32.mrf.mxu0
      %v2928 = vadd.f32 0.0, %v2927
      %v2929 = vpop.f32.mrf.mxu0
      %2930 = vmatprep.mubr.f32.mxu0 0.0
      %2931 = vmatmul.mubr.f32.gmra.mxu0 %v2750
      %v2932 = vpop.f32.mrf.mxu0
      %v2933 = vadd.f32 0.0, %v2932
      %v2934 = vpop.f32.mrf.mxu0
      %2935 = vmatprep.mubr.f32.mxu0 0.0
      %2936 = vmatmul.mubr.f32.gmra.mxu0 %v2753
      %v2937 = vpop.f32.mrf.mxu0
      %v2938 = vadd.f32 0.0, %v2937
      %v2939 = vpop.f32.mrf.mxu0
      %2940 = vmatprep.mubr.f32.mxu0 0.0
      %2941 = vmatmul.mubr.f32.gmra.mxu0 %v2756
      %v2942 = vpop.f32.mrf.mxu0
      %v2943 = vadd.f32 0.0, %v2942
      %v2944 = vpop.f32.mrf.mxu0
      %2945 = vmatprep.mubr.f32.mxu0 0.0
      %2946 = vmatmul.mubr.f32.gmra.mxu0 %v2759
      %v2947 = vpop.f32.mrf.mxu0
      %v2948 = vadd.f32 0.0, %v2947
      %v2949 = vpop.f32.mrf.mxu0
      %2950 = vmatprep.mubr.f32.mxu0 0.0
      %2951 = vmatmul.mubr.f32.gmra.mxu0 %v2762
      %v2952 = vpop.f32.mrf.mxu0
      %v2953 = vadd.f32 0.0, %v2952
      %v2954 = vpop.f32.mrf.mxu0
      %2955 = vmatprep.mubr.f32.mxu0 0.0
      %2956 = vmatmul.mubr.f32.gmra.mxu0 %v2765
      %v2957 = vpop.f32.mrf.mxu0
      %v2958 = vadd.f32 0.0, %v2957
      %v2959 = vpop.f32.mrf.mxu0
      %2960 = vmatprep.mubr.f32.mxu0 0.0
      %2961 = vmatmul.mubr.f32.gmra.mxu0 %v2768
      %v2962 = vpop.f32.mrf.mxu0
      %v2963 = vadd.f32 0.0, %v2962
      %v2964 = vpop.f32.mrf.mxu0
      %2965 = vmatprep.mubr.f32.mxu0 0.0
      %2966 = vmatmul.mubr.f32.gmra.mxu0 %v2771
      %v2967 = vpop.f32.mrf.mxu0
      %v2968 = vadd.f32 0.0, %v2967
      %v2969 = vpop.f32.mrf.mxu0
      %2970 = vmatprep.mubr.f32.mxu0 0.0
      %2971 = vmatmul.mubr.f32.gmra.mxu0 %v2774
      %v2972 = vpop.f32.mrf.mxu0
      %v2973 = vadd.f32 0.0, %v2972
      %v2974 = vpop.f32.mrf.mxu0
      %2975 = vmatprep.mubr.f32.mxu0 0.0
      %2976 = vmatmul.mubr.f32.gmra.mxu0 %v2777
      %v2977 = vpop.f32.mrf.mxu0
      %v2978 = vadd.f32 0.0, %v2977
      %v2979 = vpop.f32.mrf.mxu0
      %2980 = vmatprep.mubr.f32.mxu0 0.0
      %2981 = vmatmul.mubr.f32.gmra.mxu0 %v2780
      %v2982 = vpop.f32.mrf.mxu0
      %v2983 = vadd.f32 0.0, %v2982
      %v2984 = vpop.f32.mrf.mxu0
      %2985 = vmatprep.mubr.f32.mxu0 0.0
      %2986 = vmatmul.mubr.f32.gmra.mxu0 %v2783
      %v2987 = vpop.f32.mrf.mxu0
      %v2988 = vadd.f32 0.0, %v2987
      %v2989 = vpop.f32.mrf.mxu0
      %2990 = vmatprep.mubr.f32.mxu0 0.0
      %2991 = vmatmul.mubr.f32.gmra.mxu0 %v2786
      %v2992 = vpop.f32.mrf.mxu0
      %v2993 = vadd.f32 0.0, %v2992
      %v2994 = vpop.f32.mrf.mxu0
      %2995 = vmatprep.mubr.f32.mxu0 0.0
      %2996 = vmatmul.mubr.f32.gmra.mxu0 %v2789
      %v2997 = vpop.f32.mrf.mxu0
      %v2998 = vadd.f32 0.0, %v2997
      %v2999 = vpop.f32.mrf.mxu0
      %3000 = vmatprep.mubr.f32.mxu0 0.0
      %3001 = vmatmul.mubr.f32.gmra.mxu0 %v2792
      %v3002 = vpop.f32.mrf.mxu0
      %v3003 = vadd.f32 0.0, %v3002
      %v3004 = vpop.f32.mrf.mxu0
      %3005 = vmatprep.mubr.f32.mxu0 0.0
      %3006 = vmatmul.mubr.f32.gmra.mxu0 %v2795
      %v3007 = vpop.f32.mrf.mxu0
      %v3008 = vadd.f32 0.0, %v3007
      %v3009 = vpop.f32.mrf.mxu0
      %3010 = vmatprep.mubr.f32.mxu0 0.0
      %3011 = vmatmul.mubr.f32.gmra.mxu0 %v2798
      %v3012 = vpop.f32.mrf.mxu0
      %v3013 = vadd.f32 0.0, %v3012
      %v3014 = vpop.f32.mrf.mxu0
      %3015 = vmatprep.mubr.f32.mxu0 0.0
      %3016 = vmatmul.mubr.f32.gmra.mxu0 %v2801
      %v3017 = vpop.f32.mrf.mxu0
      %v3018 = vadd.f32 0.0, %v3017
      %v3019 = vpop.f32.mrf.mxu0
      %3020 = vmatprep.mubr.f32.mxu0 0.0
      %3021 = vmatmul.mubr.f32.gmra.mxu0 %v2804
      %v3022 = vpop.f32.mrf.mxu0
      %v3023 = vadd.f32 0.0, %v3022
      %v3024 = vpop.f32.mrf.mxu0
      %3025 = vmatprep.mubr.f32.mxu0 0.0
      %3026 = vmatmul.mubr.f32.gmra.mxu0 %v2807
      %v3027 = vpop.f32.mrf.mxu0
      %v3028 = vadd.f32 0.0, %v3027
      %v3029 = vpop.f32.mrf.mxu0
      %3030 = vmatprep.mubr.f32.mxu0 0.0
      %3031 = vmatmul.mubr.f32.gmra.mxu0 %v2810
      %v3032 = vpop.f32.mrf.mxu0
      %v3033 = vadd.f32 0.0, %v3032
      %v3034 = vpop.f32.mrf.mxu0
      %3035 = vmatprep.mubr.f32.mxu0 0.0
      %3036 = vmatmul.mubr.f32.gmra.mxu0 %v2813
      %v3037 = vpop.f32.mrf.mxu0
      %v3038 = vadd.f32 0.0, %v3037
      %v3039 = vpop.f32.mrf.mxu0
      %3040 = vmatprep.mubr.f32.mxu0 0.0
      %3041 = vmatmul.mubr.f32.gmra.mxu0 %v2816
      %v3042 = vpop.f32.mrf.mxu0
      %v3043 = vadd.f32 0.0, %v3042
      %v3044 = vpop.f32.mrf.mxu0
      %3045 = vdwg.mxu0
      %v3046 = vadd.f32 %v2656, %v2888
      %v3047 = vadd.f32 %v2657, %v2893
      %v3048 = vadd.f32 %v2658, %v2898
      %v3049 = vadd.f32 %v2659, %v2903
      %v3050 = vadd.f32 %v2660, %v2908
      %v3051 = vadd.f32 %v2661, %v2913
      %v3052 = vadd.f32 %v2662, %v2918
      %v3053 = vadd.f32 %v2663, %v2923
      %v3054 = vadd.f32 %v2664, %v2928
      %v3055 = vadd.f32 %v2665, %v2933
      %v3056 = vadd.f32 %v2666, %v2938
      %v3057 = vadd.f32 %v2667, %v2943
      %v3058 = vadd.f32 %v2668, %v2948
      %v3059 = vadd.f32 %v2669, %v2953
      %v3060 = vadd.f32 %v2670, %v2958
      %v3061 = vadd.f32 %v2671, %v2963
      %v3062 = vadd.f32 %v2672, %v2968
      %v3063 = vadd.f32 %v2673, %v2973
      %v3064 = vadd.f32 %v2674, %v2978
      %v3065 = vadd.f32 %v2675, %v2983
      %v3066 = vadd.f32 %v2676, %v2988
      %v3067 = vadd.f32 %v2677, %v2993
      %v3068 = vadd.f32 %v2678, %v2998
      %v3069 = vadd.f32 %v2679, %v3003
      %v3070 = vadd.f32 %v2680, %v3008
      %v3071 = vadd.f32 %v2681, %v3013
      %v3072 = vadd.f32 %v2682, %v3018
      %v3073 = vadd.f32 %v2683, %v3023
      %v3074 = vadd.f32 %v2684, %v3028
      %v3075 = vadd.f32 %v2685, %v3033
      %v3076 = vadd.f32 %v2686, %v3038
      %v3077 = vadd.f32 %v2687, %v3043
      %v3078 = vld [vmem:[#allocation2 + $0x19] sm:$0xff]
      %v3079 = vld [vmem:[#allocation2 + $0x21] sm:$0xff]
      %v3080 = vld [vmem:[#allocation2 + $0x29] sm:$0xff]
      %v3081 = vld [vmem:[#allocation2 + $0x31] sm:$0xff]
      %v3082 = vld [vmem:[#allocation2 + $0x39] sm:$0xff]
      %v3083 = vld [vmem:[#allocation2 + $0x41] sm:$0xff]
      %v3084 = vld [vmem:[#allocation2 + $0x49] sm:$0xff]
      %v3085 = vld [vmem:[#allocation2 + $0x51] sm:$0xff]
      %v3086 = vld [vmem:[#allocation2 + $0x59] sm:$0xff]
      %v3087 = vld [vmem:[#allocation2 + $0x61] sm:$0xff]
      %v3088 = vld [vmem:[#allocation2 + $0x69] sm:$0xff]
      %v3089 = vld [vmem:[#allocation2 + $0x71] sm:$0xff]
      %v3090 = vld [vmem:[#allocation2 + $0x79] sm:$0xff]
      %v3091 = vld [vmem:[#allocation2 + $0x81] sm:$0xff]
      %v3092 = vld [vmem:[#allocation2 + $0x89] sm:$0xff]
      %v3093 = vld [vmem:[#allocation2 + $0x91] sm:$0xff]
      %v3094 = vld [vmem:[#allocation2 + $0x99] sm:$0xff]
      %v3095 = vld [vmem:[#allocation2 + $0xa1] sm:$0xff]
      %v3096 = vld [vmem:[#allocation2 + $0xa9] sm:$0xff]
      %v3097 = vld [vmem:[#allocation2 + $0xb1] sm:$0xff]
      %v3098 = vld [vmem:[#allocation2 + $0xb9] sm:$0xff]
      %v3099 = vld [vmem:[#allocation2 + $0xc1] sm:$0xff]
      %v3100 = vld [vmem:[#allocation2 + $0xc9] sm:$0xff]
      %v3101 = vld [vmem:[#allocation2 + $0xd1] sm:$0xff]
      %v3102 = vld [vmem:[#allocation2 + $0xd9] sm:$0xff]
      %v3103 = vld [vmem:[#allocation2 + $0xe1] sm:$0xff]
      %v3104 = vld [vmem:[#allocation2 + $0xe9] sm:$0xff]
      %v3105 = vld [vmem:[#allocation2 + $0xf1] sm:$0xff]
      %v3106 = vld [vmem:[#allocation2 + $0xf9] sm:$0xff]
      %v3107 = vld [vmem:[#allocation2 + $0x101] sm:$0xff]
      %v3108 = vld [vmem:[#allocation2 + $0x109] sm:$0xff]
      %v3109 = vld [vmem:[#allocation2 + $0x111] sm:$0xff]
      %v3110 = vsel %vm1844, %v3078, 0.0
      %v3111 = vsel %vm1845, %v3079, 0.0
      %v3112 = vsel %vm1846, %v3080, 0.0
      %v3113 = vsel %vm1847, %v3081, 0.0
      %v3114 = vsel %vm1848, %v3082, 0.0
      %v3115 = vsel %vm1849, %v3083, 0.0
      %v3116 = vsel %vm1850, %v3084, 0.0
      %v3117 = vsel %vm1851, %v3085, 0.0
      %v3118 = vsel %vm1852, %v3086, 0.0
      %v3119 = vsel %vm1853, %v3087, 0.0
      %v3120 = vsel %vm1854, %v3088, 0.0
      %v3121 = vsel %vm1855, %v3089, 0.0
      %v3122 = vsel %vm1856, %v3090, 0.0
      %v3123 = vsel %vm1857, %v3091, 0.0
      %v3124 = vsel %vm1858, %v3092, 0.0
      %v3125 = vsel %vm1859, %v3093, 0.0
      %v3126 = vsel %vm1860, %v3094, 0.0
      %v3127 = vsel %vm1861, %v3095, 0.0
      %v3128 = vsel %vm1862, %v3096, 0.0
      %v3129 = vsel %vm1863, %v3097, 0.0
      %v3130 = vsel %vm1864, %v3098, 0.0
      %v3131 = vsel %vm1865, %v3099, 0.0
      %v3132 = vsel %vm1866, %v3100, 0.0
      %v3133 = vsel %vm1867, %v3101, 0.0
      %v3134 = vsel %vm1868, %v3102, 0.0
      %v3135 = vsel %vm1869, %v3103, 0.0
      %v3136 = vsel %vm1870, %v3104, 0.0
      %v3137 = vsel %vm1871, %v3105, 0.0
      %v3138 = vsel %vm1872, %v3106, 0.0
      %v3139 = vsel %vm1873, %v3107, 0.0
      %v3140 = vsel %vm1874, %v3108, 0.0
      %v3141 = vsel %vm1875, %v3109, 0.0
      %s3142 = scalar_lea.vmem %s3, 20
      %v3143 = vld [vmem:[%s3142] sm:$0xf]
      %v3145 = vsel %vm373, %v3110, 0
      %v3148 = vsel %vm373, %v3111, 0
      %v3151 = vsel %vm373, %v3112, 0
      %v3154 = vsel %vm373, %v3113, 0
      %v3157 = vsel %vm373, %v3114, 0
      %v3160 = vsel %vm373, %v3115, 0
      %v3163 = vsel %vm373, %v3116, 0
      %v3166 = vsel %vm373, %v3117, 0
      %v3169 = vsel %vm373, %v3118, 0
      %v3172 = vsel %vm373, %v3119, 0
      %v3175 = vsel %vm373, %v3120, 0
      %v3178 = vsel %vm373, %v3121, 0
      %v3181 = vsel %vm373, %v3122, 0
      %v3184 = vsel %vm373, %v3123, 0
      %v3187 = vsel %vm373, %v3124, 0
      %v3190 = vsel %vm373, %v3125, 0
      %v3193 = vsel %vm373, %v3126, 0
      %v3196 = vsel %vm373, %v3127, 0
      %v3199 = vsel %vm373, %v3128, 0
      %v3202 = vsel %vm373, %v3129, 0
      %v3205 = vsel %vm373, %v3130, 0
      %v3208 = vsel %vm373, %v3131, 0
      %v3211 = vsel %vm373, %v3132, 0
      %v3214 = vsel %vm373, %v3133, 0
      %v3217 = vsel %vm373, %v3134, 0
      %v3220 = vsel %vm373, %v3135, 0
      %v3223 = vsel %vm373, %v3136, 0
      %v3226 = vsel %vm373, %v3137, 0
      %v3229 = vsel %vm373, %v3138, 0
      %v3232 = vsel %vm373, %v3139, 0
      %v3235 = vsel %vm373, %v3140, 0
      %v3238 = vsel %vm373, %v3141, 0
      %v3241 = vsel %vm470, %v3143, 0
      %3243 = vmatprep.subr.mxu0 0.0
      %3244 = vmatpush1.msra.mxu0 0.0
      %3245 = vmatprep.subr.mxu0 0.0
      %3246 = vmatpush1.msra.mxu0 0.0
      %3247 = vmatprep.subr.mxu0 0.0
      %3248 = vmatpush1.msra.mxu0 0.0
      %3249 = vmatprep.subr.mxu0 0.0
      %3250 = vmatpush1.msra.mxu0 0.0
      %3251 = vmatprep.subr.mxu0 0.0
      %3252 = vmatpush1.msra.mxu0 0.0
      %3253 = vmatprep.subr.mxu0 0.0
      %3254 = vmatpush1.msra.mxu0 0.0
      %3255 = vmatprep.subr.mxu0 0.0
      %3256 = vmatpush1.msra.mxu0 0.0
      %3257 = vmatprep.subr.mxu0 0.0
      %3258 = vmatpush1.msra.mxu0 0.0
      %3259 = vmatprep.subr.mxu0 0.0
      %3260 = vmatpush1.msra.mxu0 0.0
      %3261 = vmatprep.subr.mxu0 0.0
      %3262 = vmatpush1.msra.mxu0 0.0
      %3263 = vmatprep.subr.mxu0 0.0
      %3264 = vmatpush1.msra.mxu0 0.0
      %3265 = vmatprep.subr.mxu0 0.0
      %3266 = vmatpush1.msra.mxu0 0.0
      %3267 = vmatprep.subr.mxu0 0.0
      %3268 = vmatpush1.msra.mxu0 0.0
      %3269 = vmatprep.subr.mxu0 0.0
      %3270 = vmatpush1.msra.mxu0 0.0
      %3271 = vmatprep.subr.mxu0 0.0
      %3272 = vmatpush1.msra.mxu0 0.0
      %3273 = vmatprep.subr.mxu0 0.0
      %3274 = vmatpush1.msra.mxu0 %v3241
      %3275 = vmatprep.subr.mxu0 0.0
      %3276 = vmatpush2.msra.mxu0 0.0
      %3277 = vmatprep.subr.mxu0 0.0
      %3278 = vmatpush2.msra.mxu0 0.0
      %3279 = vmatprep.subr.mxu0 0.0
      %3280 = vmatpush2.msra.mxu0 0.0
      %3281 = vmatprep.subr.mxu0 0.0
      %3282 = vmatpush2.msra.mxu0 0.0
      %3283 = vmatprep.subr.mxu0 0.0
      %3284 = vmatpush2.msra.mxu0 0.0
      %3285 = vmatprep.subr.mxu0 0.0
      %3286 = vmatpush2.msra.mxu0 0.0
      %3287 = vmatprep.subr.mxu0 0.0
      %3288 = vmatpush2.msra.mxu0 0.0
      %3289 = vmatprep.subr.mxu0 0.0
      %3290 = vmatpush2.msra.mxu0 0.0
      %3291 = vmatprep.subr.mxu0 0.0
      %3292 = vmatpush2.msra.mxu0 0.0
      %3293 = vmatprep.subr.mxu0 0.0
      %3294 = vmatpush2.msra.mxu0 0.0
      %3295 = vmatprep.subr.mxu0 0.0
      %3296 = vmatpush2.msra.mxu0 0.0
      %3297 = vmatprep.subr.mxu0 0.0
      %3298 = vmatpush2.msra.mxu0 0.0
      %3299 = vmatprep.subr.mxu0 0.0
      %3300 = vmatpush2.msra.mxu0 0.0
      %3301 = vmatprep.subr.mxu0 0.0
      %3302 = vmatpush2.msra.mxu0 0.0
      %3303 = vmatprep.subr.mxu0 0.0
      %3304 = vmatpush2.msra.mxu0 0.0
      %3305 = vmatprep.subr.mxu0 0.0
      %3306 = vmatpush2.msra.mxu0 0.0
      %3307 = vmatprep.mubr.f32.mxu0 0.0
      %3308 = vmatmul.mubr.f32.gmra.mxu0 %v3145
      %v3309 = vpop.f32.mrf.mxu0
      %v3310 = vadd.f32 0.0, %v3309
      %v3311 = vpop.f32.mrf.mxu0
      %3312 = vmatprep.mubr.f32.mxu0 0.0
      %3313 = vmatmul.mubr.f32.gmra.mxu0 %v3148
      %v3314 = vpop.f32.mrf.mxu0
      %v3315 = vadd.f32 0.0, %v3314
      %v3316 = vpop.f32.mrf.mxu0
      %3317 = vmatprep.mubr.f32.mxu0 0.0
      %3318 = vmatmul.mubr.f32.gmra.mxu0 %v3151
      %v3319 = vpop.f32.mrf.mxu0
      %v3320 = vadd.f32 0.0, %v3319
      %v3321 = vpop.f32.mrf.mxu0
      %3322 = vmatprep.mubr.f32.mxu0 0.0
      %3323 = vmatmul.mubr.f32.gmra.mxu0 %v3154
      %v3324 = vpop.f32.mrf.mxu0
      %v3325 = vadd.f32 0.0, %v3324
      %v3326 = vpop.f32.mrf.mxu0
      %3327 = vmatprep.mubr.f32.mxu0 0.0
      %3328 = vmatmul.mubr.f32.gmra.mxu0 %v3157
      %v3329 = vpop.f32.mrf.mxu0
      %v3330 = vadd.f32 0.0, %v3329
      %v3331 = vpop.f32.mrf.mxu0
      %3332 = vmatprep.mubr.f32.mxu0 0.0
      %3333 = vmatmul.mubr.f32.gmra.mxu0 %v3160
      %v3334 = vpop.f32.mrf.mxu0
      %v3335 = vadd.f32 0.0, %v3334
      %v3336 = vpop.f32.mrf.mxu0
      %3337 = vmatprep.mubr.f32.mxu0 0.0
      %3338 = vmatmul.mubr.f32.gmra.mxu0 %v3163
      %v3339 = vpop.f32.mrf.mxu0
      %v3340 = vadd.f32 0.0, %v3339
      %v3341 = vpop.f32.mrf.mxu0
      %3342 = vmatprep.mubr.f32.mxu0 0.0
      %3343 = vmatmul.mubr.f32.gmra.mxu0 %v3166
      %v3344 = vpop.f32.mrf.mxu0
      %v3345 = vadd.f32 0.0, %v3344
      %v3346 = vpop.f32.mrf.mxu0
      %3347 = vmatprep.mubr.f32.mxu0 0.0
      %3348 = vmatmul.mubr.f32.gmra.mxu0 %v3169
      %v3349 = vpop.f32.mrf.mxu0
      %v3350 = vadd.f32 0.0, %v3349
      %v3351 = vpop.f32.mrf.mxu0
      %3352 = vmatprep.mubr.f32.mxu0 0.0
      %3353 = vmatmul.mubr.f32.gmra.mxu0 %v3172
      %v3354 = vpop.f32.mrf.mxu0
      %v3355 = vadd.f32 0.0, %v3354
      %v3356 = vpop.f32.mrf.mxu0
      %3357 = vmatprep.mubr.f32.mxu0 0.0
      %3358 = vmatmul.mubr.f32.gmra.mxu0 %v3175
      %v3359 = vpop.f32.mrf.mxu0
      %v3360 = vadd.f32 0.0, %v3359
      %v3361 = vpop.f32.mrf.mxu0
      %3362 = vmatprep.mubr.f32.mxu0 0.0
      %3363 = vmatmul.mubr.f32.gmra.mxu0 %v3178
      %v3364 = vpop.f32.mrf.mxu0
      %v3365 = vadd.f32 0.0, %v3364
      %v3366 = vpop.f32.mrf.mxu0
      %3367 = vmatprep.mubr.f32.mxu0 0.0
      %3368 = vmatmul.mubr.f32.gmra.mxu0 %v3181
      %v3369 = vpop.f32.mrf.mxu0
      %v3370 = vadd.f32 0.0, %v3369
      %v3371 = vpop.f32.mrf.mxu0
      %3372 = vmatprep.mubr.f32.mxu0 0.0
      %3373 = vmatmul.mubr.f32.gmra.mxu0 %v3184
      %v3374 = vpop.f32.mrf.mxu0
      %v3375 = vadd.f32 0.0, %v3374
      %v3376 = vpop.f32.mrf.mxu0
      %3377 = vmatprep.mubr.f32.mxu0 0.0
      %3378 = vmatmul.mubr.f32.gmra.mxu0 %v3187
      %v3379 = vpop.f32.mrf.mxu0
      %v3380 = vadd.f32 0.0, %v3379
      %v3381 = vpop.f32.mrf.mxu0
      %3382 = vmatprep.mubr.f32.mxu0 0.0
      %3383 = vmatmul.mubr.f32.gmra.mxu0 %v3190
      %v3384 = vpop.f32.mrf.mxu0
      %v3385 = vadd.f32 0.0, %v3384
      %v3386 = vpop.f32.mrf.mxu0
      %3387 = vmatprep.mubr.f32.mxu0 0.0
      %3388 = vmatmul.mubr.f32.gmra.mxu0 %v3193
      %v3389 = vpop.f32.mrf.mxu0
      %v3390 = vadd.f32 0.0, %v3389
      %v3391 = vpop.f32.mrf.mxu0
      %3392 = vmatprep.mubr.f32.mxu0 0.0
      %3393 = vmatmul.mubr.f32.gmra.mxu0 %v3196
      %v3394 = vpop.f32.mrf.mxu0
      %v3395 = vadd.f32 0.0, %v3394
      %v3396 = vpop.f32.mrf.mxu0
      %3397 = vmatprep.mubr.f32.mxu0 0.0
      %3398 = vmatmul.mubr.f32.gmra.mxu0 %v3199
      %v3399 = vpop.f32.mrf.mxu0
      %v3400 = vadd.f32 0.0, %v3399
      %v3401 = vpop.f32.mrf.mxu0
      %3402 = vmatprep.mubr.f32.mxu0 0.0
      %3403 = vmatmul.mubr.f32.gmra.mxu0 %v3202
      %v3404 = vpop.f32.mrf.mxu0
      %v3405 = vadd.f32 0.0, %v3404
      %v3406 = vpop.f32.mrf.mxu0
      %3407 = vmatprep.mubr.f32.mxu0 0.0
      %3408 = vmatmul.mubr.f32.gmra.mxu0 %v3205
      %v3409 = vpop.f32.mrf.mxu0
      %v3410 = vadd.f32 0.0, %v3409
      %v3411 = vpop.f32.mrf.mxu0
      %3412 = vmatprep.mubr.f32.mxu0 0.0
      %3413 = vmatmul.mubr.f32.gmra.mxu0 %v3208
      %v3414 = vpop.f32.mrf.mxu0
      %v3415 = vadd.f32 0.0, %v3414
      %v3416 = vpop.f32.mrf.mxu0
      %3417 = vmatprep.mubr.f32.mxu0 0.0
      %3418 = vmatmul.mubr.f32.gmra.mxu0 %v3211
      %v3419 = vpop.f32.mrf.mxu0
      %v3420 = vadd.f32 0.0, %v3419
      %v3421 = vpop.f32.mrf.mxu0
      %3422 = vmatprep.mubr.f32.mxu0 0.0
      %3423 = vmatmul.mubr.f32.gmra.mxu0 %v3214
      %v3424 = vpop.f32.mrf.mxu0
      %v3425 = vadd.f32 0.0, %v3424
      %v3426 = vpop.f32.mrf.mxu0
      %3427 = vmatprep.mubr.f32.mxu0 0.0
      %3428 = vmatmul.mubr.f32.gmra.mxu0 %v3217
      %v3429 = vpop.f32.mrf.mxu0
      %v3430 = vadd.f32 0.0, %v3429
      %v3431 = vpop.f32.mrf.mxu0
      %3432 = vmatprep.mubr.f32.mxu0 0.0
      %3433 = vmatmul.mubr.f32.gmra.mxu0 %v3220
      %v3434 = vpop.f32.mrf.mxu0
      %v3435 = vadd.f32 0.0, %v3434
      %v3436 = vpop.f32.mrf.mxu0
      %3437 = vmatprep.mubr.f32.mxu0 0.0
      %3438 = vmatmul.mubr.f32.gmra.mxu0 %v3223
      %v3439 = vpop.f32.mrf.mxu0
      %v3440 = vadd.f32 0.0, %v3439
      %v3441 = vpop.f32.mrf.mxu0
      %3442 = vmatprep.mubr.f32.mxu0 0.0
      %3443 = vmatmul.mubr.f32.gmra.mxu0 %v3226
      %v3444 = vpop.f32.mrf.mxu0
      %v3445 = vadd.f32 0.0, %v3444
      %v3446 = vpop.f32.mrf.mxu0
      %3447 = vmatprep.mubr.f32.mxu0 0.0
      %3448 = vmatmul.mubr.f32.gmra.mxu0 %v3229
      %v3449 = vpop.f32.mrf.mxu0
      %v3450 = vadd.f32 0.0, %v3449
      %v3451 = vpop.f32.mrf.mxu0
      %3452 = vmatprep.mubr.f32.mxu0 0.0
      %3453 = vmatmul.mubr.f32.gmra.mxu0 %v3232
      %v3454 = vpop.f32.mrf.mxu0
      %v3455 = vadd.f32 0.0, %v3454
      %v3456 = vpop.f32.mrf.mxu0
      %3457 = vmatprep.mubr.f32.mxu0 0.0
      %3458 = vmatmul.mubr.f32.gmra.mxu0 %v3235
      %v3459 = vpop.f32.mrf.mxu0
      %v3460 = vadd.f32 0.0, %v3459
      %v3461 = vpop.f32.mrf.mxu0
      %3462 = vmatprep.mubr.f32.mxu0 0.0
      %3463 = vmatmul.mubr.f32.gmra.mxu0 %v3238
      %v3464 = vpop.f32.mrf.mxu0
      %v3465 = vadd.f32 0.0, %v3464
      %v3466 = vpop.f32.mrf.mxu0
      %3467 = vdwg.mxu0
      %v3468 = vadd.f32 %v3046, %v3310
      %v3469 = vadd.f32 %v3047, %v3315
      %v3470 = vadd.f32 %v3048, %v3320
      %v3471 = vadd.f32 %v3049, %v3325
      %v3472 = vadd.f32 %v3050, %v3330
      %v3473 = vadd.f32 %v3051, %v3335
      %v3474 = vadd.f32 %v3052, %v3340
      %v3475 = vadd.f32 %v3053, %v3345
      %v3476 = vadd.f32 %v3054, %v3350
      %v3477 = vadd.f32 %v3055, %v3355
      %v3478 = vadd.f32 %v3056, %v3360
      %v3479 = vadd.f32 %v3057, %v3365
      %v3480 = vadd.f32 %v3058, %v3370
      %v3481 = vadd.f32 %v3059, %v3375
      %v3482 = vadd.f32 %v3060, %v3380
      %v3483 = vadd.f32 %v3061, %v3385
      %v3484 = vadd.f32 %v3062, %v3390
      %v3485 = vadd.f32 %v3063, %v3395
      %v3486 = vadd.f32 %v3064, %v3400
      %v3487 = vadd.f32 %v3065, %v3405
      %v3488 = vadd.f32 %v3066, %v3410
      %v3489 = vadd.f32 %v3067, %v3415
      %v3490 = vadd.f32 %v3068, %v3420
      %v3491 = vadd.f32 %v3069, %v3425
      %v3492 = vadd.f32 %v3070, %v3430
      %v3493 = vadd.f32 %v3071, %v3435
      %v3494 = vadd.f32 %v3072, %v3440
      %v3495 = vadd.f32 %v3073, %v3445
      %v3496 = vadd.f32 %v3074, %v3450
      %v3497 = vadd.f32 %v3075, %v3455
      %v3498 = vadd.f32 %v3076, %v3460
      %v3499 = vadd.f32 %v3077, %v3465
      %v3500 = vld [vmem:[#allocation2 + $0x27] sm:$0xff]
      %v3501 = vld [vmem:[#allocation2 + $0x2f] sm:$0xff]
      %v3502 = vld [vmem:[#allocation2 + $0x37] sm:$0xff]
      %v3503 = vld [vmem:[#allocation2 + $0x3f] sm:$0xff]
      %v3504 = vld [vmem:[#allocation2 + $0x47] sm:$0xff]
      %v3505 = vld [vmem:[#allocation2 + $0x4f] sm:$0xff]
      %v3506 = vld [vmem:[#allocation2 + $0x57] sm:$0xff]
      %v3507 = vld [vmem:[#allocation2 + $0x5f] sm:$0xff]
      %v3508 = vld [vmem:[#allocation2 + $0x67] sm:$0xff]
      %v3509 = vld [vmem:[#allocation2 + $0x6f] sm:$0xff]
      %v3510 = vld [vmem:[#allocation2 + $0x77] sm:$0xff]
      %v3511 = vld [vmem:[#allocation2 + $0x7f] sm:$0xff]
      %v3512 = vld [vmem:[#allocation2 + $0x87] sm:$0xff]
      %v3513 = vld [vmem:[#allocation2 + $0x8f] sm:$0xff]
      %v3514 = vld [vmem:[#allocation2 + $0x97] sm:$0xff]
      %v3515 = vld [vmem:[#allocation2 + $0x9f] sm:$0xff]
      %v3516 = vld [vmem:[#allocation2 + $0xa7] sm:$0xff]
      %v3517 = vld [vmem:[#allocation2 + $0xaf] sm:$0xff]
      %v3518 = vld [vmem:[#allocation2 + $0xb7] sm:$0xff]
      %v3519 = vld [vmem:[#allocation2 + $0xbf] sm:$0xff]
      %v3520 = vld [vmem:[#allocation2 + $0xc7] sm:$0xff]
      %v3521 = vld [vmem:[#allocation2 + $0xcf] sm:$0xff]
      %v3522 = vld [vmem:[#allocation2 + $0xd7] sm:$0xff]
      %v3523 = vld [vmem:[#allocation2 + $0xdf] sm:$0xff]
      %v3524 = vld [vmem:[#allocation2 + $0xe7] sm:$0xff]
      %v3525 = vld [vmem:[#allocation2 + $0xef] sm:$0xff]
      %v3526 = vld [vmem:[#allocation2 + $0xf7] sm:$0xff]
      %v3527 = vld [vmem:[#allocation2 + $0xff] sm:$0xff]
      %v3528 = vld [vmem:[#allocation2 + $0x107] sm:$0xff]
      %v3529 = vld [vmem:[#allocation2 + $0x10f] sm:$0xff]
      %v3530 = vld [vmem:[#allocation2 + $0x117] sm:$0xff]
      %v3531 = vld [vmem:[#allocation2 + $0x11f] sm:$0xff]
      %v3532 = vsel %vm963, %v3500, 0.0
      %v3533 = vsel %vm964, %v3501, 0.0
      %v3534 = vsel %vm965, %v3502, 0.0
      %v3535 = vsel %vm966, %v3503, 0.0
      %v3536 = vsel %vm967, %v3504, 0.0
      %v3537 = vsel %vm968, %v3505, 0.0
      %v3538 = vsel %vm969, %v3506, 0.0
      %v3539 = vsel %vm970, %v3507, 0.0
      %v3540 = vsel %vm971, %v3508, 0.0
      %v3541 = vsel %vm972, %v3509, 0.0
      %v3542 = vsel %vm973, %v3510, 0.0
      %v3543 = vsel %vm974, %v3511, 0.0
      %v3544 = vsel %vm975, %v3512, 0.0
      %v3545 = vsel %vm976, %v3513, 0.0
      %v3546 = vsel %vm977, %v3514, 0.0
      %v3547 = vsel %vm978, %v3515, 0.0
      %v3548 = vsel %vm979, %v3516, 0.0
      %v3549 = vsel %vm980, %v3517, 0.0
      %v3550 = vsel %vm981, %v3518, 0.0
      %v3551 = vsel %vm982, %v3519, 0.0
      %v3552 = vsel %vm983, %v3520, 0.0
      %v3553 = vsel %vm984, %v3521, 0.0
      %v3554 = vsel %vm985, %v3522, 0.0
      %v3555 = vsel %vm986, %v3523, 0.0
      %v3556 = vsel %vm987, %v3524, 0.0
      %v3557 = vsel %vm988, %v3525, 0.0
      %v3558 = vsel %vm989, %v3526, 0.0
      %v3559 = vsel %vm990, %v3527, 0.0
      %v3560 = vsel %vm991, %v3528, 0.0
      %v3561 = vsel %vm992, %v3529, 0.0
      %v3562 = vsel %vm993, %v3530, 0.0
      %v3563 = vsel %vm994, %v3531, 0.0
      %s3564 = scalar_lea.vmem %s3, 24
      %v3565 = vld [vmem:[%s3564] sm:$0xf]
      %v3567 = vsel %vm373, %v3532, 0
      %v3570 = vsel %vm373, %v3533, 0
      %v3573 = vsel %vm373, %v3534, 0
      %v3576 = vsel %vm373, %v3535, 0
      %v3579 = vsel %vm373, %v3536, 0
      %v3582 = vsel %vm373, %v3537, 0
      %v3585 = vsel %vm373, %v3538, 0
      %v3588 = vsel %vm373, %v3539, 0
      %v3591 = vsel %vm373, %v3540, 0
      %v3594 = vsel %vm373, %v3541, 0
      %v3597 = vsel %vm373, %v3542, 0
      %v3600 = vsel %vm373, %v3543, 0
      %v3603 = vsel %vm373, %v3544, 0
      %v3606 = vsel %vm373, %v3545, 0
      %v3609 = vsel %vm373, %v3546, 0
      %v3612 = vsel %vm373, %v3547, 0
      %v3615 = vsel %vm373, %v3548, 0
      %v3618 = vsel %vm373, %v3549, 0
      %v3621 = vsel %vm373, %v3550, 0
      %v3624 = vsel %vm373, %v3551, 0
      %v3627 = vsel %vm373, %v3552, 0
      %v3630 = vsel %vm373, %v3553, 0
      %v3633 = vsel %vm373, %v3554, 0
      %v3636 = vsel %vm373, %v3555, 0
      %v3639 = vsel %vm373, %v3556, 0
      %v3642 = vsel %vm373, %v3557, 0
      %v3645 = vsel %vm373, %v3558, 0
      %v3648 = vsel %vm373, %v3559, 0
      %v3651 = vsel %vm373, %v3560, 0
      %v3654 = vsel %vm373, %v3561, 0
      %v3657 = vsel %vm373, %v3562, 0
      %v3660 = vsel %vm373, %v3563, 0
      %v3663 = vsel %vm470, %v3565, 0
      %3665 = vmatprep.subr.mxu0 0.0
      %3666 = vmatpush1.msra.mxu0 0.0
      %3667 = vmatprep.subr.mxu0 0.0
      %3668 = vmatpush1.msra.mxu0 0.0
      %3669 = vmatprep.subr.mxu0 0.0
      %3670 = vmatpush1.msra.mxu0 0.0
      %3671 = vmatprep.subr.mxu0 0.0
      %3672 = vmatpush1.msra.mxu0 0.0
      %3673 = vmatprep.subr.mxu0 0.0
      %3674 = vmatpush1.msra.mxu0 0.0
      %3675 = vmatprep.subr.mxu0 0.0
      %3676 = vmatpush1.msra.mxu0 0.0
      %3677 = vmatprep.subr.mxu0 0.0
      %3678 = vmatpush1.msra.mxu0 0.0
      %3679 = vmatprep.subr.mxu0 0.0
      %3680 = vmatpush1.msra.mxu0 0.0
      %3681 = vmatprep.subr.mxu0 0.0
      %3682 = vmatpush1.msra.mxu0 0.0
      %3683 = vmatprep.subr.mxu0 0.0
      %3684 = vmatpush1.msra.mxu0 0.0
      %3685 = vmatprep.subr.mxu0 0.0
      %3686 = vmatpush1.msra.mxu0 0.0
      %3687 = vmatprep.subr.mxu0 0.0
      %3688 = vmatpush1.msra.mxu0 0.0
      %3689 = vmatprep.subr.mxu0 0.0
      %3690 = vmatpush1.msra.mxu0 0.0
      %3691 = vmatprep.subr.mxu0 0.0
      %3692 = vmatpush1.msra.mxu0 0.0
      %3693 = vmatprep.subr.mxu0 0.0
      %3694 = vmatpush1.msra.mxu0 0.0
      %3695 = vmatprep.subr.mxu0 0.0
      %3696 = vmatpush1.msra.mxu0 %v3663
      %3697 = vmatprep.subr.mxu0 0.0
      %3698 = vmatpush2.msra.mxu0 0.0
      %3699 = vmatprep.subr.mxu0 0.0
      %3700 = vmatpush2.msra.mxu0 0.0
      %3701 = vmatprep.subr.mxu0 0.0
      %3702 = vmatpush2.msra.mxu0 0.0
      %3703 = vmatprep.subr.mxu0 0.0
      %3704 = vmatpush2.msra.mxu0 0.0
      %3705 = vmatprep.subr.mxu0 0.0
      %3706 = vmatpush2.msra.mxu0 0.0
      %3707 = vmatprep.subr.mxu0 0.0
      %3708 = vmatpush2.msra.mxu0 0.0
      %3709 = vmatprep.subr.mxu0 0.0
      %3710 = vmatpush2.msra.mxu0 0.0
      %3711 = vmatprep.subr.mxu0 0.0
      %3712 = vmatpush2.msra.mxu0 0.0
      %3713 = vmatprep.subr.mxu0 0.0
      %3714 = vmatpush2.msra.mxu0 0.0
      %3715 = vmatprep.subr.mxu0 0.0
      %3716 = vmatpush2.msra.mxu0 0.0
      %3717 = vmatprep.subr.mxu0 0.0
      %3718 = vmatpush2.msra.mxu0 0.0
      %3719 = vmatprep.subr.mxu0 0.0
      %3720 = vmatpush2.msra.mxu0 0.0
      %3721 = vmatprep.subr.mxu0 0.0
      %3722 = vmatpush2.msra.mxu0 0.0
      %3723 = vmatprep.subr.mxu0 0.0
      %3724 = vmatpush2.msra.mxu0 0.0
      %3725 = vmatprep.subr.mxu0 0.0
      %3726 = vmatpush2.msra.mxu0 0.0
      %3727 = vmatprep.subr.mxu0 0.0
      %3728 = vmatpush2.msra.mxu0 0.0
      %3729 = vmatprep.mubr.f32.mxu0 0.0
      %3730 = vmatmul.mubr.f32.gmra.mxu0 %v3567
      %v3731 = vpop.f32.mrf.mxu0
      %v3732 = vadd.f32 0.0, %v3731
      %v3733 = vpop.f32.mrf.mxu0
      %3734 = vmatprep.mubr.f32.mxu0 0.0
      %3735 = vmatmul.mubr.f32.gmra.mxu0 %v3570
      %v3736 = vpop.f32.mrf.mxu0
      %v3737 = vadd.f32 0.0, %v3736
      %v3738 = vpop.f32.mrf.mxu0
      %3739 = vmatprep.mubr.f32.mxu0 0.0
      %3740 = vmatmul.mubr.f32.gmra.mxu0 %v3573
      %v3741 = vpop.f32.mrf.mxu0
      %v3742 = vadd.f32 0.0, %v3741
      %v3743 = vpop.f32.mrf.mxu0
      %3744 = vmatprep.mubr.f32.mxu0 0.0
      %3745 = vmatmul.mubr.f32.gmra.mxu0 %v3576
      %v3746 = vpop.f32.mrf.mxu0
      %v3747 = vadd.f32 0.0, %v3746
      %v3748 = vpop.f32.mrf.mxu0
      %3749 = vmatprep.mubr.f32.mxu0 0.0
      %3750 = vmatmul.mubr.f32.gmra.mxu0 %v3579
      %v3751 = vpop.f32.mrf.mxu0
      %v3752 = vadd.f32 0.0, %v3751
      %v3753 = vpop.f32.mrf.mxu0
      %3754 = vmatprep.mubr.f32.mxu0 0.0
      %3755 = vmatmul.mubr.f32.gmra.mxu0 %v3582
      %v3756 = vpop.f32.mrf.mxu0
      %v3757 = vadd.f32 0.0, %v3756
      %v3758 = vpop.f32.mrf.mxu0
      %3759 = vmatprep.mubr.f32.mxu0 0.0
      %3760 = vmatmul.mubr.f32.gmra.mxu0 %v3585
      %v3761 = vpop.f32.mrf.mxu0
      %v3762 = vadd.f32 0.0, %v3761
      %v3763 = vpop.f32.mrf.mxu0
      %3764 = vmatprep.mubr.f32.mxu0 0.0
      %3765 = vmatmul.mubr.f32.gmra.mxu0 %v3588
      %v3766 = vpop.f32.mrf.mxu0
      %v3767 = vadd.f32 0.0, %v3766
      %v3768 = vpop.f32.mrf.mxu0
      %3769 = vmatprep.mubr.f32.mxu0 0.0
      %3770 = vmatmul.mubr.f32.gmra.mxu0 %v3591
      %v3771 = vpop.f32.mrf.mxu0
      %v3772 = vadd.f32 0.0, %v3771
      %v3773 = vpop.f32.mrf.mxu0
      %3774 = vmatprep.mubr.f32.mxu0 0.0
      %3775 = vmatmul.mubr.f32.gmra.mxu0 %v3594
      %v3776 = vpop.f32.mrf.mxu0
      %v3777 = vadd.f32 0.0, %v3776
      %v3778 = vpop.f32.mrf.mxu0
      %3779 = vmatprep.mubr.f32.mxu0 0.0
      %3780 = vmatmul.mubr.f32.gmra.mxu0 %v3597
      %v3781 = vpop.f32.mrf.mxu0
      %v3782 = vadd.f32 0.0, %v3781
      %v3783 = vpop.f32.mrf.mxu0
      %3784 = vmatprep.mubr.f32.mxu0 0.0
      %3785 = vmatmul.mubr.f32.gmra.mxu0 %v3600
      %v3786 = vpop.f32.mrf.mxu0
      %v3787 = vadd.f32 0.0, %v3786
      %v3788 = vpop.f32.mrf.mxu0
      %3789 = vmatprep.mubr.f32.mxu0 0.0
      %3790 = vmatmul.mubr.f32.gmra.mxu0 %v3603
      %v3791 = vpop.f32.mrf.mxu0
      %v3792 = vadd.f32 0.0, %v3791
      %v3793 = vpop.f32.mrf.mxu0
      %3794 = vmatprep.mubr.f32.mxu0 0.0
      %3795 = vmatmul.mubr.f32.gmra.mxu0 %v3606
      %v3796 = vpop.f32.mrf.mxu0
      %v3797 = vadd.f32 0.0, %v3796
      %v3798 = vpop.f32.mrf.mxu0
      %3799 = vmatprep.mubr.f32.mxu0 0.0
      %3800 = vmatmul.mubr.f32.gmra.mxu0 %v3609
      %v3801 = vpop.f32.mrf.mxu0
      %v3802 = vadd.f32 0.0, %v3801
      %v3803 = vpop.f32.mrf.mxu0
      %3804 = vmatprep.mubr.f32.mxu0 0.0
      %3805 = vmatmul.mubr.f32.gmra.mxu0 %v3612
      %v3806 = vpop.f32.mrf.mxu0
      %v3807 = vadd.f32 0.0, %v3806
      %v3808 = vpop.f32.mrf.mxu0
      %3809 = vmatprep.mubr.f32.mxu0 0.0
      %3810 = vmatmul.mubr.f32.gmra.mxu0 %v3615
      %v3811 = vpop.f32.mrf.mxu0
      %v3812 = vadd.f32 0.0, %v3811
      %v3813 = vpop.f32.mrf.mxu0
      %3814 = vmatprep.mubr.f32.mxu0 0.0
      %3815 = vmatmul.mubr.f32.gmra.mxu0 %v3618
      %v3816 = vpop.f32.mrf.mxu0
      %v3817 = vadd.f32 0.0, %v3816
      %v3818 = vpop.f32.mrf.mxu0
      %3819 = vmatprep.mubr.f32.mxu0 0.0
      %3820 = vmatmul.mubr.f32.gmra.mxu0 %v3621
      %v3821 = vpop.f32.mrf.mxu0
      %v3822 = vadd.f32 0.0, %v3821
      %v3823 = vpop.f32.mrf.mxu0
      %3824 = vmatprep.mubr.f32.mxu0 0.0
      %3825 = vmatmul.mubr.f32.gmra.mxu0 %v3624
      %v3826 = vpop.f32.mrf.mxu0
      %v3827 = vadd.f32 0.0, %v3826
      %v3828 = vpop.f32.mrf.mxu0
      %3829 = vmatprep.mubr.f32.mxu0 0.0
      %3830 = vmatmul.mubr.f32.gmra.mxu0 %v3627
      %v3831 = vpop.f32.mrf.mxu0
      %v3832 = vadd.f32 0.0, %v3831
      %v3833 = vpop.f32.mrf.mxu0
      %3834 = vmatprep.mubr.f32.mxu0 0.0
      %3835 = vmatmul.mubr.f32.gmra.mxu0 %v3630
      %v3836 = vpop.f32.mrf.mxu0
      %v3837 = vadd.f32 0.0, %v3836
      %v3838 = vpop.f32.mrf.mxu0
      %3839 = vmatprep.mubr.f32.mxu0 0.0
      %3840 = vmatmul.mubr.f32.gmra.mxu0 %v3633
      %v3841 = vpop.f32.mrf.mxu0
      %v3842 = vadd.f32 0.0, %v3841
      %v3843 = vpop.f32.mrf.mxu0
      %3844 = vmatprep.mubr.f32.mxu0 0.0
      %3845 = vmatmul.mubr.f32.gmra.mxu0 %v3636
      %v3846 = vpop.f32.mrf.mxu0
      %v3847 = vadd.f32 0.0, %v3846
      %v3848 = vpop.f32.mrf.mxu0
      %3849 = vmatprep.mubr.f32.mxu0 0.0
      %3850 = vmatmul.mubr.f32.gmra.mxu0 %v3639
      %v3851 = vpop.f32.mrf.mxu0
      %v3852 = vadd.f32 0.0, %v3851
      %v3853 = vpop.f32.mrf.mxu0
      %3854 = vmatprep.mubr.f32.mxu0 0.0
      %3855 = vmatmul.mubr.f32.gmra.mxu0 %v3642
      %v3856 = vpop.f32.mrf.mxu0
      %v3857 = vadd.f32 0.0, %v3856
      %v3858 = vpop.f32.mrf.mxu0
      %3859 = vmatprep.mubr.f32.mxu0 0.0
      %3860 = vmatmul.mubr.f32.gmra.mxu0 %v3645
      %v3861 = vpop.f32.mrf.mxu0
      %v3862 = vadd.f32 0.0, %v3861
      %v3863 = vpop.f32.mrf.mxu0
      %3864 = vmatprep.mubr.f32.mxu0 0.0
      %3865 = vmatmul.mubr.f32.gmra.mxu0 %v3648
      %v3866 = vpop.f32.mrf.mxu0
      %v3867 = vadd.f32 0.0, %v3866
      %v3868 = vpop.f32.mrf.mxu0
      %3869 = vmatprep.mubr.f32.mxu0 0.0
      %3870 = vmatmul.mubr.f32.gmra.mxu0 %v3651
      %v3871 = vpop.f32.mrf.mxu0
      %v3872 = vadd.f32 0.0, %v3871
      %v3873 = vpop.f32.mrf.mxu0
      %3874 = vmatprep.mubr.f32.mxu0 0.0
      %3875 = vmatmul.mubr.f32.gmra.mxu0 %v3654
      %v3876 = vpop.f32.mrf.mxu0
      %v3877 = vadd.f32 0.0, %v3876
      %v3878 = vpop.f32.mrf.mxu0
      %3879 = vmatprep.mubr.f32.mxu0 0.0
      %3880 = vmatmul.mubr.f32.gmra.mxu0 %v3657
      %v3881 = vpop.f32.mrf.mxu0
      %v3882 = vadd.f32 0.0, %v3881
      %v3883 = vpop.f32.mrf.mxu0
      %3884 = vmatprep.mubr.f32.mxu0 0.0
      %3885 = vmatmul.mubr.f32.gmra.mxu0 %v3660
      %v3886 = vpop.f32.mrf.mxu0
      %v3887 = vadd.f32 0.0, %v3886
      %v3888 = vpop.f32.mrf.mxu0
      %3889 = vdwg.mxu0
      %v3890 = vadd.f32 %v3468, %v3732
      %v3891 = vadd.f32 %v3469, %v3737
      %v3892 = vadd.f32 %v3470, %v3742
      %v3893 = vadd.f32 %v3471, %v3747
      %v3894 = vadd.f32 %v3472, %v3752
      %v3895 = vadd.f32 %v3473, %v3757
      %v3896 = vadd.f32 %v3474, %v3762
      %v3897 = vadd.f32 %v3475, %v3767
      %v3898 = vadd.f32 %v3476, %v3772
      %v3899 = vadd.f32 %v3477, %v3777
      %v3900 = vadd.f32 %v3478, %v3782
      %v3901 = vadd.f32 %v3479, %v3787
      %v3902 = vadd.f32 %v3480, %v3792
      %v3903 = vadd.f32 %v3481, %v3797
      %v3904 = vadd.f32 %v3482, %v3802
      %v3905 = vadd.f32 %v3483, %v3807
      %v3906 = vadd.f32 %v3484, %v3812
      %v3907 = vadd.f32 %v3485, %v3817
      %v3908 = vadd.f32 %v3486, %v3822
      %v3909 = vadd.f32 %v3487, %v3827
      %v3910 = vadd.f32 %v3488, %v3832
      %v3911 = vadd.f32 %v3489, %v3837
      %v3912 = vadd.f32 %v3490, %v3842
      %v3913 = vadd.f32 %v3491, %v3847
      %v3914 = vadd.f32 %v3492, %v3852
      %v3915 = vadd.f32 %v3493, %v3857
      %v3916 = vadd.f32 %v3494, %v3862
      %v3917 = vadd.f32 %v3495, %v3867
      %v3918 = vadd.f32 %v3496, %v3872
      %v3919 = vadd.f32 %v3497, %v3877
      %v3920 = vadd.f32 %v3498, %v3882
      %v3921 = vadd.f32 %v3499, %v3887
      %v3922 = vld [vmem:[#allocation2 + $0x28] sm:$0xff]
      %v3923 = vld [vmem:[#allocation2 + $0x30] sm:$0xff]
      %v3924 = vld [vmem:[#allocation2 + $0x38] sm:$0xff]
      %v3925 = vld [vmem:[#allocation2 + $0x40] sm:$0xff]
      %v3926 = vld [vmem:[#allocation2 + $0x48] sm:$0xff]
      %v3927 = vld [vmem:[#allocation2 + $0x50] sm:$0xff]
      %v3928 = vld [vmem:[#allocation2 + $0x58] sm:$0xff]
      %v3929 = vld [vmem:[#allocation2 + $0x60] sm:$0xff]
      %v3930 = vld [vmem:[#allocation2 + $0x68] sm:$0xff]
      %v3931 = vld [vmem:[#allocation2 + $0x70] sm:$0xff]
      %v3932 = vld [vmem:[#allocation2 + $0x78] sm:$0xff]
      %v3933 = vld [vmem:[#allocation2 + $0x80] sm:$0xff]
      %v3934 = vld [vmem:[#allocation2 + $0x88] sm:$0xff]
      %v3935 = vld [vmem:[#allocation2 + $0x90] sm:$0xff]
      %v3936 = vld [vmem:[#allocation2 + $0x98] sm:$0xff]
      %v3937 = vld [vmem:[#allocation2 + $0xa0] sm:$0xff]
      %v3938 = vld [vmem:[#allocation2 + $0xa8] sm:$0xff]
      %v3939 = vld [vmem:[#allocation2 + $0xb0] sm:$0xff]
      %v3940 = vld [vmem:[#allocation2 + $0xb8] sm:$0xff]
      %v3941 = vld [vmem:[#allocation2 + $0xc0] sm:$0xff]
      %v3942 = vld [vmem:[#allocation2 + $0xc8] sm:$0xff]
      %v3943 = vld [vmem:[#allocation2 + $0xd0] sm:$0xff]
      %v3944 = vld [vmem:[#allocation2 + $0xd8] sm:$0xff]
      %v3945 = vld [vmem:[#allocation2 + $0xe0] sm:$0xff]
      %v3946 = vld [vmem:[#allocation2 + $0xe8] sm:$0xff]
      %v3947 = vld [vmem:[#allocation2 + $0xf0] sm:$0xff]
      %v3948 = vld [vmem:[#allocation2 + $0xf8] sm:$0xff]
      %v3949 = vld [vmem:[#allocation2 + $0x100] sm:$0xff]
      %v3950 = vld [vmem:[#allocation2 + $0x108] sm:$0xff]
      %v3951 = vld [vmem:[#allocation2 + $0x110] sm:$0xff]
      %v3952 = vld [vmem:[#allocation2 + $0x118] sm:$0xff]
      %v3953 = vld [vmem:[#allocation2 + $0x120] sm:$0xff]
      %s3954 = scalar_lea.vmem %s3, 28
      %v3955 = vld [vmem:[%s3954] sm:$0xf]
      %v3957 = vsel %vm373, %v3922, 0
      %v3960 = vsel %vm373, %v3923, 0
      %v3963 = vsel %vm373, %v3924, 0
      %v3966 = vsel %vm373, %v3925, 0
      %v3969 = vsel %vm373, %v3926, 0
      %v3972 = vsel %vm373, %v3927, 0
      %v3975 = vsel %vm373, %v3928, 0
      %v3978 = vsel %vm373, %v3929, 0
      %v3981 = vsel %vm373, %v3930, 0
      %v3984 = vsel %vm373, %v3931, 0
      %v3987 = vsel %vm373, %v3932, 0
      %v3990 = vsel %vm373, %v3933, 0
      %v3993 = vsel %vm373, %v3934, 0
      %v3996 = vsel %vm373, %v3935, 0
      %v3999 = vsel %vm373, %v3936, 0
      %v4002 = vsel %vm373, %v3937, 0
      %v4005 = vsel %vm373, %v3938, 0
      %v4008 = vsel %vm373, %v3939, 0
      %v4011 = vsel %vm373, %v3940, 0
      %v4014 = vsel %vm373, %v3941, 0
      %v4017 = vsel %vm373, %v3942, 0
      %v4020 = vsel %vm373, %v3943, 0
      %v4023 = vsel %vm373, %v3944, 0
      %v4026 = vsel %vm373, %v3945, 0
      %v4029 = vsel %vm373, %v3946, 0
      %v4032 = vsel %vm373, %v3947, 0
      %v4035 = vsel %vm373, %v3948, 0
      %v4038 = vsel %vm373, %v3949, 0
      %v4041 = vsel %vm373, %v3950, 0
      %v4044 = vsel %vm373, %v3951, 0
      %v4047 = vsel %vm373, %v3952, 0
      %v4050 = vsel %vm373, %v3953, 0
      %v4053 = vsel %vm470, %v3955, 0
      %4055 = vmatprep.subr.mxu0 0.0
      %4056 = vmatpush1.msra.mxu0 0.0
      %4057 = vmatprep.subr.mxu0 0.0
      %4058 = vmatpush1.msra.mxu0 0.0
      %4059 = vmatprep.subr.mxu0 0.0
      %4060 = vmatpush1.msra.mxu0 0.0
      %4061 = vmatprep.subr.mxu0 0.0
      %4062 = vmatpush1.msra.mxu0 0.0
      %4063 = vmatprep.subr.mxu0 0.0
      %4064 = vmatpush1.msra.mxu0 0.0
      %4065 = vmatprep.subr.mxu0 0.0
      %4066 = vmatpush1.msra.mxu0 0.0
      %4067 = vmatprep.subr.mxu0 0.0
      %4068 = vmatpush1.msra.mxu0 0.0
      %4069 = vmatprep.subr.mxu0 0.0
      %4070 = vmatpush1.msra.mxu0 0.0
      %4071 = vmatprep.subr.mxu0 0.0
      %4072 = vmatpush1.msra.mxu0 0.0
      %4073 = vmatprep.subr.mxu0 0.0
      %4074 = vmatpush1.msra.mxu0 0.0
      %4075 = vmatprep.subr.mxu0 0.0
      %4076 = vmatpush1.msra.mxu0 0.0
      %4077 = vmatprep.subr.mxu0 0.0
      %4078 = vmatpush1.msra.mxu0 0.0
      %4079 = vmatprep.subr.mxu0 0.0
      %4080 = vmatpush1.msra.mxu0 0.0
      %4081 = vmatprep.subr.mxu0 0.0
      %4082 = vmatpush1.msra.mxu0 0.0
      %4083 = vmatprep.subr.mxu0 0.0
      %4084 = vmatpush1.msra.mxu0 0.0
      %4085 = vmatprep.subr.mxu0 0.0
      %4086 = vmatpush1.msra.mxu0 %v4053
      %4087 = vmatprep.subr.mxu0 0.0
      %4088 = vmatpush2.msra.mxu0 0.0
      %4089 = vmatprep.subr.mxu0 0.0
      %4090 = vmatpush2.msra.mxu0 0.0
      %4091 = vmatprep.subr.mxu0 0.0
      %4092 = vmatpush2.msra.mxu0 0.0
      %4093 = vmatprep.subr.mxu0 0.0
      %4094 = vmatpush2.msra.mxu0 0.0
      %4095 = vmatprep.subr.mxu0 0.0
      %4096 = vmatpush2.msra.mxu0 0.0
      %4097 = vmatprep.subr.mxu0 0.0
      %4098 = vmatpush2.msra.mxu0 0.0
      %4099 = vmatprep.subr.mxu0 0.0
      %4100 = vmatpush2.msra.mxu0 0.0
      %4101 = vmatprep.subr.mxu0 0.0
      %4102 = vmatpush2.msra.mxu0 0.0
      %4103 = vmatprep.subr.mxu0 0.0
      %4104 = vmatpush2.msra.mxu0 0.0
      %4105 = vmatprep.subr.mxu0 0.0
      %4106 = vmatpush2.msra.mxu0 0.0
      %4107 = vmatprep.subr.mxu0 0.0
      %4108 = vmatpush2.msra.mxu0 0.0
      %4109 = vmatprep.subr.mxu0 0.0
      %4110 = vmatpush2.msra.mxu0 0.0
      %4111 = vmatprep.subr.mxu0 0.0
      %4112 = vmatpush2.msra.mxu0 0.0
      %4113 = vmatprep.subr.mxu0 0.0
      %4114 = vmatpush2.msra.mxu0 0.0
      %4115 = vmatprep.subr.mxu0 0.0
      %4116 = vmatpush2.msra.mxu0 0.0
      %4117 = vmatprep.subr.mxu0 0.0
      %4118 = vmatpush2.msra.mxu0 0.0
      %4119 = vmatprep.mubr.f32.mxu0 0.0
      %4120 = vmatmul.mubr.f32.gmra.mxu0 %v3957
      %v4121 = vpop.f32.mrf.mxu0
      %v4122 = vadd.f32 0.0, %v4121
      %v4123 = vpop.f32.mrf.mxu0
      %4124 = vmatprep.mubr.f32.mxu0 0.0
      %4125 = vmatmul.mubr.f32.gmra.mxu0 %v3960
      %v4126 = vpop.f32.mrf.mxu0
      %v4127 = vadd.f32 0.0, %v4126
      %v4128 = vpop.f32.mrf.mxu0
      %4129 = vmatprep.mubr.f32.mxu0 0.0
      %4130 = vmatmul.mubr.f32.gmra.mxu0 %v3963
      %v4131 = vpop.f32.mrf.mxu0
      %v4132 = vadd.f32 0.0, %v4131
      %v4133 = vpop.f32.mrf.mxu0
      %4134 = vmatprep.mubr.f32.mxu0 0.0
      %4135 = vmatmul.mubr.f32.gmra.mxu0 %v3966
      %v4136 = vpop.f32.mrf.mxu0
      %v4137 = vadd.f32 0.0, %v4136
      %v4138 = vpop.f32.mrf.mxu0
      %4139 = vmatprep.mubr.f32.mxu0 0.0
      %4140 = vmatmul.mubr.f32.gmra.mxu0 %v3969
      %v4141 = vpop.f32.mrf.mxu0
      %v4142 = vadd.f32 0.0, %v4141
      %v4143 = vpop.f32.mrf.mxu0
      %4144 = vmatprep.mubr.f32.mxu0 0.0
      %4145 = vmatmul.mubr.f32.gmra.mxu0 %v3972
      %v4146 = vpop.f32.mrf.mxu0
      %v4147 = vadd.f32 0.0, %v4146
      %v4148 = vpop.f32.mrf.mxu0
      %4149 = vmatprep.mubr.f32.mxu0 0.0
      %4150 = vmatmul.mubr.f32.gmra.mxu0 %v3975
      %v4151 = vpop.f32.mrf.mxu0
      %v4152 = vadd.f32 0.0, %v4151
      %v4153 = vpop.f32.mrf.mxu0
      %4154 = vmatprep.mubr.f32.mxu0 0.0
      %4155 = vmatmul.mubr.f32.gmra.mxu0 %v3978
      %v4156 = vpop.f32.mrf.mxu0
      %v4157 = vadd.f32 0.0, %v4156
      %v4158 = vpop.f32.mrf.mxu0
      %4159 = vmatprep.mubr.f32.mxu0 0.0
      %4160 = vmatmul.mubr.f32.gmra.mxu0 %v3981
      %v4161 = vpop.f32.mrf.mxu0
      %v4162 = vadd.f32 0.0, %v4161
      %v4163 = vpop.f32.mrf.mxu0
      %4164 = vmatprep.mubr.f32.mxu0 0.0
      %4165 = vmatmul.mubr.f32.gmra.mxu0 %v3984
      %v4166 = vpop.f32.mrf.mxu0
      %v4167 = vadd.f32 0.0, %v4166
      %v4168 = vpop.f32.mrf.mxu0
      %4169 = vmatprep.mubr.f32.mxu0 0.0
      %4170 = vmatmul.mubr.f32.gmra.mxu0 %v3987
      %v4171 = vpop.f32.mrf.mxu0
      %v4172 = vadd.f32 0.0, %v4171
      %v4173 = vpop.f32.mrf.mxu0
      %4174 = vmatprep.mubr.f32.mxu0 0.0
      %4175 = vmatmul.mubr.f32.gmra.mxu0 %v3990
      %v4176 = vpop.f32.mrf.mxu0
      %v4177 = vadd.f32 0.0, %v4176
      %v4178 = vpop.f32.mrf.mxu0
      %4179 = vmatprep.mubr.f32.mxu0 0.0
      %4180 = vmatmul.mubr.f32.gmra.mxu0 %v3993
      %v4181 = vpop.f32.mrf.mxu0
      %v4182 = vadd.f32 0.0, %v4181
      %v4183 = vpop.f32.mrf.mxu0
      %4184 = vmatprep.mubr.f32.mxu0 0.0
      %4185 = vmatmul.mubr.f32.gmra.mxu0 %v3996
      %v4186 = vpop.f32.mrf.mxu0
      %v4187 = vadd.f32 0.0, %v4186
      %v4188 = vpop.f32.mrf.mxu0
      %4189 = vmatprep.mubr.f32.mxu0 0.0
      %4190 = vmatmul.mubr.f32.gmra.mxu0 %v3999
      %v4191 = vpop.f32.mrf.mxu0
      %v4192 = vadd.f32 0.0, %v4191
      %v4193 = vpop.f32.mrf.mxu0
      %4194 = vmatprep.mubr.f32.mxu0 0.0
      %4195 = vmatmul.mubr.f32.gmra.mxu0 %v4002
      %v4196 = vpop.f32.mrf.mxu0
      %v4197 = vadd.f32 0.0, %v4196
      %v4198 = vpop.f32.mrf.mxu0
      %4199 = vmatprep.mubr.f32.mxu0 0.0
      %4200 = vmatmul.mubr.f32.gmra.mxu0 %v4005
      %v4201 = vpop.f32.mrf.mxu0
      %v4202 = vadd.f32 0.0, %v4201
      %v4203 = vpop.f32.mrf.mxu0
      %4204 = vmatprep.mubr.f32.mxu0 0.0
      %4205 = vmatmul.mubr.f32.gmra.mxu0 %v4008
      %v4206 = vpop.f32.mrf.mxu0
      %v4207 = vadd.f32 0.0, %v4206
      %v4208 = vpop.f32.mrf.mxu0
      %4209 = vmatprep.mubr.f32.mxu0 0.0
      %4210 = vmatmul.mubr.f32.gmra.mxu0 %v4011
      %v4211 = vpop.f32.mrf.mxu0
      %v4212 = vadd.f32 0.0, %v4211
      %v4213 = vpop.f32.mrf.mxu0
      %4214 = vmatprep.mubr.f32.mxu0 0.0
      %4215 = vmatmul.mubr.f32.gmra.mxu0 %v4014
      %v4216 = vpop.f32.mrf.mxu0
      %v4217 = vadd.f32 0.0, %v4216
      %v4218 = vpop.f32.mrf.mxu0
      %4219 = vmatprep.mubr.f32.mxu0 0.0
      %4220 = vmatmul.mubr.f32.gmra.mxu0 %v4017
      %v4221 = vpop.f32.mrf.mxu0
      %v4222 = vadd.f32 0.0, %v4221
      %v4223 = vpop.f32.mrf.mxu0
      %4224 = vmatprep.mubr.f32.mxu0 0.0
      %4225 = vmatmul.mubr.f32.gmra.mxu0 %v4020
      %v4226 = vpop.f32.mrf.mxu0
      %v4227 = vadd.f32 0.0, %v4226
      %v4228 = vpop.f32.mrf.mxu0
      %4229 = vmatprep.mubr.f32.mxu0 0.0
      %4230 = vmatmul.mubr.f32.gmra.mxu0 %v4023
      %v4231 = vpop.f32.mrf.mxu0
      %v4232 = vadd.f32 0.0, %v4231
      %v4233 = vpop.f32.mrf.mxu0
      %4234 = vmatprep.mubr.f32.mxu0 0.0
      %4235 = vmatmul.mubr.f32.gmra.mxu0 %v4026
      %v4236 = vpop.f32.mrf.mxu0
      %v4237 = vadd.f32 0.0, %v4236
      %v4238 = vpop.f32.mrf.mxu0
      %4239 = vmatprep.mubr.f32.mxu0 0.0
      %4240 = vmatmul.mubr.f32.gmra.mxu0 %v4029
      %v4241 = vpop.f32.mrf.mxu0
      %v4242 = vadd.f32 0.0, %v4241
      %v4243 = vpop.f32.mrf.mxu0
      %4244 = vmatprep.mubr.f32.mxu0 0.0
      %4245 = vmatmul.mubr.f32.gmra.mxu0 %v4032
      %v4246 = vpop.f32.mrf.mxu0
      %v4247 = vadd.f32 0.0, %v4246
      %v4248 = vpop.f32.mrf.mxu0
      %4249 = vmatprep.mubr.f32.mxu0 0.0
      %4250 = vmatmul.mubr.f32.gmra.mxu0 %v4035
      %v4251 = vpop.f32.mrf.mxu0
      %v4252 = vadd.f32 0.0, %v4251
      %v4253 = vpop.f32.mrf.mxu0
      %4254 = vmatprep.mubr.f32.mxu0 0.0
      %4255 = vmatmul.mubr.f32.gmra.mxu0 %v4038
      %v4256 = vpop.f32.mrf.mxu0
      %v4257 = vadd.f32 0.0, %v4256
      %v4258 = vpop.f32.mrf.mxu0
      %4259 = vmatprep.mubr.f32.mxu0 0.0
      %4260 = vmatmul.mubr.f32.gmra.mxu0 %v4041
      %v4261 = vpop.f32.mrf.mxu0
      %v4262 = vadd.f32 0.0, %v4261
      %v4263 = vpop.f32.mrf.mxu0
      %4264 = vmatprep.mubr.f32.mxu0 0.0
      %4265 = vmatmul.mubr.f32.gmra.mxu0 %v4044
      %v4266 = vpop.f32.mrf.mxu0
      %v4267 = vadd.f32 0.0, %v4266
      %v4268 = vpop.f32.mrf.mxu0
      %4269 = vmatprep.mubr.f32.mxu0 0.0
      %4270 = vmatmul.mubr.f32.gmra.mxu0 %v4047
      %v4271 = vpop.f32.mrf.mxu0
      %v4272 = vadd.f32 0.0, %v4271
      %v4273 = vpop.f32.mrf.mxu0
      %4274 = vmatprep.mubr.f32.mxu0 0.0
      %4275 = vmatmul.mubr.f32.gmra.mxu0 %v4050
      %v4276 = vpop.f32.mrf.mxu0
      %v4277 = vadd.f32 0.0, %v4276
      %v4278 = vpop.f32.mrf.mxu0
      %4279 = vdwg.mxu0
      %v4280 = vadd.f32 %v3890, %v4122
      %v4281 = vadd.f32 %v3891, %v4127
      %v4282 = vadd.f32 %v3892, %v4132
      %v4283 = vadd.f32 %v3893, %v4137
      %v4284 = vadd.f32 %v3894, %v4142
      %v4285 = vadd.f32 %v3895, %v4147
      %v4286 = vadd.f32 %v3896, %v4152
      %v4287 = vadd.f32 %v3897, %v4157
      %v4288 = vadd.f32 %v3898, %v4162
      %v4289 = vadd.f32 %v3899, %v4167
      %v4290 = vadd.f32 %v3900, %v4172
      %v4291 = vadd.f32 %v3901, %v4177
      %v4292 = vadd.f32 %v3902, %v4182
      %v4293 = vadd.f32 %v3903, %v4187
      %v4294 = vadd.f32 %v3904, %v4192
      %v4295 = vadd.f32 %v3905, %v4197
      %v4296 = vadd.f32 %v3906, %v4202
      %v4297 = vadd.f32 %v3907, %v4207
      %v4298 = vadd.f32 %v3908, %v4212
      %v4299 = vadd.f32 %v3909, %v4217
      %v4300 = vadd.f32 %v3910, %v4222
      %v4301 = vadd.f32 %v3911, %v4227
      %v4302 = vadd.f32 %v3912, %v4232
      %v4303 = vadd.f32 %v3913, %v4237
      %v4304 = vadd.f32 %v3914, %v4242
      %v4305 = vadd.f32 %v3915, %v4247
      %v4306 = vadd.f32 %v3916, %v4252
      %v4307 = vadd.f32 %v3917, %v4257
      %v4308 = vadd.f32 %v3918, %v4262
      %v4309 = vadd.f32 %v3919, %v4267
      %v4310 = vadd.f32 %v3920, %v4272
      %v4311 = vadd.f32 %v3921, %v4277
      %v4312 = vld [vmem:[#allocation2 + $0x29] sm:$0xff]
      %v4313 = vld [vmem:[#allocation2 + $0x31] sm:$0xff]
      %v4314 = vld [vmem:[#allocation2 + $0x39] sm:$0xff]
      %v4315 = vld [vmem:[#allocation2 + $0x41] sm:$0xff]
      %v4316 = vld [vmem:[#allocation2 + $0x49] sm:$0xff]
      %v4317 = vld [vmem:[#allocation2 + $0x51] sm:$0xff]
      %v4318 = vld [vmem:[#allocation2 + $0x59] sm:$0xff]
      %v4319 = vld [vmem:[#allocation2 + $0x61] sm:$0xff]
      %v4320 = vld [vmem:[#allocation2 + $0x69] sm:$0xff]
      %v4321 = vld [vmem:[#allocation2 + $0x71] sm:$0xff]
      %v4322 = vld [vmem:[#allocation2 + $0x79] sm:$0xff]
      %v4323 = vld [vmem:[#allocation2 + $0x81] sm:$0xff]
      %v4324 = vld [vmem:[#allocation2 + $0x89] sm:$0xff]
      %v4325 = vld [vmem:[#allocation2 + $0x91] sm:$0xff]
      %v4326 = vld [vmem:[#allocation2 + $0x99] sm:$0xff]
      %v4327 = vld [vmem:[#allocation2 + $0xa1] sm:$0xff]
      %v4328 = vld [vmem:[#allocation2 + $0xa9] sm:$0xff]
      %v4329 = vld [vmem:[#allocation2 + $0xb1] sm:$0xff]
      %v4330 = vld [vmem:[#allocation2 + $0xb9] sm:$0xff]
      %v4331 = vld [vmem:[#allocation2 + $0xc1] sm:$0xff]
      %v4332 = vld [vmem:[#allocation2 + $0xc9] sm:$0xff]
      %v4333 = vld [vmem:[#allocation2 + $0xd1] sm:$0xff]
      %v4334 = vld [vmem:[#allocation2 + $0xd9] sm:$0xff]
      %v4335 = vld [vmem:[#allocation2 + $0xe1] sm:$0xff]
      %v4336 = vld [vmem:[#allocation2 + $0xe9] sm:$0xff]
      %v4337 = vld [vmem:[#allocation2 + $0xf1] sm:$0xff]
      %v4338 = vld [vmem:[#allocation2 + $0xf9] sm:$0xff]
      %v4339 = vld [vmem:[#allocation2 + $0x101] sm:$0xff]
      %v4340 = vld [vmem:[#allocation2 + $0x109] sm:$0xff]
      %v4341 = vld [vmem:[#allocation2 + $0x111] sm:$0xff]
      %v4342 = vld [vmem:[#allocation2 + $0x119] sm:$0xff]
      %v4343 = vld [vmem:[#allocation2 + $0x121] sm:$0xff]
      %v4344 = vsel %vm1844, %v4312, 0.0
      %v4345 = vsel %vm1845, %v4313, 0.0
      %v4346 = vsel %vm1846, %v4314, 0.0
      %v4347 = vsel %vm1847, %v4315, 0.0
      %v4348 = vsel %vm1848, %v4316, 0.0
      %v4349 = vsel %vm1849, %v4317, 0.0
      %v4350 = vsel %vm1850, %v4318, 0.0
      %v4351 = vsel %vm1851, %v4319, 0.0
      %v4352 = vsel %vm1852, %v4320, 0.0
      %v4353 = vsel %vm1853, %v4321, 0.0
      %v4354 = vsel %vm1854, %v4322, 0.0
      %v4355 = vsel %vm1855, %v4323, 0.0
      %v4356 = vsel %vm1856, %v4324, 0.0
      %v4357 = vsel %vm1857, %v4325, 0.0
      %v4358 = vsel %vm1858, %v4326, 0.0
      %v4359 = vsel %vm1859, %v4327, 0.0
      %v4360 = vsel %vm1860, %v4328, 0.0
      %v4361 = vsel %vm1861, %v4329, 0.0
      %v4362 = vsel %vm1862, %v4330, 0.0
      %v4363 = vsel %vm1863, %v4331, 0.0
      %v4364 = vsel %vm1864, %v4332, 0.0
      %v4365 = vsel %vm1865, %v4333, 0.0
      %v4366 = vsel %vm1866, %v4334, 0.0
      %v4367 = vsel %vm1867, %v4335, 0.0
      %v4368 = vsel %vm1868, %v4336, 0.0
      %v4369 = vsel %vm1869, %v4337, 0.0
      %v4370 = vsel %vm1870, %v4338, 0.0
      %v4371 = vsel %vm1871, %v4339, 0.0
      %v4372 = vsel %vm1872, %v4340, 0.0
      %v4373 = vsel %vm1873, %v4341, 0.0
      %v4374 = vsel %vm1874, %v4342, 0.0
      %v4375 = vsel %vm1875, %v4343, 0.0
      %s4376 = scalar_lea.vmem %s3, 32
      %v4377 = vld [vmem:[%s4376] sm:$0xf]
      %v4379 = vsel %vm373, %v4344, 0
      %v4382 = vsel %vm373, %v4345, 0
      %v4385 = vsel %vm373, %v4346, 0
      %v4388 = vsel %vm373, %v4347, 0
      %v4391 = vsel %vm373, %v4348, 0
      %v4394 = vsel %vm373, %v4349, 0
      %v4397 = vsel %vm373, %v4350, 0
      %v4400 = vsel %vm373, %v4351, 0
      %v4403 = vsel %vm373, %v4352, 0
      %v4406 = vsel %vm373, %v4353, 0
      %v4409 = vsel %vm373, %v4354, 0
      %v4412 = vsel %vm373, %v4355, 0
      %v4415 = vsel %vm373, %v4356, 0
      %v4418 = vsel %vm373, %v4357, 0
      %v4421 = vsel %vm373, %v4358, 0
      %v4424 = vsel %vm373, %v4359, 0
      %v4427 = vsel %vm373, %v4360, 0
      %v4430 = vsel %vm373, %v4361, 0
      %v4433 = vsel %vm373, %v4362, 0
      %v4436 = vsel %vm373, %v4363, 0
      %v4439 = vsel %vm373, %v4364, 0
      %v4442 = vsel %vm373, %v4365, 0
      %v4445 = vsel %vm373, %v4366, 0
      %v4448 = vsel %vm373, %v4367, 0
      %v4451 = vsel %vm373, %v4368, 0
      %v4454 = vsel %vm373, %v4369, 0
      %v4457 = vsel %vm373, %v4370, 0
      %v4460 = vsel %vm373, %v4371, 0
      %v4463 = vsel %vm373, %v4372, 0
      %v4466 = vsel %vm373, %v4373, 0
      %v4469 = vsel %vm373, %v4374, 0
      %v4472 = vsel %vm373, %v4375, 0
      %v4475 = vsel %vm470, %v4377, 0
      %4477 = vmatprep.subr.mxu0 0.0
      %4478 = vmatpush1.msra.mxu0 0.0
      %4479 = vmatprep.subr.mxu0 0.0
      %4480 = vmatpush1.msra.mxu0 0.0
      %4481 = vmatprep.subr.mxu0 0.0
      %4482 = vmatpush1.msra.mxu0 0.0
      %4483 = vmatprep.subr.mxu0 0.0
      %4484 = vmatpush1.msra.mxu0 0.0
      %4485 = vmatprep.subr.mxu0 0.0
      %4486 = vmatpush1.msra.mxu0 0.0
      %4487 = vmatprep.subr.mxu0 0.0
      %4488 = vmatpush1.msra.mxu0 0.0
      %4489 = vmatprep.subr.mxu0 0.0
      %4490 = vmatpush1.msra.mxu0 0.0
      %4491 = vmatprep.subr.mxu0 0.0
      %4492 = vmatpush1.msra.mxu0 0.0
      %4493 = vmatprep.subr.mxu0 0.0
      %4494 = vmatpush1.msra.mxu0 0.0
      %4495 = vmatprep.subr.mxu0 0.0
      %4496 = vmatpush1.msra.mxu0 0.0
      %4497 = vmatprep.subr.mxu0 0.0
      %4498 = vmatpush1.msra.mxu0 0.0
      %4499 = vmatprep.subr.mxu0 0.0
      %4500 = vmatpush1.msra.mxu0 0.0
      %4501 = vmatprep.subr.mxu0 0.0
      %4502 = vmatpush1.msra.mxu0 0.0
      %4503 = vmatprep.subr.mxu0 0.0
      %4504 = vmatpush1.msra.mxu0 0.0
      %4505 = vmatprep.subr.mxu0 0.0
      %4506 = vmatpush1.msra.mxu0 0.0
      %4507 = vmatprep.subr.mxu0 0.0
      %4508 = vmatpush1.msra.mxu0 %v4475
      %4509 = vmatprep.subr.mxu0 0.0
      %4510 = vmatpush2.msra.mxu0 0.0
      %4511 = vmatprep.subr.mxu0 0.0
      %4512 = vmatpush2.msra.mxu0 0.0
      %4513 = vmatprep.subr.mxu0 0.0
      %4514 = vmatpush2.msra.mxu0 0.0
      %4515 = vmatprep.subr.mxu0 0.0
      %4516 = vmatpush2.msra.mxu0 0.0
      %4517 = vmatprep.subr.mxu0 0.0
      %4518 = vmatpush2.msra.mxu0 0.0
      %4519 = vmatprep.subr.mxu0 0.0
      %4520 = vmatpush2.msra.mxu0 0.0
      %4521 = vmatprep.subr.mxu0 0.0
      %4522 = vmatpush2.msra.mxu0 0.0
      %4523 = vmatprep.subr.mxu0 0.0
      %4524 = vmatpush2.msra.mxu0 0.0
      %4525 = vmatprep.subr.mxu0 0.0
      %4526 = vmatpush2.msra.mxu0 0.0
      %4527 = vmatprep.subr.mxu0 0.0
      %4528 = vmatpush2.msra.mxu0 0.0
      %4529 = vmatprep.subr.mxu0 0.0
      %4530 = vmatpush2.msra.mxu0 0.0
      %4531 = vmatprep.subr.mxu0 0.0
      %4532 = vmatpush2.msra.mxu0 0.0
      %4533 = vmatprep.subr.mxu0 0.0
      %4534 = vmatpush2.msra.mxu0 0.0
      %4535 = vmatprep.subr.mxu0 0.0
      %4536 = vmatpush2.msra.mxu0 0.0
      %4537 = vmatprep.subr.mxu0 0.0
      %4538 = vmatpush2.msra.mxu0 0.0
      %4539 = vmatprep.subr.mxu0 0.0
      %4540 = vmatpush2.msra.mxu0 0.0
      %4541 = vmatprep.mubr.f32.mxu0 0.0
      %4542 = vmatmul.mubr.f32.gmra.mxu0 %v4379
      %v4543 = vpop.f32.mrf.mxu0
      %v4544 = vadd.f32 0.0, %v4543
      %v4545 = vpop.f32.mrf.mxu0
      %4546 = vmatprep.mubr.f32.mxu0 0.0
      %4547 = vmatmul.mubr.f32.gmra.mxu0 %v4382
      %v4548 = vpop.f32.mrf.mxu0
      %v4549 = vadd.f32 0.0, %v4548
      %v4550 = vpop.f32.mrf.mxu0
      %4551 = vmatprep.mubr.f32.mxu0 0.0
      %4552 = vmatmul.mubr.f32.gmra.mxu0 %v4385
      %v4553 = vpop.f32.mrf.mxu0
      %v4554 = vadd.f32 0.0, %v4553
      %v4555 = vpop.f32.mrf.mxu0
      %4556 = vmatprep.mubr.f32.mxu0 0.0
      %4557 = vmatmul.mubr.f32.gmra.mxu0 %v4388
      %v4558 = vpop.f32.mrf.mxu0
      %v4559 = vadd.f32 0.0, %v4558
      %v4560 = vpop.f32.mrf.mxu0
      %4561 = vmatprep.mubr.f32.mxu0 0.0
      %4562 = vmatmul.mubr.f32.gmra.mxu0 %v4391
      %v4563 = vpop.f32.mrf.mxu0
      %v4564 = vadd.f32 0.0, %v4563
      %v4565 = vpop.f32.mrf.mxu0
      %4566 = vmatprep.mubr.f32.mxu0 0.0
      %4567 = vmatmul.mubr.f32.gmra.mxu0 %v4394
      %v4568 = vpop.f32.mrf.mxu0
      %v4569 = vadd.f32 0.0, %v4568
      %v4570 = vpop.f32.mrf.mxu0
      %4571 = vmatprep.mubr.f32.mxu0 0.0
      %4572 = vmatmul.mubr.f32.gmra.mxu0 %v4397
      %v4573 = vpop.f32.mrf.mxu0
      %v4574 = vadd.f32 0.0, %v4573
      %v4575 = vpop.f32.mrf.mxu0
      %4576 = vmatprep.mubr.f32.mxu0 0.0
      %4577 = vmatmul.mubr.f32.gmra.mxu0 %v4400
      %v4578 = vpop.f32.mrf.mxu0
      %v4579 = vadd.f32 0.0, %v4578
      %v4580 = vpop.f32.mrf.mxu0
      %4581 = vmatprep.mubr.f32.mxu0 0.0
      %4582 = vmatmul.mubr.f32.gmra.mxu0 %v4403
      %v4583 = vpop.f32.mrf.mxu0
      %v4584 = vadd.f32 0.0, %v4583
      %v4585 = vpop.f32.mrf.mxu0
      %4586 = vmatprep.mubr.f32.mxu0 0.0
      %4587 = vmatmul.mubr.f32.gmra.mxu0 %v4406
      %v4588 = vpop.f32.mrf.mxu0
      %v4589 = vadd.f32 0.0, %v4588
      %v4590 = vpop.f32.mrf.mxu0
      %4591 = vmatprep.mubr.f32.mxu0 0.0
      %4592 = vmatmul.mubr.f32.gmra.mxu0 %v4409
      %v4593 = vpop.f32.mrf.mxu0
      %v4594 = vadd.f32 0.0, %v4593
      %v4595 = vpop.f32.mrf.mxu0
      %4596 = vmatprep.mubr.f32.mxu0 0.0
      %4597 = vmatmul.mubr.f32.gmra.mxu0 %v4412
      %v4598 = vpop.f32.mrf.mxu0
      %v4599 = vadd.f32 0.0, %v4598
      %v4600 = vpop.f32.mrf.mxu0
      %4601 = vmatprep.mubr.f32.mxu0 0.0
      %4602 = vmatmul.mubr.f32.gmra.mxu0 %v4415
      %v4603 = vpop.f32.mrf.mxu0
      %v4604 = vadd.f32 0.0, %v4603
      %v4605 = vpop.f32.mrf.mxu0
      %4606 = vmatprep.mubr.f32.mxu0 0.0
      %4607 = vmatmul.mubr.f32.gmra.mxu0 %v4418
      %v4608 = vpop.f32.mrf.mxu0
      %v4609 = vadd.f32 0.0, %v4608
      %v4610 = vpop.f32.mrf.mxu0
      %4611 = vmatprep.mubr.f32.mxu0 0.0
      %4612 = vmatmul.mubr.f32.gmra.mxu0 %v4421
      %v4613 = vpop.f32.mrf.mxu0
      %v4614 = vadd.f32 0.0, %v4613
      %v4615 = vpop.f32.mrf.mxu0
      %4616 = vmatprep.mubr.f32.mxu0 0.0
      %4617 = vmatmul.mubr.f32.gmra.mxu0 %v4424
      %v4618 = vpop.f32.mrf.mxu0
      %v4619 = vadd.f32 0.0, %v4618
      %v4620 = vpop.f32.mrf.mxu0
      %4621 = vmatprep.mubr.f32.mxu0 0.0
      %4622 = vmatmul.mubr.f32.gmra.mxu0 %v4427
      %v4623 = vpop.f32.mrf.mxu0
      %v4624 = vadd.f32 0.0, %v4623
      %v4625 = vpop.f32.mrf.mxu0
      %4626 = vmatprep.mubr.f32.mxu0 0.0
      %4627 = vmatmul.mubr.f32.gmra.mxu0 %v4430
      %v4628 = vpop.f32.mrf.mxu0
      %v4629 = vadd.f32 0.0, %v4628
      %v4630 = vpop.f32.mrf.mxu0
      %4631 = vmatprep.mubr.f32.mxu0 0.0
      %4632 = vmatmul.mubr.f32.gmra.mxu0 %v4433
      %v4633 = vpop.f32.mrf.mxu0
      %v4634 = vadd.f32 0.0, %v4633
      %v4635 = vpop.f32.mrf.mxu0
      %4636 = vmatprep.mubr.f32.mxu0 0.0
      %4637 = vmatmul.mubr.f32.gmra.mxu0 %v4436
      %v4638 = vpop.f32.mrf.mxu0
      %v4639 = vadd.f32 0.0, %v4638
      %v4640 = vpop.f32.mrf.mxu0
      %4641 = vmatprep.mubr.f32.mxu0 0.0
      %4642 = vmatmul.mubr.f32.gmra.mxu0 %v4439
      %v4643 = vpop.f32.mrf.mxu0
      %v4644 = vadd.f32 0.0, %v4643
      %v4645 = vpop.f32.mrf.mxu0
      %4646 = vmatprep.mubr.f32.mxu0 0.0
      %4647 = vmatmul.mubr.f32.gmra.mxu0 %v4442
      %v4648 = vpop.f32.mrf.mxu0
      %v4649 = vadd.f32 0.0, %v4648
      %v4650 = vpop.f32.mrf.mxu0
      %4651 = vmatprep.mubr.f32.mxu0 0.0
      %4652 = vmatmul.mubr.f32.gmra.mxu0 %v4445
      %v4653 = vpop.f32.mrf.mxu0
      %v4654 = vadd.f32 0.0, %v4653
      %v4655 = vpop.f32.mrf.mxu0
      %4656 = vmatprep.mubr.f32.mxu0 0.0
      %4657 = vmatmul.mubr.f32.gmra.mxu0 %v4448
      %v4658 = vpop.f32.mrf.mxu0
      %v4659 = vadd.f32 0.0, %v4658
      %v4660 = vpop.f32.mrf.mxu0
      %4661 = vmatprep.mubr.f32.mxu0 0.0
      %4662 = vmatmul.mubr.f32.gmra.mxu0 %v4451
      %v4663 = vpop.f32.mrf.mxu0
      %v4664 = vadd.f32 0.0, %v4663
      %v4665 = vpop.f32.mrf.mxu0
      %4666 = vmatprep.mubr.f32.mxu0 0.0
      %4667 = vmatmul.mubr.f32.gmra.mxu0 %v4454
      %v4668 = vpop.f32.mrf.mxu0
      %v4669 = vadd.f32 0.0, %v4668
      %v4670 = vpop.f32.mrf.mxu0
      %4671 = vmatprep.mubr.f32.mxu0 0.0
      %4672 = vmatmul.mubr.f32.gmra.mxu0 %v4457
      %v4673 = vpop.f32.mrf.mxu0
      %v4674 = vadd.f32 0.0, %v4673
      %v4675 = vpop.f32.mrf.mxu0
      %4676 = vmatprep.mubr.f32.mxu0 0.0
      %4677 = vmatmul.mubr.f32.gmra.mxu0 %v4460
      %v4678 = vpop.f32.mrf.mxu0
      %v4679 = vadd.f32 0.0, %v4678
      %v4680 = vpop.f32.mrf.mxu0
      %4681 = vmatprep.mubr.f32.mxu0 0.0
      %4682 = vmatmul.mubr.f32.gmra.mxu0 %v4463
      %v4683 = vpop.f32.mrf.mxu0
      %v4684 = vadd.f32 0.0, %v4683
      %v4685 = vpop.f32.mrf.mxu0
      %4686 = vmatprep.mubr.f32.mxu0 0.0
      %4687 = vmatmul.mubr.f32.gmra.mxu0 %v4466
      %v4688 = vpop.f32.mrf.mxu0
      %v4689 = vadd.f32 0.0, %v4688
      %v4690 = vpop.f32.mrf.mxu0
      %4691 = vmatprep.mubr.f32.mxu0 0.0
      %4692 = vmatmul.mubr.f32.gmra.mxu0 %v4469
      %v4693 = vpop.f32.mrf.mxu0
      %v4694 = vadd.f32 0.0, %v4693
      %v4695 = vpop.f32.mrf.mxu0
      %4696 = vmatprep.mubr.f32.mxu0 0.0
      %4697 = vmatmul.mubr.f32.gmra.mxu0 %v4472
      %v4698 = vpop.f32.mrf.mxu0
      %v4699 = vadd.f32 0.0, %v4698
      %v4700 = vpop.f32.mrf.mxu0
      %4701 = vdwg.mxu0
      %v4702 = vadd.f32 %v4280, %v4544
      %v4703 = vadd.f32 %v4281, %v4549
      %v4704 = vadd.f32 %v4282, %v4554
      %v4705 = vadd.f32 %v4283, %v4559
      %v4706 = vadd.f32 %v4284, %v4564
      %v4707 = vadd.f32 %v4285, %v4569
      %v4708 = vadd.f32 %v4286, %v4574
      %v4709 = vadd.f32 %v4287, %v4579
      %v4710 = vadd.f32 %v4288, %v4584
      %v4711 = vadd.f32 %v4289, %v4589
      %v4712 = vadd.f32 %v4290, %v4594
      %v4713 = vadd.f32 %v4291, %v4599
      %v4714 = vadd.f32 %v4292, %v4604
      %v4715 = vadd.f32 %v4293, %v4609
      %v4716 = vadd.f32 %v4294, %v4614
      %v4717 = vadd.f32 %v4295, %v4619
      %v4718 = vadd.f32 %v4296, %v4624
      %v4719 = vadd.f32 %v4297, %v4629
      %v4720 = vadd.f32 %v4298, %v4634
      %v4721 = vadd.f32 %v4299, %v4639
      %v4722 = vadd.f32 %v4300, %v4644
      %v4723 = vadd.f32 %v4301, %v4649
      %v4724 = vadd.f32 %v4302, %v4654
      %v4725 = vadd.f32 %v4303, %v4659
      %v4726 = vadd.f32 %v4304, %v4664
      %v4727 = vadd.f32 %v4305, %v4669
      %v4728 = vadd.f32 %v4306, %v4674
      %v4729 = vadd.f32 %v4307, %v4679
      %v4730 = vadd.f32 %v4308, %v4684
      %v4731 = vadd.f32 %v4309, %v4689
      %v4732 = vadd.f32 %v4310, %v4694
      %v4733 = vadd.f32 %v4311, %v4699
      %v4734 = vmax.f32 %v4702, 0.0
      %v4735 = vmax.f32 %v4703, 0.0
      %v4736 = vmax.f32 %v4704, 0.0
      %v4737 = vmax.f32 %v4705, 0.0
      %v4738 = vmax.f32 %v4706, 0.0
      %v4739 = vmax.f32 %v4707, 0.0
      %v4740 = vmax.f32 %v4708, 0.0
      %v4741 = vmax.f32 %v4709, 0.0
      %v4742 = vmax.f32 %v4710, 0.0
      %v4743 = vmax.f32 %v4711, 0.0
      %v4744 = vmax.f32 %v4712, 0.0
      %v4745 = vmax.f32 %v4713, 0.0
      %v4746 = vmax.f32 %v4714, 0.0
      %v4747 = vmax.f32 %v4715, 0.0
      %v4748 = vmax.f32 %v4716, 0.0
      %v4749 = vmax.f32 %v4717, 0.0
      %v4750 = vmax.f32 %v4718, 0.0
      %v4751 = vmax.f32 %v4719, 0.0
      %v4752 = vmax.f32 %v4720, 0.0
      %v4753 = vmax.f32 %v4721, 0.0
      %v4754 = vmax.f32 %v4722, 0.0
      %v4755 = vmax.f32 %v4723, 0.0
      %v4756 = vmax.f32 %v4724, 0.0
      %v4757 = vmax.f32 %v4725, 0.0
      %v4758 = vmax.f32 %v4726, 0.0
      %v4759 = vmax.f32 %v4727, 0.0
      %v4760 = vmax.f32 %v4728, 0.0
      %v4761 = vmax.f32 %v4729, 0.0
      %v4762 = vmax.f32 %v4730, 0.0
      %v4763 = vmax.f32 %v4731, 0.0
      %v4764 = vmax.f32 %v4732, 0.0
      %v4765 = vmax.f32 %v4733, 0.0
      %v4766 = vld [vmem:[%s5] sm:$0xf]
      %v4767 = vld [vmem:[%s6] sm:$0x1]
      %v4769 = vlaneseq
      %v4770 = vshrl.u32 %v4769, 7
      %v4771 = vsub.s32 0, %v4770
      %v4772 = vrot.slane %v4767, %v4771
      %v4775 = vsel %vm373, %v4734, 0
      %v4778 = vsel %vm373, %v4735, 0
      %v4781 = vsel %vm373, %v4736, 0
      %v4784 = vsel %vm373, %v4737, 0
      %v4787 = vsel %vm373, %v4738, 0
      %v4790 = vsel %vm373, %v4739, 0
      %v4793 = vsel %vm373, %v4740, 0
      %v4796 = vsel %vm373, %v4741, 0
      %v4799 = vsel %vm373, %v4742, 0
      %v4802 = vsel %vm373, %v4743, 0
      %v4805 = vsel %vm373, %v4744, 0
      %v4808 = vsel %vm373, %v4745, 0
      %v4811 = vsel %vm373, %v4746, 0
      %v4814 = vsel %vm373, %v4747, 0
      %v4817 = vsel %vm373, %v4748, 0
      %v4820 = vsel %vm373, %v4749, 0
      %v4823 = vsel %vm373, %v4750, 0
      %v4826 = vsel %vm373, %v4751, 0
      %v4829 = vsel %vm373, %v4752, 0
      %v4832 = vsel %vm373, %v4753, 0
      %v4835 = vsel %vm373, %v4754, 0
      %v4838 = vsel %vm373, %v4755, 0
      %v4841 = vsel %vm373, %v4756, 0
      %v4844 = vsel %vm373, %v4757, 0
      %v4847 = vsel %vm373, %v4758, 0
      %v4850 = vsel %vm373, %v4759, 0
      %v4853 = vsel %vm373, %v4760, 0
      %v4856 = vsel %vm373, %v4761, 0
      %v4859 = vsel %vm373, %v4762, 0
      %v4862 = vsel %vm373, %v4763, 0
      %v4865 = vsel %vm373, %v4764, 0
      %v4868 = vsel %vm373, %v4765, 0
      %v4871 = vsel %vm470, %v4766, 0
      %4873 = vmatprep.subr.mxu0 0.0
      %4874 = vmatpush1.msra.mxu0 0.0
      %4875 = vmatprep.subr.mxu0 0.0
      %4876 = vmatpush1.msra.mxu0 0.0
      %4877 = vmatprep.subr.mxu0 0.0
      %4878 = vmatpush1.msra.mxu0 0.0
      %4879 = vmatprep.subr.mxu0 0.0
      %4880 = vmatpush1.msra.mxu0 0.0
      %4881 = vmatprep.subr.mxu0 0.0
      %4882 = vmatpush1.msra.mxu0 0.0
      %4883 = vmatprep.subr.mxu0 0.0
      %4884 = vmatpush1.msra.mxu0 0.0
      %4885 = vmatprep.subr.mxu0 0.0
      %4886 = vmatpush1.msra.mxu0 0.0
      %4887 = vmatprep.subr.mxu0 0.0
      %4888 = vmatpush1.msra.mxu0 0.0
      %4889 = vmatprep.subr.mxu0 0.0
      %4890 = vmatpush1.msra.mxu0 0.0
      %4891 = vmatprep.subr.mxu0 0.0
      %4892 = vmatpush1.msra.mxu0 0.0
      %4893 = vmatprep.subr.mxu0 0.0
      %4894 = vmatpush1.msra.mxu0 0.0
      %4895 = vmatprep.subr.mxu0 0.0
      %4896 = vmatpush1.msra.mxu0 0.0
      %4897 = vmatprep.subr.mxu0 0.0
      %4898 = vmatpush1.msra.mxu0 0.0
      %4899 = vmatprep.subr.mxu0 0.0
      %4900 = vmatpush1.msra.mxu0 0.0
      %4901 = vmatprep.subr.mxu0 0.0
      %4902 = vmatpush1.msra.mxu0 0.0
      %4903 = vmatprep.subr.mxu0 0.0
      %4904 = vmatpush1.msra.mxu0 %v4871
      %4905 = vmatprep.subr.mxu0 0.0
      %4906 = vmatpush2.msra.mxu0 0.0
      %4907 = vmatprep.subr.mxu0 0.0
      %4908 = vmatpush2.msra.mxu0 0.0
      %4909 = vmatprep.subr.mxu0 0.0
      %4910 = vmatpush2.msra.mxu0 0.0
      %4911 = vmatprep.subr.mxu0 0.0
      %4912 = vmatpush2.msra.mxu0 0.0
      %4913 = vmatprep.subr.mxu0 0.0
      %4914 = vmatpush2.msra.mxu0 0.0
      %4915 = vmatprep.subr.mxu0 0.0
      %4916 = vmatpush2.msra.mxu0 0.0
      %4917 = vmatprep.subr.mxu0 0.0
      %4918 = vmatpush2.msra.mxu0 0.0
      %4919 = vmatprep.subr.mxu0 0.0
      %4920 = vmatpush2.msra.mxu0 0.0
      %4921 = vmatprep.subr.mxu0 0.0
      %4922 = vmatpush2.msra.mxu0 0.0
      %4923 = vmatprep.subr.mxu0 0.0
      %4924 = vmatpush2.msra.mxu0 0.0
      %4925 = vmatprep.subr.mxu0 0.0
      %4926 = vmatpush2.msra.mxu0 0.0
      %4927 = vmatprep.subr.mxu0 0.0
      %4928 = vmatpush2.msra.mxu0 0.0
      %4929 = vmatprep.subr.mxu0 0.0
      %4930 = vmatpush2.msra.mxu0 0.0
      %4931 = vmatprep.subr.mxu0 0.0
      %4932 = vmatpush2.msra.mxu0 0.0
      %4933 = vmatprep.subr.mxu0 0.0
      %4934 = vmatpush2.msra.mxu0 0.0
      %4935 = vmatprep.subr.mxu0 0.0
      %4936 = vmatpush2.msra.mxu0 0.0
      %4937 = vmatprep.mubr.f32.mxu0 0.0
      %4938 = vmatmul.mubr.f32.gmra.mxu0 %v4775
      %v4939 = vpop.f32.mrf.mxu0
      %v4940 = vadd.f32 %v4772, %v4939
      %v4941 = vpop.f32.mrf.mxu0
      %4942 = vmatprep.mubr.f32.mxu0 0.0
      %4943 = vmatmul.mubr.f32.gmra.mxu0 %v4778
      %v4944 = vpop.f32.mrf.mxu0
      %v4945 = vadd.f32 %v4772, %v4944
      %v4946 = vpop.f32.mrf.mxu0
      %4947 = vmatprep.mubr.f32.mxu0 0.0
      %4948 = vmatmul.mubr.f32.gmra.mxu0 %v4781
      %v4949 = vpop.f32.mrf.mxu0
      %v4950 = vadd.f32 %v4772, %v4949
      %v4951 = vpop.f32.mrf.mxu0
      %4952 = vmatprep.mubr.f32.mxu0 0.0
      %4953 = vmatmul.mubr.f32.gmra.mxu0 %v4784
      %v4954 = vpop.f32.mrf.mxu0
      %v4955 = vadd.f32 %v4772, %v4954
      %v4956 = vpop.f32.mrf.mxu0
      %4957 = vmatprep.mubr.f32.mxu0 0.0
      %4958 = vmatmul.mubr.f32.gmra.mxu0 %v4787
      %v4959 = vpop.f32.mrf.mxu0
      %v4960 = vadd.f32 %v4772, %v4959
      %v4961 = vpop.f32.mrf.mxu0
      %4962 = vmatprep.mubr.f32.mxu0 0.0
      %4963 = vmatmul.mubr.f32.gmra.mxu0 %v4790
      %v4964 = vpop.f32.mrf.mxu0
      %v4965 = vadd.f32 %v4772, %v4964
      %v4966 = vpop.f32.mrf.mxu0
      %4967 = vmatprep.mubr.f32.mxu0 0.0
      %4968 = vmatmul.mubr.f32.gmra.mxu0 %v4793
      %v4969 = vpop.f32.mrf.mxu0
      %v4970 = vadd.f32 %v4772, %v4969
      %v4971 = vpop.f32.mrf.mxu0
      %4972 = vmatprep.mubr.f32.mxu0 0.0
      %4973 = vmatmul.mubr.f32.gmra.mxu0 %v4796
      %v4974 = vpop.f32.mrf.mxu0
      %v4975 = vadd.f32 %v4772, %v4974
      %v4976 = vpop.f32.mrf.mxu0
      %4977 = vmatprep.mubr.f32.mxu0 0.0
      %4978 = vmatmul.mubr.f32.gmra.mxu0 %v4799
      %v4979 = vpop.f32.mrf.mxu0
      %v4980 = vadd.f32 %v4772, %v4979
      %v4981 = vpop.f32.mrf.mxu0
      %4982 = vmatprep.mubr.f32.mxu0 0.0
      %4983 = vmatmul.mubr.f32.gmra.mxu0 %v4802
      %v4984 = vpop.f32.mrf.mxu0
      %v4985 = vadd.f32 %v4772, %v4984
      %v4986 = vpop.f32.mrf.mxu0
      %4987 = vmatprep.mubr.f32.mxu0 0.0
      %4988 = vmatmul.mubr.f32.gmra.mxu0 %v4805
      %v4989 = vpop.f32.mrf.mxu0
      %v4990 = vadd.f32 %v4772, %v4989
      %v4991 = vpop.f32.mrf.mxu0
      %4992 = vmatprep.mubr.f32.mxu0 0.0
      %4993 = vmatmul.mubr.f32.gmra.mxu0 %v4808
      %v4994 = vpop.f32.mrf.mxu0
      %v4995 = vadd.f32 %v4772, %v4994
      %v4996 = vpop.f32.mrf.mxu0
      %4997 = vmatprep.mubr.f32.mxu0 0.0
      %4998 = vmatmul.mubr.f32.gmra.mxu0 %v4811
      %v4999 = vpop.f32.mrf.mxu0
      %v5000 = vadd.f32 %v4772, %v4999
      %v5001 = vpop.f32.mrf.mxu0
      %5002 = vmatprep.mubr.f32.mxu0 0.0
      %5003 = vmatmul.mubr.f32.gmra.mxu0 %v4814
      %v5004 = vpop.f32.mrf.mxu0
      %v5005 = vadd.f32 %v4772, %v5004
      %v5006 = vpop.f32.mrf.mxu0
      %5007 = vmatprep.mubr.f32.mxu0 0.0
      %5008 = vmatmul.mubr.f32.gmra.mxu0 %v4817
      %v5009 = vpop.f32.mrf.mxu0
      %v5010 = vadd.f32 %v4772, %v5009
      %v5011 = vpop.f32.mrf.mxu0
      %5012 = vmatprep.mubr.f32.mxu0 0.0
      %5013 = vmatmul.mubr.f32.gmra.mxu0 %v4820
      %v5014 = vpop.f32.mrf.mxu0
      %v5015 = vadd.f32 %v4772, %v5014
      %v5016 = vpop.f32.mrf.mxu0
      %5017 = vmatprep.mubr.f32.mxu0 0.0
      %5018 = vmatmul.mubr.f32.gmra.mxu0 %v4823
      %v5019 = vpop.f32.mrf.mxu0
      %v5020 = vadd.f32 %v4772, %v5019
      %v5021 = vpop.f32.mrf.mxu0
      %5022 = vmatprep.mubr.f32.mxu0 0.0
      %5023 = vmatmul.mubr.f32.gmra.mxu0 %v4826
      %v5024 = vpop.f32.mrf.mxu0
      %v5025 = vadd.f32 %v4772, %v5024
      %v5026 = vpop.f32.mrf.mxu0
      %5027 = vmatprep.mubr.f32.mxu0 0.0
      %5028 = vmatmul.mubr.f32.gmra.mxu0 %v4829
      %v5029 = vpop.f32.mrf.mxu0
      %v5030 = vadd.f32 %v4772, %v5029
      %v5031 = vpop.f32.mrf.mxu0
      %5032 = vmatprep.mubr.f32.mxu0 0.0
      %5033 = vmatmul.mubr.f32.gmra.mxu0 %v4832
      %v5034 = vpop.f32.mrf.mxu0
      %v5035 = vadd.f32 %v4772, %v5034
      %v5036 = vpop.f32.mrf.mxu0
      %5037 = vmatprep.mubr.f32.mxu0 0.0
      %5038 = vmatmul.mubr.f32.gmra.mxu0 %v4835
      %v5039 = vpop.f32.mrf.mxu0
      %v5040 = vadd.f32 %v4772, %v5039
      %v5041 = vpop.f32.mrf.mxu0
      %5042 = vmatprep.mubr.f32.mxu0 0.0
      %5043 = vmatmul.mubr.f32.gmra.mxu0 %v4838
      %v5044 = vpop.f32.mrf.mxu0
      %v5045 = vadd.f32 %v4772, %v5044
      %v5046 = vpop.f32.mrf.mxu0
      %5047 = vmatprep.mubr.f32.mxu0 0.0
      %5048 = vmatmul.mubr.f32.gmra.mxu0 %v4841
      %v5049 = vpop.f32.mrf.mxu0
      %v5050 = vadd.f32 %v4772, %v5049
      %v5051 = vpop.f32.mrf.mxu0
      %5052 = vmatprep.mubr.f32.mxu0 0.0
      %5053 = vmatmul.mubr.f32.gmra.mxu0 %v4844
      %v5054 = vpop.f32.mrf.mxu0
      %v5055 = vadd.f32 %v4772, %v5054
      %v5056 = vpop.f32.mrf.mxu0
      %5057 = vmatprep.mubr.f32.mxu0 0.0
      %5058 = vmatmul.mubr.f32.gmra.mxu0 %v4847
      %v5059 = vpop.f32.mrf.mxu0
      %v5060 = vadd.f32 %v4772, %v5059
      %v5061 = vpop.f32.mrf.mxu0
      %5062 = vmatprep.mubr.f32.mxu0 0.0
      %5063 = vmatmul.mubr.f32.gmra.mxu0 %v4850
      %v5064 = vpop.f32.mrf.mxu0
      %v5065 = vadd.f32 %v4772, %v5064
      %v5066 = vpop.f32.mrf.mxu0
      %5067 = vmatprep.mubr.f32.mxu0 0.0
      %5068 = vmatmul.mubr.f32.gmra.mxu0 %v4853
      %v5069 = vpop.f32.mrf.mxu0
      %v5070 = vadd.f32 %v4772, %v5069
      %v5071 = vpop.f32.mrf.mxu0
      %5072 = vmatprep.mubr.f32.mxu0 0.0
      %5073 = vmatmul.mubr.f32.gmra.mxu0 %v4856
      %v5074 = vpop.f32.mrf.mxu0
      %v5075 = vadd.f32 %v4772, %v5074
      %v5076 = vpop.f32.mrf.mxu0
      %5077 = vmatprep.mubr.f32.mxu0 0.0
      %5078 = vmatmul.mubr.f32.gmra.mxu0 %v4859
      %v5079 = vpop.f32.mrf.mxu0
      %v5080 = vadd.f32 %v4772, %v5079
      %v5081 = vpop.f32.mrf.mxu0
      %5082 = vmatprep.mubr.f32.mxu0 0.0
      %5083 = vmatmul.mubr.f32.gmra.mxu0 %v4862
      %v5084 = vpop.f32.mrf.mxu0
      %v5085 = vadd.f32 %v4772, %v5084
      %v5086 = vpop.f32.mrf.mxu0
      %5087 = vmatprep.mubr.f32.mxu0 0.0
      %5088 = vmatmul.mubr.f32.gmra.mxu0 %v4865
      %v5089 = vpop.f32.mrf.mxu0
      %v5090 = vadd.f32 %v4772, %v5089
      %v5091 = vpop.f32.mrf.mxu0
      %5092 = vmatprep.mubr.f32.mxu0 0.0
      %5093 = vmatmul.mubr.f32.gmra.mxu0 %v4868
      %v5094 = vpop.f32.mrf.mxu0
      %v5095 = vadd.f32 %v4772, %v5094
      %v5096 = vpop.f32.mrf.mxu0
      %5097 = vdwg.mxu0
      %v5098 = vld [vmem:[%s7] sm:$0xf]
      %v5099 = vld [vmem:[%s8] sm:$0x1]
      %v5101 = vlaneseq
      %v5102 = vshrl.u32 %v5101, 7
      %v5103 = vsub.s32 0, %v5102
      %v5104 = vrot.slane %v5099, %v5103
      %v5107 = vsel %vm470, %v5098, 0
      %5109 = vmatprep.subr.mxu0 0.0
      %5110 = vmatpush1.msra.mxu0 0.0
      %5111 = vmatprep.subr.mxu0 0.0
      %5112 = vmatpush1.msra.mxu0 0.0
      %5113 = vmatprep.subr.mxu0 0.0
      %5114 = vmatpush1.msra.mxu0 0.0
      %5115 = vmatprep.subr.mxu0 0.0
      %5116 = vmatpush1.msra.mxu0 0.0
      %5117 = vmatprep.subr.mxu0 0.0
      %5118 = vmatpush1.msra.mxu0 0.0
      %5119 = vmatprep.subr.mxu0 0.0
      %5120 = vmatpush1.msra.mxu0 0.0
      %5121 = vmatprep.subr.mxu0 0.0
      %5122 = vmatpush1.msra.mxu0 0.0
      %5123 = vmatprep.subr.mxu0 0.0
      %5124 = vmatpush1.msra.mxu0 0.0
      %5125 = vmatprep.subr.mxu0 0.0
      %5126 = vmatpush1.msra.mxu0 0.0
      %5127 = vmatprep.subr.mxu0 0.0
      %5128 = vmatpush1.msra.mxu0 0.0
      %5129 = vmatprep.subr.mxu0 0.0
      %5130 = vmatpush1.msra.mxu0 0.0
      %5131 = vmatprep.subr.mxu0 0.0
      %5132 = vmatpush1.msra.mxu0 0.0
      %5133 = vmatprep.subr.mxu0 0.0
      %5134 = vmatpush1.msra.mxu0 0.0
      %5135 = vmatprep.subr.mxu0 0.0
      %5136 = vmatpush1.msra.mxu0 0.0
      %5137 = vmatprep.subr.mxu0 0.0
      %5138 = vmatpush1.msra.mxu0 0.0
      %5139 = vmatprep.subr.mxu0 0.0
      %5140 = vmatpush1.msra.mxu0 %v5107
      %5141 = vmatprep.subr.mxu0 0.0
      %5142 = vmatpush2.msra.mxu0 0.0
      %5143 = vmatprep.subr.mxu0 0.0
      %5144 = vmatpush2.msra.mxu0 0.0
      %5145 = vmatprep.subr.mxu0 0.0
      %5146 = vmatpush2.msra.mxu0 0.0
      %5147 = vmatprep.subr.mxu0 0.0
      %5148 = vmatpush2.msra.mxu0 0.0
      %5149 = vmatprep.subr.mxu0 0.0
      %5150 = vmatpush2.msra.mxu0 0.0
      %5151 = vmatprep.subr.mxu0 0.0
      %5152 = vmatpush2.msra.mxu0 0.0
      %5153 = vmatprep.subr.mxu0 0.0
      %5154 = vmatpush2.msra.mxu0 0.0
      %5155 = vmatprep.subr.mxu0 0.0
      %5156 = vmatpush2.msra.mxu0 0.0
      %5157 = vmatprep.subr.mxu0 0.0
      %5158 = vmatpush2.msra.mxu0 0.0
      %5159 = vmatprep.subr.mxu0 0.0
      %5160 = vmatpush2.msra.mxu0 0.0
      %5161 = vmatprep.subr.mxu0 0.0
      %5162 = vmatpush2.msra.mxu0 0.0
      %5163 = vmatprep.subr.mxu0 0.0
      %5164 = vmatpush2.msra.mxu0 0.0
      %5165 = vmatprep.subr.mxu0 0.0
      %5166 = vmatpush2.msra.mxu0 0.0
      %5167 = vmatprep.subr.mxu0 0.0
      %5168 = vmatpush2.msra.mxu0 0.0
      %5169 = vmatprep.subr.mxu0 0.0
      %5170 = vmatpush2.msra.mxu0 0.0
      %5171 = vmatprep.subr.mxu0 0.0
      %5172 = vmatpush2.msra.mxu0 0.0
      %5173 = vmatprep.mubr.f32.mxu0 0.0
      %5174 = vmatmul.mubr.f32.gmra.mxu0 %v375
      %v5175 = vpop.f32.mrf.mxu0
      %v5176 = vadd.f32 %v5104, %v5175
      %v5177 = vpop.f32.mrf.mxu0
      %5178 = vmatprep.mubr.f32.mxu0 0.0
      %5179 = vmatmul.mubr.f32.gmra.mxu0 %v378
      %v5180 = vpop.f32.mrf.mxu0
      %v5181 = vadd.f32 %v5104, %v5180
      %v5182 = vpop.f32.mrf.mxu0
      %5183 = vmatprep.mubr.f32.mxu0 0.0
      %5184 = vmatmul.mubr.f32.gmra.mxu0 %v381
      %v5185 = vpop.f32.mrf.mxu0
      %v5186 = vadd.f32 %v5104, %v5185
      %v5187 = vpop.f32.mrf.mxu0
      %5188 = vmatprep.mubr.f32.mxu0 0.0
      %5189 = vmatmul.mubr.f32.gmra.mxu0 %v384
      %v5190 = vpop.f32.mrf.mxu0
      %v5191 = vadd.f32 %v5104, %v5190
      %v5192 = vpop.f32.mrf.mxu0
      %5193 = vmatprep.mubr.f32.mxu0 0.0
      %5194 = vmatmul.mubr.f32.gmra.mxu0 %v387
      %v5195 = vpop.f32.mrf.mxu0
      %v5196 = vadd.f32 %v5104, %v5195
      %v5197 = vpop.f32.mrf.mxu0
      %5198 = vmatprep.mubr.f32.mxu0 0.0
      %5199 = vmatmul.mubr.f32.gmra.mxu0 %v390
      %v5200 = vpop.f32.mrf.mxu0
      %v5201 = vadd.f32 %v5104, %v5200
      %v5202 = vpop.f32.mrf.mxu0
      %5203 = vmatprep.mubr.f32.mxu0 0.0
      %5204 = vmatmul.mubr.f32.gmra.mxu0 %v393
      %v5205 = vpop.f32.mrf.mxu0
      %v5206 = vadd.f32 %v5104, %v5205
      %v5207 = vpop.f32.mrf.mxu0
      %5208 = vmatprep.mubr.f32.mxu0 0.0
      %5209 = vmatmul.mubr.f32.gmra.mxu0 %v396
      %v5210 = vpop.f32.mrf.mxu0
      %v5211 = vadd.f32 %v5104, %v5210
      %v5212 = vpop.f32.mrf.mxu0
      %5213 = vmatprep.mubr.f32.mxu0 0.0
      %5214 = vmatmul.mubr.f32.gmra.mxu0 %v399
      %v5215 = vpop.f32.mrf.mxu0
      %v5216 = vadd.f32 %v5104, %v5215
      %v5217 = vpop.f32.mrf.mxu0
      %5218 = vmatprep.mubr.f32.mxu0 0.0
      %5219 = vmatmul.mubr.f32.gmra.mxu0 %v402
      %v5220 = vpop.f32.mrf.mxu0
      %v5221 = vadd.f32 %v5104, %v5220
      %v5222 = vpop.f32.mrf.mxu0
      %5223 = vmatprep.mubr.f32.mxu0 0.0
      %5224 = vmatmul.mubr.f32.gmra.mxu0 %v405
      %v5225 = vpop.f32.mrf.mxu0
      %v5226 = vadd.f32 %v5104, %v5225
      %v5227 = vpop.f32.mrf.mxu0
      %5228 = vmatprep.mubr.f32.mxu0 0.0
      %5229 = vmatmul.mubr.f32.gmra.mxu0 %v408
      %v5230 = vpop.f32.mrf.mxu0
      %v5231 = vadd.f32 %v5104, %v5230
      %v5232 = vpop.f32.mrf.mxu0
      %5233 = vmatprep.mubr.f32.mxu0 0.0
      %5234 = vmatmul.mubr.f32.gmra.mxu0 %v411
      %v5235 = vpop.f32.mrf.mxu0
      %v5236 = vadd.f32 %v5104, %v5235
      %v5237 = vpop.f32.mrf.mxu0
      %5238 = vmatprep.mubr.f32.mxu0 0.0
      %5239 = vmatmul.mubr.f32.gmra.mxu0 %v414
      %v5240 = vpop.f32.mrf.mxu0
      %v5241 = vadd.f32 %v5104, %v5240
      %v5242 = vpop.f32.mrf.mxu0
      %5243 = vmatprep.mubr.f32.mxu0 0.0
      %5244 = vmatmul.mubr.f32.gmra.mxu0 %v417
      %v5245 = vpop.f32.mrf.mxu0
      %v5246 = vadd.f32 %v5104, %v5245
      %v5247 = vpop.f32.mrf.mxu0
      %5248 = vmatprep.mubr.f32.mxu0 0.0
      %5249 = vmatmul.mubr.f32.gmra.mxu0 %v420
      %v5250 = vpop.f32.mrf.mxu0
      %v5251 = vadd.f32 %v5104, %v5250
      %v5252 = vpop.f32.mrf.mxu0
      %5253 = vmatprep.mubr.f32.mxu0 0.0
      %5254 = vmatmul.mubr.f32.gmra.mxu0 %v423
      %v5255 = vpop.f32.mrf.mxu0
      %v5256 = vadd.f32 %v5104, %v5255
      %v5257 = vpop.f32.mrf.mxu0
      %5258 = vmatprep.mubr.f32.mxu0 0.0
      %5259 = vmatmul.mubr.f32.gmra.mxu0 %v426
      %v5260 = vpop.f32.mrf.mxu0
      %v5261 = vadd.f32 %v5104, %v5260
      %v5262 = vpop.f32.mrf.mxu0
      %5263 = vmatprep.mubr.f32.mxu0 0.0
      %5264 = vmatmul.mubr.f32.gmra.mxu0 %v429
      %v5265 = vpop.f32.mrf.mxu0
      %v5266 = vadd.f32 %v5104, %v5265
      %v5267 = vpop.f32.mrf.mxu0
      %5268 = vmatprep.mubr.f32.mxu0 0.0
      %5269 = vmatmul.mubr.f32.gmra.mxu0 %v432
      %v5270 = vpop.f32.mrf.mxu0
      %v5271 = vadd.f32 %v5104, %v5270
      %v5272 = vpop.f32.mrf.mxu0
      %5273 = vmatprep.mubr.f32.mxu0 0.0
      %5274 = vmatmul.mubr.f32.gmra.mxu0 %v435
      %v5275 = vpop.f32.mrf.mxu0
      %v5276 = vadd.f32 %v5104, %v5275
      %v5277 = vpop.f32.mrf.mxu0
      %5278 = vmatprep.mubr.f32.mxu0 0.0
      %5279 = vmatmul.mubr.f32.gmra.mxu0 %v438
      %v5280 = vpop.f32.mrf.mxu0
      %v5281 = vadd.f32 %v5104, %v5280
      %v5282 = vpop.f32.mrf.mxu0
      %5283 = vmatprep.mubr.f32.mxu0 0.0
      %5284 = vmatmul.mubr.f32.gmra.mxu0 %v441
      %v5285 = vpop.f32.mrf.mxu0
      %v5286 = vadd.f32 %v5104, %v5285
      %v5287 = vpop.f32.mrf.mxu0
      %5288 = vmatprep.mubr.f32.mxu0 0.0
      %5289 = vmatmul.mubr.f32.gmra.mxu0 %v444
      %v5290 = vpop.f32.mrf.mxu0
      %v5291 = vadd.f32 %v5104, %v5290
      %v5292 = vpop.f32.mrf.mxu0
      %5293 = vmatprep.mubr.f32.mxu0 0.0
      %5294 = vmatmul.mubr.f32.gmra.mxu0 %v447
      %v5295 = vpop.f32.mrf.mxu0
      %v5296 = vadd.f32 %v5104, %v5295
      %v5297 = vpop.f32.mrf.mxu0
      %5298 = vmatprep.mubr.f32.mxu0 0.0
      %5299 = vmatmul.mubr.f32.gmra.mxu0 %v450
      %v5300 = vpop.f32.mrf.mxu0
      %v5301 = vadd.f32 %v5104, %v5300
      %v5302 = vpop.f32.mrf.mxu0
      %5303 = vmatprep.mubr.f32.mxu0 0.0
      %5304 = vmatmul.mubr.f32.gmra.mxu0 %v453
      %v5305 = vpop.f32.mrf.mxu0
      %v5306 = vadd.f32 %v5104, %v5305
      %v5307 = vpop.f32.mrf.mxu0
      %5308 = vmatprep.mubr.f32.mxu0 0.0
      %5309 = vmatmul.mubr.f32.gmra.mxu0 %v456
      %v5310 = vpop.f32.mrf.mxu0
      %v5311 = vadd.f32 %v5104, %v5310
      %v5312 = vpop.f32.mrf.mxu0
      %5313 = vmatprep.mubr.f32.mxu0 0.0
      %5314 = vmatmul.mubr.f32.gmra.mxu0 %v459
      %v5315 = vpop.f32.mrf.mxu0
      %v5316 = vadd.f32 %v5104, %v5315
      %v5317 = vpop.f32.mrf.mxu0
      %5318 = vmatprep.mubr.f32.mxu0 0.0
      %5319 = vmatmul.mubr.f32.gmra.mxu0 %v462
      %v5320 = vpop.f32.mrf.mxu0
      %v5321 = vadd.f32 %v5104, %v5320
      %v5322 = vpop.f32.mrf.mxu0
      %5323 = vmatprep.mubr.f32.mxu0 0.0
      %5324 = vmatmul.mubr.f32.gmra.mxu0 %v465
      %v5325 = vpop.f32.mrf.mxu0
      %v5326 = vadd.f32 %v5104, %v5325
      %v5327 = vpop.f32.mrf.mxu0
      %5328 = vmatprep.mubr.f32.mxu0 0.0
      %5329 = vmatmul.mubr.f32.gmra.mxu0 %v468
      %v5330 = vpop.f32.mrf.mxu0
      %v5331 = vadd.f32 %v5104, %v5330
      %v5332 = vpop.f32.mrf.mxu0
      %5333 = vdwg.mxu0
      %v5334 = vadd.f32 %v4940, %v5176
      %v5335 = vadd.f32 %v4945, %v5181
      %v5336 = vadd.f32 %v4950, %v5186
      %v5337 = vadd.f32 %v4955, %v5191
      %v5338 = vadd.f32 %v4960, %v5196
      %v5339 = vadd.f32 %v4965, %v5201
      %v5340 = vadd.f32 %v4970, %v5206
      %v5341 = vadd.f32 %v4975, %v5211
      %v5342 = vadd.f32 %v4980, %v5216
      %v5343 = vadd.f32 %v4985, %v5221
      %v5344 = vadd.f32 %v4990, %v5226
      %v5345 = vadd.f32 %v4995, %v5231
      %v5346 = vadd.f32 %v5000, %v5236
      %v5347 = vadd.f32 %v5005, %v5241
      %v5348 = vadd.f32 %v5010, %v5246
      %v5349 = vadd.f32 %v5015, %v5251
      %v5350 = vadd.f32 %v5020, %v5256
      %v5351 = vadd.f32 %v5025, %v5261
      %v5352 = vadd.f32 %v5030, %v5266
      %v5353 = vadd.f32 %v5035, %v5271
      %v5354 = vadd.f32 %v5040, %v5276
      %v5355 = vadd.f32 %v5045, %v5281
      %v5356 = vadd.f32 %v5050, %v5286
      %v5357 = vadd.f32 %v5055, %v5291
      %v5358 = vadd.f32 %v5060, %v5296
      %v5359 = vadd.f32 %v5065, %v5301
      %v5360 = vadd.f32 %v5070, %v5306
      %v5361 = vadd.f32 %v5075, %v5311
      %v5362 = vadd.f32 %v5080, %v5316
      %v5363 = vadd.f32 %v5085, %v5321
      %v5364 = vadd.f32 %v5090, %v5326
      %v5365 = vadd.f32 %v5095, %v5331
      %v5366 = vmax.f32 %v5334, 0.0
      %v5367 = vmax.f32 %v5335, 0.0
      %v5368 = vmax.f32 %v5336, 0.0
      %v5369 = vmax.f32 %v5337, 0.0
      %v5370 = vmax.f32 %v5338, 0.0
      %v5371 = vmax.f32 %v5339, 0.0
      %v5372 = vmax.f32 %v5340, 0.0
      %v5373 = vmax.f32 %v5341, 0.0
      %v5374 = vmax.f32 %v5342, 0.0
      %v5375 = vmax.f32 %v5343, 0.0
      %v5376 = vmax.f32 %v5344, 0.0
      %v5377 = vmax.f32 %v5345, 0.0
      %v5378 = vmax.f32 %v5346, 0.0
      %v5379 = vmax.f32 %v5347, 0.0
      %v5380 = vmax.f32 %v5348, 0.0
      %v5381 = vmax.f32 %v5349, 0.0
      %v5382 = vmax.f32 %v5350, 0.0
      %v5383 = vmax.f32 %v5351, 0.0
      %v5384 = vmax.f32 %v5352, 0.0
      %v5385 = vmax.f32 %v5353, 0.0
      %v5386 = vmax.f32 %v5354, 0.0
      %v5387 = vmax.f32 %v5355, 0.0
      %v5388 = vmax.f32 %v5356, 0.0
      %v5389 = vmax.f32 %v5357, 0.0
      %v5390 = vmax.f32 %v5358, 0.0
      %v5391 = vmax.f32 %v5359, 0.0
      %v5392 = vmax.f32 %v5360, 0.0
      %v5393 = vmax.f32 %v5361, 0.0
      %v5394 = vmax.f32 %v5362, 0.0
      %v5395 = vmax.f32 %v5363, 0.0
      %v5396 = vmax.f32 %v5364, 0.0
      %v5397 = vmax.f32 %v5365, 0.0
      %vm5398 = vcmask 130048
      %5399 = vst.msk [vmem:[%s332] sm:$0xff] %vm5398, %v5366
      %5400 = vst.msk [vmem:[%s332 + $0x8] sm:$0xff] %vm5398, %v5367
      %5401 = vst.msk [vmem:[%s332 + $0x10] sm:$0xff] %vm5398, %v5368
      %5402 = vst.msk [vmem:[%s332 + $0x18] sm:$0xff] %vm5398, %v5369
      %5403 = vst.msk [vmem:[%s332 + $0x20] sm:$0xff] %vm5398, %v5370
      %5404 = vst.msk [vmem:[%s332 + $0x28] sm:$0xff] %vm5398, %v5371
      %5405 = vst.msk [vmem:[%s332 + $0x30] sm:$0xff] %vm5398, %v5372
      %5406 = vst.msk [vmem:[%s332 + $0x38] sm:$0xff] %vm5398, %v5373
      %5407 = vst.msk [vmem:[%s332 + $0x40] sm:$0xff] %vm5398, %v5374
      %5408 = vst.msk [vmem:[%s332 + $0x48] sm:$0xff] %vm5398, %v5375
      %5409 = vst.msk [vmem:[%s332 + $0x50] sm:$0xff] %vm5398, %v5376
      %5410 = vst.msk [vmem:[%s332 + $0x58] sm:$0xff] %vm5398, %v5377
      %5411 = vst.msk [vmem:[%s332 + $0x60] sm:$0xff] %vm5398, %v5378
      %5412 = vst.msk [vmem:[%s332 + $0x68] sm:$0xff] %vm5398, %v5379
      %5413 = vst.msk [vmem:[%s332 + $0x70] sm:$0xff] %vm5398, %v5380
      %5414 = vst.msk [vmem:[%s332 + $0x78] sm:$0xff] %vm5398, %v5381
      %5415 = vst.msk [vmem:[%s332 + $0x80] sm:$0xff] %vm5398, %v5382
      %5416 = vst.msk [vmem:[%s332 + $0x88] sm:$0xff] %vm5398, %v5383
      %5417 = vst.msk [vmem:[%s332 + $0x90] sm:$0xff] %vm5398, %v5384
      %5418 = vst.msk [vmem:[%s332 + $0x98] sm:$0xff] %vm5398, %v5385
      %5419 = vst.msk [vmem:[%s332 + $0xa0] sm:$0xff] %vm5398, %v5386
      %5420 = vst.msk [vmem:[%s332 + $0xa8] sm:$0xff] %vm5398, %v5387
      %5421 = vst.msk [vmem:[%s332 + $0xb0] sm:$0xff] %vm5398, %v5388
      %5422 = vst.msk [vmem:[%s332 + $0xb8] sm:$0xff] %vm5398, %v5389
      %5423 = vst.msk [vmem:[%s332 + $0xc0] sm:$0xff] %vm5398, %v5390
      %5424 = vst.msk [vmem:[%s332 + $0xc8] sm:$0xff] %vm5398, %v5391
      %5425 = vst.msk [vmem:[%s332 + $0xd0] sm:$0xff] %vm5398, %v5392
      %5426 = vst.msk [vmem:[%s332 + $0xd8] sm:$0xff] %vm5398, %v5393
      %5427 = vst.msk [vmem:[%s332 + $0xe0] sm:$0xff] %vm5398, %v5394
      %5428 = vst.msk [vmem:[%s332 + $0xe8] sm:$0xff] %vm5398, %v5395
      %5429 = vst.msk [vmem:[%s332 + $0xf0] sm:$0xff] %vm5398, %v5396
      %5430 = vst.msk [vmem:[%s332 + $0xf8] sm:$0xff] %vm5398, %v5397
      %p5431 = scmp.lt.s32.totalorder %s20, 1
      %s5432 = scalar_select %p5431, %s20, 1
      %s5433 = smul.addr %s5432, 32
      %s5434 = smul.addr %s5433, 8
      %s5435 = scalar_lea.vmem %s9, %s5434
      // Predicated region
      $region57: #{tpu_custom_call.1} parent=55 // pred_check
        %p5436 = pneg %p232
      $region58: #{tpu_custom_call.1} parent=55 // pred_check_branch
        %5438 = sbr.rel (%p5436) target = $region60
      $region59: #{tpu_custom_call.1} parent=55 // pred_region
        _
      $region60: #{tpu_custom_call.1} parent=55 // pred_fallthru
        _
    $region56: #{tpu_custom_call.1} parent=5 // pred_fallthru
      _
    %p5439 = scmp.le.s32.totalorder 2, %s15
    // Predicated region
    $region61: #{tpu_custom_call.1} parent=5 // pred_check
      %p5440 = pneg %p5439
    $region62: #{tpu_custom_call.1} parent=5 // pred_check_branch
      %5442 = sbr.rel (%p5440) target = $region64
    $region63: #{tpu_custom_call.1} parent=5 // pred_region
      %s5443 = ssub.s32 %s15, 2
      // Predicated region
      $region65: #{tpu_custom_call.1} parent=63 // pred_check
        %p5444 = pneg %p238
      $region66: #{tpu_custom_call.1} parent=63 // pred_check_branch
        %5446 = sbr.rel (%p5444) target = $region68
      $region67: #{tpu_custom_call.1} parent=63 // pred_region
        %p5447 = scmp.lt.s32.totalorder %s21, 1
        %s5448 = scalar_select %p5447, %s21, 1
        %s5449 = smul.addr %s5448, 32
        %s5450 = smul.addr %s5449, 8
        %s5451 = scalar_lea.vmem %s9, %s5450
      $region68: #{tpu_custom_call.1} parent=63 // pred_fallthru
        _
    $region64: #{tpu_custom_call.1} parent=5 // pred_fallthru
      _
  $region6: #{tpu_custom_call.1} parent=0 // loop_footer
    %s19 = sadd.s32 1, %s15
  $region7: #{tpu_custom_call.1} parent=0 // loop_footer_branch
    %14 = sbr.rel target = $region3
  $region8: #{tpu_custom_call.1} parent=0 // loop_exit
    _

</llo_original>
